<compile_context>
chip_gen: v5e
topology: v5e:2x2
jax: 0.10.0
libtpu: 0.0.40
codegen_flags: <defaults>
</compile_context>

<pallas_src>
import functools

import jax
import jax.numpy as jnp
from jax import lax
from jax.experimental import pallas as pl
from jax.experimental.pallas import tpu as pltpu


# ------------------------------ kernel helpers -------------------------------

def _silu(x):
    # f32 epilogue. (pl.reciprocal(approx=True)-based SiLU is an option if the
    # epilogue ever shows up on the VPU critical path.)
    return x * jax.nn.sigmoid(x)


def _fill_row_padded(fbuf_ref, act, H, W):
    """Write activation (C, H*W) into the flat row-padded buffer, zero the halo.

    Buffer layout: index j = 1 + r*W + c, r in [0, H+2), c in [0, W);
    rows r=0 and r=H+1 are the zero halo, plus one extra zero element at each
    end so every 3x3 tap is a purely in-range static lane slice.
    """
    C = fbuf_ref.shape[0]
    HW = H * W
    z = jnp.zeros((C, W + 1), fbuf_ref.dtype)
    fbuf_ref[:, :W + 1] = z                    # leading pad elem + zero row 0
    fbuf_ref[:, W + 1 + HW:] = z               # zero row H+1 + trailing pad elem
    fbuf_ref[:, W + 1:W + 1 + HW] = act.astype(fbuf_ref.dtype)


def _conv3x3_fused(fbuf_ref, w_ref, b_ref, H, W):
    """3x3 'same' conv + bias + SiLU as a single K = 9*Ci MXU matmul.

    fbuf_ref : (Ci, (H+2)*W + 2) row-padded flattened activation (compute dtype)
    w_ref    : (Co, 9*Ci)  taps ordered k = dy*3 + dx, channel-minor
    b_ref    : (Co, 1)     float32
    returns  : (Co, H*W)   float32 (bias + SiLU applied)
    """
    HW = H * W
    col = jax.lax.broadcasted_iota(jnp.int32, (1, HW), 1) % W
    not_left = col != 0           # kill contribution of the left padding column
    not_right = col != (W - 1)    # kill contribution of the right padding column

    pieces = []
    for dy in range(3):
        for dx in range(3):
            start = dy * W + dx                       # static lane offset
            p = fbuf_ref[:, start:start + HW]         # (Ci, HW) shifted window
            if dx == 0:
                p = jnp.where(not_left, p, jnp.zeros_like(p))
            elif dx == 2:
                p = jnp.where(not_right, p, jnp.zeros_like(p))
            pieces.append(p)
    patches = jnp.concatenate(pieces, axis=0)         # (9*Ci, HW), lane-dense

    acc = jnp.dot(w_ref[...], patches,                # one K=9*Ci MXU matmul
                  preferred_element_type=jnp.float32)
    acc = acc + b_ref[...]                            # f32 bias
    return _silu(acc)                                 # f32 SiLU


# --------------------------------- kernel ------------------------------------

def _teco_upconv_kernel(x_ref, w1_ref, b1_ref, w2_ref, b2_ref, w3_ref, b3_ref,
                        wf_ref, up_ref, o_ref, fbuf_lo, fbuf_hi,
                        *, H, W, scale):
    """Fused TecoUpconv forward for one batch element, channel-major layout.

    x_ref : (1, nf, H*W)           input image (compute dtype)
    w*    : (nf, 9*nf) / (nf, 1)   conv weights / f32 biases
    wf    : (3, nf)                final 1x1 conv weight
    up    : (H*W, Hs*Ws)           0/1 nearest-upsample selection matrix
    o_ref : (1, 3, Hs*Ws)          output, directly NCHW-major (lane-dense)
    fbuf_*: VMEM row-padded activation buffers (low / high resolution)
    """
    Hs, Ws = H * scale, W * scale

    # conv1 + SiLU
    _fill_row_padded(fbuf_lo, x_ref[0], H, W)
    a1 = _conv3x3_fused(fbuf_lo, w1_ref, b1_ref, H, W)            # (nf, H*W) f32

    # conv2 + SiLU
    _fill_row_padded(fbuf_lo, a1, H, W)
    a2 = _conv3x3_fused(fbuf_lo, w2_ref, b2_ref, H, W)            # (nf, H*W) f32

    # nearest-neighbour upsample, entirely in VMEM, via one-hot selection matmul
    ups = jnp.dot(a2.astype(up_ref.dtype), up_ref[...],
                  preferred_element_type=jnp.float32)             # (nf, Hs*Ws)

    # conv3 + SiLU at the upsampled resolution
    _fill_row_padded(fbuf_hi, ups, Hs, Ws)
    a3 = _conv3x3_fused(fbuf_hi, w3_ref, b3_ref, Hs, Ws)          # (nf, Hs*Ws)

    # final 1x1 conv (no bias, no activation), emitted channel-major == NCHW
    y = jnp.dot(wf_ref[...], a3.astype(wf_ref.dtype),
                preferred_element_type=jnp.float32)               # (3, Hs*Ws)
    o_ref[0] = y.astype(o_ref.dtype)


# ------------------------------- JAX wrapper ----------------------------------

def _nearest_upsample_matrix(H, W, scale, dtype):
    """(H*W, Hs*Ws) one-hot matrix U such that act_flat @ U == NN-upsampled flat."""
    Ws = W * scale
    j = jnp.arange(H * scale * Ws)
    src = (j // Ws // scale) * W + (j % Ws) // scale
    return (jnp.arange(H * W)[:, None] == src[None, :]).astype(dtype)


def teco_upconv_forward(x_nchw, params, scale, *, compute_dtype=jnp.float32):
    """Forward pass matching TecoUpconv. x_nchw: (N, nf, H, W) -> (N, 3, H*s, W*s).

    compute_dtype controls the MXU operand dtype (jnp.bfloat16 recommended on
    v6e/v7x); accumulation, bias and SiLU are always float32.
    """
    N, Ci, H, W = x_nchw.shape
    Hs, Ws = H * scale, W * scale
    nf = Ci

    def w3x3(w):  # (Co, Ci, 3, 3) -> (Co, 9*Ci), tap-major / channel-minor
        co = w.shape[0]
        return jnp.transpose(w, (0, 2, 3, 1)).reshape(co, 9 * Ci).astype(compute_dtype)

    w1 = w3x3(params["w1"]); b1 = params["b1"].reshape(nf, 1).astype(jnp.float32)
    w2 = w3x3(params["w2"]); b2 = params["b2"].reshape(nf, 1).astype(jnp.float32)
    w3 = w3x3(params["w3"]); b3 = params["b3"].reshape(nf, 1).astype(jnp.float32)
    wf = params["wf"].reshape(3, nf).astype(compute_dtype)       # (3, nf, 1, 1)
    up = _nearest_upsample_matrix(H, W, scale, compute_dtype)

    # NCHW consumed directly (channel-major); free reshape flattens spatial dims.
    x_flat = x_nchw.reshape(N, Ci, H * W).astype(compute_dtype)

    kern = functools.partial(_teco_upconv_kernel, H=H, W=W, scale=scale)

    def full(shape):
        return pl.BlockSpec(shape, lambda n, _s=shape: (0,) * len(_s))

    out = pl.pallas_call(
        kern,
        out_shape=jax.ShapeDtypeStruct((N, 3, Hs * Ws), jnp.float32),
        grid=(N,),
        in_specs=[
            pl.BlockSpec((1, Ci, H * W), lambda n: (n, 0, 0)),
            full((nf, 9 * Ci)), full((nf, 1)),
            full((nf, 9 * Ci)), full((nf, 1)),
            full((nf, 9 * Ci)), full((nf, 1)),
            full((3, nf)),
            full((H * W, Hs * Ws)),
        ],
        out_specs=pl.BlockSpec((1, 3, Hs * Ws), lambda n: (n, 0, 0)),
        scratch_shapes=[
            pltpu.VMEM((nf, (H + 2) * W + 2), compute_dtype),    # lo-res padded buf
            pltpu.VMEM((nf, (Hs + 2) * Ws + 2), compute_dtype),  # hi-res padded buf
        ],
        compiler_params=pltpu.CompilerParams(
            dimension_semantics=("parallel",)),
    )(x_flat, w1, b1, w2, b2, w3, b3, wf, up)

    # Output is already NCHW-major; this reshape is a free metadata reshape.
    return out.reshape(N, 3, Hs, Ws)


# -------------------------- reference (pure JAX) ------------------------------

def _ref_forward(x, params, scale):
    def conv(h, w, b, act):
        y = lax.conv_general_dilated(
            h, w, window_strides=(1, 1), padding="SAME",
            dimension_numbers=("NCHW", "OIHW", "NCHW"),
            precision=lax.Precision.HIGHEST)
        if b is not None:
            y = y + b[None, :, None, None]
        if act:
            y = y * jax.nn.sigmoid(y)
        return y

    x = conv(x, params["w1"], params["b1"], True)
    x = conv(x, params["w2"], params["b2"], True)
    N, C, H, W = x.shape
    s = scale
    x = jnp.broadcast_to(x[:, :, :, None, :, None],
                         (N, C, H, s, W, s)).reshape(N, C, H * s, W * s)
    x = conv(x, params["w3"], params["b3"], True)
    x = conv(x, params["wf"], None, False)
    return x


# ----------------------------------- main -------------------------------------

def _init_params(key, nf):
    ks = jax.random.split(key, 7)
    s3 = 1.0 / (3.0 * float(nf) ** 0.5)    # ~1/sqrt(fan_in) of a 3x3 conv
    s1 = 1.0 / float(nf) ** 0.5            # ~1/sqrt(fan_in) of a 1x1 conv
    return {
        "w1": jax.random.normal(ks[0], (nf, nf, 3, 3), jnp.float32) * s3,
        "b1": jax.random.normal(ks[1], (nf,), jnp.float32) * 0.01,
        "w2": jax.random.normal(ks[2], (nf, nf, 3, 3), jnp.float32) * s3,
        "b2": jax.random.normal(ks[3], (nf,), jnp.float32) * 0.01,
        "w3": jax.random.normal(ks[4], (nf, nf, 3, 3), jnp.float32) * s3,
        "b3": jax.random.normal(ks[5], (nf,), jnp.float32) * 0.01,
        "wf": jax.random.normal(ks[6], (3, nf, 1, 1), jnp.float32) * s1,
    }


if __name__ == "__main__":
    nf, scale = 16, 2
    N, H, W = 2, 16, 16

    key = jax.random.PRNGKey(0)
    kx, kp = jax.random.split(key)
    x = jax.random.normal(kx, (N, nf, H, W), jnp.float32)   # NCHW, like PyTorch
    params = _init_params(kp, nf)

    ref = _ref_forward(x, params, scale)

    # f32 MXU-operand path (tight correctness check; v5e-friendly f32 math).
    fwd_f32 = jax.jit(functools.partial(
        teco_upconv_forward, scale=scale, compute_dtype=jnp.float32))
    out_f32 = jax.block_until_ready(fwd_f32(x, params))
    assert out_f32.shape == (N, 3, H * scale, W * scale), out_f32.shape
    err_f32 = float(jnp.max(jnp.abs(out_f32 - ref)))
    assert jnp.allclose(out_f32, ref, rtol=1e-3, atol=1e-3), err_f32

    # bf16 MXU-operand path (v6e/v7x perf path: bf16 operands, f32 accumulation
    # and f32 bias/SiLU) -- looser tolerance purely from operand rounding.
    fwd_bf16 = jax.jit(functools.partial(
        teco_upconv_forward, scale=scale, compute_dtype=jnp.bfloat16))
    out_bf16 = jax.block_until_ready(fwd_bf16(x, params))
    assert out_bf16.shape == (N, 3, H * scale, W * scale), out_bf16.shape
    err_bf16 = float(jnp.max(jnp.abs(out_bf16 - ref)))
    assert jnp.allclose(out_bf16, ref, rtol=1e-1, atol=1e-1), err_bf16

    print("KERNEL_OK")
</pallas_src>

<mosaic_0001>
module attributes {stable_mosaic.version = 11 : i64} {
  func.func @_teco_upconv_kernel(%arg0: i32, %arg1: memref<1x16x256xf32, #tpu.memory_space<vmem>>, %arg2: memref<16x144xf32, #tpu.memory_space<vmem>>, %arg3: memref<16x1xf32, #tpu.memory_space<vmem>>, %arg4: memref<16x144xf32, #tpu.memory_space<vmem>>, %arg5: memref<16x1xf32, #tpu.memory_space<vmem>>, %arg6: memref<16x144xf32, #tpu.memory_space<vmem>>, %arg7: memref<16x1xf32, #tpu.memory_space<vmem>>, %arg8: memref<3x16xf32, #tpu.memory_space<vmem>>, %arg9: memref<256x1024xf32, #tpu.memory_space<vmem>>, %arg10: memref<1x3x1024xf32, #tpu.memory_space<vmem>>, %arg11: memref<16x290xf32, #tpu.memory_space<vmem>>, %arg12: memref<16x1090xf32, #tpu.memory_space<vmem>>) attributes {dimension_semantics = [#tpu.dimension_semantics<parallel>], iteration_bounds = array<i64: 2>, scalar_prefetch = 0 : i64, scratch_operands = 2 : i64, tpu.core_type = #tpu.core_type<tc>, window_params = [{transform_indices = @transform_0, window_bounds = array<i64: 1, 16, 256>}, {pipeline_mode = #tpu.pipeline_mode<synchronous>, transform_indices = @transform_1, window_bounds = array<i64: 16, 144>}, {pipeline_mode = #tpu.pipeline_mode<synchronous>, transform_indices = @transform_2, window_bounds = array<i64: 16, 1>}, {pipeline_mode = #tpu.pipeline_mode<synchronous>, transform_indices = @transform_3, window_bounds = array<i64: 16, 144>}, {pipeline_mode = #tpu.pipeline_mode<synchronous>, transform_indices = @transform_4, window_bounds = array<i64: 16, 1>}, {pipeline_mode = #tpu.pipeline_mode<synchronous>, transform_indices = @transform_5, window_bounds = array<i64: 16, 144>}, {pipeline_mode = #tpu.pipeline_mode<synchronous>, transform_indices = @transform_6, window_bounds = array<i64: 16, 1>}, {pipeline_mode = #tpu.pipeline_mode<synchronous>, transform_indices = @transform_7, window_bounds = array<i64: 3, 16>}, {pipeline_mode = #tpu.pipeline_mode<synchronous>, transform_indices = @transform_8, window_bounds = array<i64: 256, 1024>}, {transform_indices = @transform_9, window_bounds = array<i64: 1, 3, 1024>}]} {
    %c0 = arith.constant 0 : index
    %c0_0 = arith.constant 0 : index
    %c0_1 = arith.constant 0 : index
    %0 = vector.load %arg1[%c0, %c0_0, %c0_1] : memref<1x16x256xf32, #tpu.memory_space<vmem>>, vector<1x16x256xf32>
    %1 = vector.shape_cast %0 : vector<1x16x256xf32> to vector<16x256xf32>
    %cst = arith.constant 0.000000e+00 : f32
    %2 = vector.broadcast %cst : f32 to vector<16x17xf32>
    %c0_2 = arith.constant 0 : index
    %c0_3 = arith.constant 0 : index
    %3 = vector.load %arg11[%c0_2, %c0_3] : memref<16x290xf32, #tpu.memory_space<vmem>>, vector<16x17xf32>
    tpu.vector_store %arg11[%c0_2, %c0_3], %2 {strides = array<i32>} : memref<16x290xf32, #tpu.memory_space<vmem>>, vector<16x17xf32>,
    %c0_4 = arith.constant 0 : index
    %c273 = arith.constant 273 : index
    %4 = vector.load %arg11[%c0_4, %c273] : memref<16x290xf32, #tpu.memory_space<vmem>>, vector<16x17xf32>
    tpu.vector_store %arg11[%c0_4, %c273], %2 {strides = array<i32>} : memref<16x290xf32, #tpu.memory_space<vmem>>, vector<16x17xf32>,
    %c0_5 = arith.constant 0 : index
    %c17 = arith.constant 17 : index
    %5 = vector.load %arg11[%c0_5, %c17] : memref<16x290xf32, #tpu.memory_space<vmem>>, vector<16x256xf32>
    tpu.vector_store %arg11[%c0_5, %c17], %1 {strides = array<i32>} : memref<16x290xf32, #tpu.memory_space<vmem>>, vector<16x256xf32>,
    %6 = tpu.iota {dimensions = array<i32: 1>} : vector<1x256xi32>
    %c16_i32 = arith.constant 16 : i32
    %c0_i32 = arith.constant 0 : i32
    %7 = arith.cmpi eq, %c16_i32, %c0_i32 : i32
    %c1_i32 = arith.constant 1 : i32
    %8 = arith.select %7, %c1_i32, %c16_i32 : i32
    %9 = vector.broadcast %8 : i32 to vector<1x256xi32>
    %10 = arith.remsi %6, %9 : vector<1x256xi32>
    %c0_i32_6 = arith.constant 0 : i32
    %11 = vector.broadcast %c0_i32_6 : i32 to vector<1x256xi32>
    %12 = arith.cmpi ne, %10, %11 : vector<1x256xi32>
    %c0_i32_7 = arith.constant 0 : i32
    %13 = vector.broadcast %c0_i32_7 : i32 to vector<1x256xi32>
    %14 = arith.cmpi slt, %10, %13 : vector<1x256xi32>
    %c0_i32_8 = arith.constant 0 : i32
    %15 = arith.cmpi slt, %8, %c0_i32_8 : i32
    %16 = vector.broadcast %15 : i1 to vector<1x256xi1>
    %17 = vector.broadcast %16 : vector<1x256xi1> to vector<1x256xi1>
    %18 = arith.xori %14, %17 : vector<1x256xi1>
    %19 = arith.andi %18, %12 : vector<1x256xi1>
    %20 = vector.broadcast %8 : i32 to vector<1x256xi32>
    %21 = arith.addi %10, %20 : vector<1x256xi32>
    %22 = arith.select %19, %21, %10 : vector<1x256xi1>, vector<1x256xi32>
    %c0_i32_9 = arith.constant 0 : i32
    %23 = vector.broadcast %c0_i32_9 : i32 to vector<1x256xi32>
    %24 = arith.cmpi ne, %22, %23 : vector<1x256xi32>
    %c15_i32 = arith.constant 15 : i32
    %25 = vector.broadcast %c15_i32 : i32 to vector<1x256xi32>
    %26 = arith.cmpi ne, %22, %25 : vector<1x256xi32>
    %c0_10 = arith.constant 0 : index
    %c0_11 = arith.constant 0 : index
    %27 = vector.load %arg11[%c0_10, %c0_11] : memref<16x290xf32, #tpu.memory_space<vmem>>, vector<16x256xf32>
    %cst_12 = arith.constant 0.000000e+00 : f32
    %28 = vector.broadcast %cst_12 : f32 to vector<16x256xf32>
    %29 = vector.shape_cast %24 : vector<1x256xi1> to vector<1x256xi1>
    %30 = vector.broadcast %29 : vector<1x256xi1> to vector<16x256xi1>
    %31 = arith.select %30, %27, %28 : vector<16x256xi1>, vector<16x256xf32>
    %c0_13 = arith.constant 0 : index
    %c1 = arith.constant 1 : index
    %32 = vector.load %arg11[%c0_13, %c1] : memref<16x290xf32, #tpu.memory_space<vmem>>, vector<16x256xf32>
    %c0_14 = arith.constant 0 : index
    %c2 = arith.constant 2 : index
    %33 = vector.load %arg11[%c0_14, %c2] : memref<16x290xf32, #tpu.memory_space<vmem>>, vector<16x256xf32>
    %cst_15 = arith.constant 0.000000e+00 : f32
    %34 = vector.broadcast %cst_15 : f32 to vector<16x256xf32>
    %35 = vector.shape_cast %26 : vector<1x256xi1> to vector<1x256xi1>
    %36 = vector.broadcast %35 : vector<1x256xi1> to vector<16x256xi1>
    %37 = arith.select %36, %33, %34 : vector<16x256xi1>, vector<16x256xf32>
    %c0_16 = arith.constant 0 : index
    %c16 = arith.constant 16 : index
    %38 = vector.load %arg11[%c0_16, %c16] : memref<16x290xf32, #tpu.memory_space<vmem>>, vector<16x256xf32>
    %cst_17 = arith.constant 0.000000e+00 : f32
    %39 = vector.broadcast %cst_17 : f32 to vector<16x256xf32>
    %40 = vector.shape_cast %24 : vector<1x256xi1> to vector<1x256xi1>
    %41 = vector.broadcast %40 : vector<1x256xi1> to vector<16x256xi1>
    %42 = arith.select %41, %38, %39 : vector<16x256xi1>, vector<16x256xf32>
    %c0_18 = arith.constant 0 : index
    %c17_19 = arith.constant 17 : index
    %43 = vector.load %arg11[%c0_18, %c17_19] : memref<16x290xf32, #tpu.memory_space<vmem>>, vector<16x256xf32>
    %c0_20 = arith.constant 0 : index
    %c18 = arith.constant 18 : index
    %44 = vector.load %arg11[%c0_20, %c18] : memref<16x290xf32, #tpu.memory_space<vmem>>, vector<16x256xf32>
    %cst_21 = arith.constant 0.000000e+00 : f32
    %45 = vector.broadcast %cst_21 : f32 to vector<16x256xf32>
    %46 = vector.shape_cast %26 : vector<1x256xi1> to vector<1x256xi1>
    %47 = vector.broadcast %46 : vector<1x256xi1> to vector<16x256xi1>
    %48 = arith.select %47, %44, %45 : vector<16x256xi1>, vector<16x256xf32>
    %c0_22 = arith.constant 0 : index
    %c32 = arith.constant 32 : index
    %49 = vector.load %arg11[%c0_22, %c32] : memref<16x290xf32, #tpu.memory_space<vmem>>, vector<16x256xf32>
    %cst_23 = arith.constant 0.000000e+00 : f32
    %50 = vector.broadcast %cst_23 : f32 to vector<16x256xf32>
    %51 = vector.shape_cast %24 : vector<1x256xi1> to vector<1x256xi1>
    %52 = vector.broadcast %51 : vector<1x256xi1> to vector<16x256xi1>
    %53 = arith.select %52, %49, %50 : vector<16x256xi1>, vector<16x256xf32>
    %c0_24 = arith.constant 0 : index
    %c33 = arith.constant 33 : index
    %54 = vector.load %arg11[%c0_24, %c33] : memref<16x290xf32, #tpu.memory_space<vmem>>, vector<16x256xf32>
    %c0_25 = arith.constant 0 : index
    %c34 = arith.constant 34 : index
    %55 = vector.load %arg11[%c0_25, %c34] : memref<16x290xf32, #tpu.memory_space<vmem>>, vector<16x256xf32>
    %cst_26 = arith.constant 0.000000e+00 : f32
    %56 = vector.broadcast %cst_26 : f32 to vector<16x256xf32>
    %57 = vector.shape_cast %26 : vector<1x256xi1> to vector<1x256xi1>
    %58 = vector.broadcast %57 : vector<1x256xi1> to vector<16x256xi1>
    %59 = arith.select %58, %55, %56 : vector<16x256xi1>, vector<16x256xf32>
    %60 = tpu.concatenate %31, %32, %37, %42, %43, %48, %53, %54, %59 in 0 : vector<16x256xf32>, vector<16x256xf32>, vector<16x256xf32>, vector<16x256xf32>, vector<16x256xf32>, vector<16x256xf32>, vector<16x256xf32>, vector<16x256xf32>, vector<16x256xf32> -> vector<144x256xf32>
    %c0_27 = arith.constant 0 : index
    %c0_28 = arith.constant 0 : index
    %61 = vector.load %arg2[%c0_27, %c0_28] : memref<16x144xf32, #tpu.memory_space<vmem>>, vector<16x144xf32>
    %cst_29 = arith.constant dense<0.000000e+00> : vector<16x256xf32>
    %62 = tpu.matmul %61, %60, %cst_29 {dimension_numbers = #tpu.dot_dimension_numbers<[1], [0], [0], [1], [0, 0, 1, 1], [], []>} : vector<16x144xf32>, vector<144x256xf32>, vector<16x256xf32> -> vector<16x256xf32>
    %c0_30 = arith.constant 0 : index
    %c0_31 = arith.constant 0 : index
    %63 = vector.load %arg3[%c0_30, %c0_31] : memref<16x1xf32, #tpu.memory_space<vmem>>, vector<16x1xf32>
    %64 = vector.broadcast %63 : vector<16x1xf32> to vector<16x256xf32>
    %65 = arith.addf %62, %64 : vector<16x256xf32>
    %66 = arith.negf %65 : vector<16x256xf32>
    %67 = math.exp %66 : vector<16x256xf32>
    %cst_32 = arith.constant 1.000000e+00 : f32
    %68 = vector.broadcast %cst_32 : f32 to vector<16x256xf32>
    %69 = arith.addf %68, %67 : vector<16x256xf32>
    %70 = arith.divf %68, %69 : vector<16x256xf32>
    %71 = arith.mulf %65, %70 : vector<16x256xf32>
    %cst_33 = arith.constant 0.000000e+00 : f32
    %72 = vector.broadcast %cst_33 : f32 to vector<16x17xf32>
    %c0_34 = arith.constant 0 : index
    %c0_35 = arith.constant 0 : index
    %73 = vector.load %arg11[%c0_34, %c0_35] : memref<16x290xf32, #tpu.memory_space<vmem>>, vector<16x17xf32>
    tpu.vector_store %arg11[%c0_34, %c0_35], %72 {strides = array<i32>} : memref<16x290xf32, #tpu.memory_space<vmem>>, vector<16x17xf32>,
    %c0_36 = arith.constant 0 : index
    %c273_37 = arith.constant 273 : index
    %74 = vector.load %arg11[%c0_36, %c273_37] : memref<16x290xf32, #tpu.memory_space<vmem>>, vector<16x17xf32>
    tpu.vector_store %arg11[%c0_36, %c273_37], %72 {strides = array<i32>} : memref<16x290xf32, #tpu.memory_space<vmem>>, vector<16x17xf32>,
    %c0_38 = arith.constant 0 : index
    %c17_39 = arith.constant 17 : index
    %75 = vector.load %arg11[%c0_38, %c17_39] : memref<16x290xf32, #tpu.memory_space<vmem>>, vector<16x256xf32>
    tpu.vector_store %arg11[%c0_38, %c17_39], %71 {strides = array<i32>} : memref<16x290xf32, #tpu.memory_space<vmem>>, vector<16x256xf32>,
    %76 = tpu.iota {dimensions = array<i32: 1>} : vector<1x256xi32>
    %c16_i32_40 = arith.constant 16 : i32
    %c0_i32_41 = arith.constant 0 : i32
    %77 = arith.cmpi eq, %c16_i32_40, %c0_i32_41 : i32
    %c1_i32_42 = arith.constant 1 : i32
    %78 = arith.select %77, %c1_i32_42, %c16_i32_40 : i32
    %79 = vector.broadcast %78 : i32 to vector<1x256xi32>
    %80 = arith.remsi %76, %79 : vector<1x256xi32>
    %c0_i32_43 = arith.constant 0 : i32
    %81 = vector.broadcast %c0_i32_43 : i32 to vector<1x256xi32>
    %82 = arith.cmpi ne, %80, %81 : vector<1x256xi32>
    %c0_i32_44 = arith.constant 0 : i32
    %83 = vector.broadcast %c0_i32_44 : i32 to vector<1x256xi32>
    %84 = arith.cmpi slt, %80, %83 : vector<1x256xi32>
    %c0_i32_45 = arith.constant 0 : i32
    %85 = arith.cmpi slt, %78, %c0_i32_45 : i32
    %86 = vector.broadcast %85 : i1 to vector<1x256xi1>
    %87 = vector.broadcast %86 : vector<1x256xi1> to vector<1x256xi1>
    %88 = arith.xori %84, %87 : vector<1x256xi1>
    %89 = arith.andi %88, %82 : vector<1x256xi1>
    %90 = vector.broadcast %78 : i32 to vector<1x256xi32>
    %91 = arith.addi %80, %90 : vector<1x256xi32>
    %92 = arith.select %89, %91, %80 : vector<1x256xi1>, vector<1x256xi32>
    %c0_i32_46 = arith.constant 0 : i32
    %93 = vector.broadcast %c0_i32_46 : i32 to vector<1x256xi32>
    %94 = arith.cmpi ne, %92, %93 : vector<1x256xi32>
    %c15_i32_47 = arith.constant 15 : i32
    %95 = vector.broadcast %c15_i32_47 : i32 to vector<1x256xi32>
    %96 = arith.cmpi ne, %92, %95 : vector<1x256xi32>
    %c0_48 = arith.constant 0 : index
    %c0_49 = arith.constant 0 : index
    %97 = vector.load %arg11[%c0_48, %c0_49] : memref<16x290xf32, #tpu.memory_space<vmem>>, vector<16x256xf32>
    %cst_50 = arith.constant 0.000000e+00 : f32
    %98 = vector.broadcast %cst_50 : f32 to vector<16x256xf32>
    %99 = vector.shape_cast %94 : vector<1x256xi1> to vector<1x256xi1>
    %100 = vector.broadcast %99 : vector<1x256xi1> to vector<16x256xi1>
    %101 = arith.select %100, %97, %98 : vector<16x256xi1>, vector<16x256xf32>
    %c0_51 = arith.constant 0 : index
    %c1_52 = arith.constant 1 : index
    %102 = vector.load %arg11[%c0_51, %c1_52] : memref<16x290xf32, #tpu.memory_space<vmem>>, vector<16x256xf32>
    %c0_53 = arith.constant 0 : index
    %c2_54 = arith.constant 2 : index
    %103 = vector.load %arg11[%c0_53, %c2_54] : memref<16x290xf32, #tpu.memory_space<vmem>>, vector<16x256xf32>
    %cst_55 = arith.constant 0.000000e+00 : f32
    %104 = vector.broadcast %cst_55 : f32 to vector<16x256xf32>
    %105 = vector.shape_cast %96 : vector<1x256xi1> to vector<1x256xi1>
    %106 = vector.broadcast %105 : vector<1x256xi1> to vector<16x256xi1>
    %107 = arith.select %106, %103, %104 : vector<16x256xi1>, vector<16x256xf32>
    %c0_56 = arith.constant 0 : index
    %c16_57 = arith.constant 16 : index
    %108 = vector.load %arg11[%c0_56, %c16_57] : memref<16x290xf32, #tpu.memory_space<vmem>>, vector<16x256xf32>
    %cst_58 = arith.constant 0.000000e+00 : f32
    %109 = vector.broadcast %cst_58 : f32 to vector<16x256xf32>
    %110 = vector.shape_cast %94 : vector<1x256xi1> to vector<1x256xi1>
    %111 = vector.broadcast %110 : vector<1x256xi1> to vector<16x256xi1>
    %112 = arith.select %111, %108, %109 : vector<16x256xi1>, vector<16x256xf32>
    %c0_59 = arith.constant 0 : index
    %c17_60 = arith.constant 17 : index
    %113 = vector.load %arg11[%c0_59, %c17_60] : memref<16x290xf32, #tpu.memory_space<vmem>>, vector<16x256xf32>
    %c0_61 = arith.constant 0 : index
    %c18_62 = arith.constant 18 : index
    %114 = vector.load %arg11[%c0_61, %c18_62] : memref<16x290xf32, #tpu.memory_space<vmem>>, vector<16x256xf32>
    %cst_63 = arith.constant 0.000000e+00 : f32
    %115 = vector.broadcast %cst_63 : f32 to vector<16x256xf32>
    %116 = vector.shape_cast %96 : vector<1x256xi1> to vector<1x256xi1>
    %117 = vector.broadcast %116 : vector<1x256xi1> to vector<16x256xi1>
    %118 = arith.select %117, %114, %115 : vector<16x256xi1>, vector<16x256xf32>
    %c0_64 = arith.constant 0 : index
    %c32_65 = arith.constant 32 : index
    %119 = vector.load %arg11[%c0_64, %c32_65] : memref<16x290xf32, #tpu.memory_space<vmem>>, vector<16x256xf32>
    %cst_66 = arith.constant 0.000000e+00 : f32
    %120 = vector.broadcast %cst_66 : f32 to vector<16x256xf32>
    %121 = vector.shape_cast %94 : vector<1x256xi1> to vector<1x256xi1>
    %122 = vector.broadcast %121 : vector<1x256xi1> to vector<16x256xi1>
    %123 = arith.select %122, %119, %120 : vector<16x256xi1>, vector<16x256xf32>
    %c0_67 = arith.constant 0 : index
    %c33_68 = arith.constant 33 : index
    %124 = vector.load %arg11[%c0_67, %c33_68] : memref<16x290xf32, #tpu.memory_space<vmem>>, vector<16x256xf32>
    %c0_69 = arith.constant 0 : index
    %c34_70 = arith.constant 34 : index
    %125 = vector.load %arg11[%c0_69, %c34_70] : memref<16x290xf32, #tpu.memory_space<vmem>>, vector<16x256xf32>
    %cst_71 = arith.constant 0.000000e+00 : f32
    %126 = vector.broadcast %cst_71 : f32 to vector<16x256xf32>
    %127 = vector.shape_cast %96 : vector<1x256xi1> to vector<1x256xi1>
    %128 = vector.broadcast %127 : vector<1x256xi1> to vector<16x256xi1>
    %129 = arith.select %128, %125, %126 : vector<16x256xi1>, vector<16x256xf32>
    %130 = tpu.concatenate %101, %102, %107, %112, %113, %118, %123, %124, %129 in 0 : vector<16x256xf32>, vector<16x256xf32>, vector<16x256xf32>, vector<16x256xf32>, vector<16x256xf32>, vector<16x256xf32>, vector<16x256xf32>, vector<16x256xf32>, vector<16x256xf32> -> vector<144x256xf32>
    %c0_72 = arith.constant 0 : index
    %c0_73 = arith.constant 0 : index
    %131 = vector.load %arg4[%c0_72, %c0_73] : memref<16x144xf32, #tpu.memory_space<vmem>>, vector<16x144xf32>
    %cst_74 = arith.constant dense<0.000000e+00> : vector<16x256xf32>
    %132 = tpu.matmul %131, %130, %cst_74 {dimension_numbers = #tpu.dot_dimension_numbers<[1], [0], [0], [1], [0, 0, 1, 1], [], []>} : vector<16x144xf32>, vector<144x256xf32>, vector<16x256xf32> -> vector<16x256xf32>
    %c0_75 = arith.constant 0 : index
    %c0_76 = arith.constant 0 : index
    %133 = vector.load %arg5[%c0_75, %c0_76] : memref<16x1xf32, #tpu.memory_space<vmem>>, vector<16x1xf32>
    %134 = vector.broadcast %133 : vector<16x1xf32> to vector<16x256xf32>
    %135 = arith.addf %132, %134 : vector<16x256xf32>
    %136 = arith.negf %135 : vector<16x256xf32>
    %137 = math.exp %136 : vector<16x256xf32>
    %cst_77 = arith.constant 1.000000e+00 : f32
    %138 = vector.broadcast %cst_77 : f32 to vector<16x256xf32>
    %139 = arith.addf %138, %137 : vector<16x256xf32>
    %140 = arith.divf %138, %139 : vector<16x256xf32>
    %141 = arith.mulf %135, %140 : vector<16x256xf32>
    %c0_78 = arith.constant 0 : index
    %c0_79 = arith.constant 0 : index
    %142 = vector.load %arg9[%c0_78, %c0_79] : memref<256x1024xf32, #tpu.memory_space<vmem>>, vector<256x1024xf32>
    %cst_80 = arith.constant dense<0.000000e+00> : vector<16x1024xf32>
    %143 = tpu.matmul %141, %142, %cst_80 {dimension_numbers = #tpu.dot_dimension_numbers<[1], [0], [0], [1], [0, 0, 1, 1], [], []>} : vector<16x256xf32>, vector<256x1024xf32>, vector<16x1024xf32> -> vector<16x1024xf32>
    %cst_81 = arith.constant 0.000000e+00 : f32
    %144 = vector.broadcast %cst_81 : f32 to vector<16x33xf32>
    %c0_82 = arith.constant 0 : index
    %c0_83 = arith.constant 0 : index
    %145 = vector.load %arg12[%c0_82, %c0_83] : memref<16x1090xf32, #tpu.memory_space<vmem>>, vector<16x33xf32>
    tpu.vector_store %arg12[%c0_82, %c0_83], %144 {strides = array<i32>} : memref<16x1090xf32, #tpu.memory_space<vmem>>, vector<16x33xf32>,
    %c0_84 = arith.constant 0 : index
    %c1057 = arith.constant 1057 : index
    %146 = vector.load %arg12[%c0_84, %c1057] : memref<16x1090xf32, #tpu.memory_space<vmem>>, vector<16x33xf32>
    tpu.vector_store %arg12[%c0_84, %c1057], %144 {strides = array<i32>} : memref<16x1090xf32, #tpu.memory_space<vmem>>, vector<16x33xf32>,
    %c0_85 = arith.constant 0 : index
    %c33_86 = arith.constant 33 : index
    %147 = vector.load %arg12[%c0_85, %c33_86] : memref<16x1090xf32, #tpu.memory_space<vmem>>, vector<16x1024xf32>
    tpu.vector_store %arg12[%c0_85, %c33_86], %143 {strides = array<i32>} : memref<16x1090xf32, #tpu.memory_space<vmem>>, vector<16x1024xf32>,
    %148 = tpu.iota {dimensions = array<i32: 1>} : vector<1x1024xi32>
    %c32_i32 = arith.constant 32 : i32
    %c0_i32_87 = arith.constant 0 : i32
    %149 = arith.cmpi eq, %c32_i32, %c0_i32_87 : i32
    %c1_i32_88 = arith.constant 1 : i32
    %150 = arith.select %149, %c1_i32_88, %c32_i32 : i32
    %151 = vector.broadcast %150 : i32 to vector<1x1024xi32>
    %152 = arith.remsi %148, %151 : vector<1x1024xi32>
    %c0_i32_89 = arith.constant 0 : i32
    %153 = vector.broadcast %c0_i32_89 : i32 to vector<1x1024xi32>
    %154 = arith.cmpi ne, %152, %153 : vector<1x1024xi32>
    %c0_i32_90 = arith.constant 0 : i32
    %155 = vector.broadcast %c0_i32_90 : i32 to vector<1x1024xi32>
    %156 = arith.cmpi slt, %152, %155 : vector<1x1024xi32>
    %c0_i32_91 = arith.constant 0 : i32
    %157 = arith.cmpi slt, %150, %c0_i32_91 : i32
    %158 = vector.broadcast %157 : i1 to vector<1x1024xi1>
    %159 = vector.broadcast %158 : vector<1x1024xi1> to vector<1x1024xi1>
    %160 = arith.xori %156, %159 : vector<1x1024xi1>
    %161 = arith.andi %160, %154 : vector<1x1024xi1>
    %162 = vector.broadcast %150 : i32 to vector<1x1024xi32>
    %163 = arith.addi %152, %162 : vector<1x1024xi32>
    %164 = arith.select %161, %163, %152 : vector<1x1024xi1>, vector<1x1024xi32>
    %c0_i32_92 = arith.constant 0 : i32
    %165 = vector.broadcast %c0_i32_92 : i32 to vector<1x1024xi32>
    %166 = arith.cmpi ne, %164, %165 : vector<1x1024xi32>
    %c31_i32 = arith.constant 31 : i32
    %167 = vector.broadcast %c31_i32 : i32 to vector<1x1024xi32>
    %168 = arith.cmpi ne, %164, %167 : vector<1x1024xi32>
    %c0_93 = arith.constant 0 : index
    %c0_94 = arith.constant 0 : index
    %169 = vector.load %arg12[%c0_93, %c0_94] : memref<16x1090xf32, #tpu.memory_space<vmem>>, vector<16x1024xf32>
    %cst_95 = arith.constant 0.000000e+00 : f32
    %170 = vector.broadcast %cst_95 : f32 to vector<16x1024xf32>
    %171 = vector.shape_cast %166 : vector<1x1024xi1> to vector<1x1024xi1>
    %172 = vector.broadcast %171 : vector<1x1024xi1> to vector<16x1024xi1>
    %173 = arith.select %172, %169, %170 : vector<16x1024xi1>, vector<16x1024xf32>
    %c0_96 = arith.constant 0 : index
    %c1_97 = arith.constant 1 : index
    %174 = vector.load %arg12[%c0_96, %c1_97] : memref<16x1090xf32, #tpu.memory_space<vmem>>, vector<16x1024xf32>
    %c0_98 = arith.constant 0 : index
    %c2_99 = arith.constant 2 : index
    %175 = vector.load %arg12[%c0_98, %c2_99] : memref<16x1090xf32, #tpu.memory_space<vmem>>, vector<16x1024xf32>
    %cst_100 = arith.constant 0.000000e+00 : f32
    %176 = vector.broadcast %cst_100 : f32 to vector<16x1024xf32>
    %177 = vector.shape_cast %168 : vector<1x1024xi1> to vector<1x1024xi1>
    %178 = vector.broadcast %177 : vector<1x1024xi1> to vector<16x1024xi1>
    %179 = arith.select %178, %175, %176 : vector<16x1024xi1>, vector<16x1024xf32>
    %c0_101 = arith.constant 0 : index
    %c32_102 = arith.constant 32 : index
    %180 = vector.load %arg12[%c0_101, %c32_102] : memref<16x1090xf32, #tpu.memory_space<vmem>>, vector<16x1024xf32>
    %cst_103 = arith.constant 0.000000e+00 : f32
    %181 = vector.broadcast %cst_103 : f32 to vector<16x1024xf32>
    %182 = vector.shape_cast %166 : vector<1x1024xi1> to vector<1x1024xi1>
    %183 = vector.broadcast %182 : vector<1x1024xi1> to vector<16x1024xi1>
    %184 = arith.select %183, %180, %181 : vector<16x1024xi1>, vector<16x1024xf32>
    %c0_104 = arith.constant 0 : index
    %c33_105 = arith.constant 33 : index
    %185 = vector.load %arg12[%c0_104, %c33_105] : memref<16x1090xf32, #tpu.memory_space<vmem>>, vector<16x1024xf32>
    %c0_106 = arith.constant 0 : index
    %c34_107 = arith.constant 34 : index
    %186 = vector.load %arg12[%c0_106, %c34_107] : memref<16x1090xf32, #tpu.memory_space<vmem>>, vector<16x1024xf32>
    %cst_108 = arith.constant 0.000000e+00 : f32
    %187 = vector.broadcast %cst_108 : f32 to vector<16x1024xf32>
    %188 = vector.shape_cast %168 : vector<1x1024xi1> to vector<1x1024xi1>
    %189 = vector.broadcast %188 : vector<1x1024xi1> to vector<16x1024xi1>
    %190 = arith.select %189, %186, %187 : vector<16x1024xi1>, vector<16x1024xf32>
    %c0_109 = arith.constant 0 : index
    %c64 = arith.constant 64 : index
    %191 = vector.load %arg12[%c0_109, %c64] : memref<16x1090xf32, #tpu.memory_space<vmem>>, vector<16x1024xf32>
    %cst_110 = arith.constant 0.000000e+00 : f32
    %192 = vector.broadcast %cst_110 : f32 to vector<16x1024xf32>
    %193 = vector.shape_cast %166 : vector<1x1024xi1> to vector<1x1024xi1>
    %194 = vector.broadcast %193 : vector<1x1024xi1> to vector<16x1024xi1>
    %195 = arith.select %194, %191, %192 : vector<16x1024xi1>, vector<16x1024xf32>
    %c0_111 = arith.constant 0 : index
    %c65 = arith.constant 65 : index
    %196 = vector.load %arg12[%c0_111, %c65] : memref<16x1090xf32, #tpu.memory_space<vmem>>, vector<16x1024xf32>
    %c0_112 = arith.constant 0 : index
    %c66 = arith.constant 66 : index
    %197 = vector.load %arg12[%c0_112, %c66] : memref<16x1090xf32, #tpu.memory_space<vmem>>, vector<16x1024xf32>
    %cst_113 = arith.constant 0.000000e+00 : f32
    %198 = vector.broadcast %cst_113 : f32 to vector<16x1024xf32>
    %199 = vector.shape_cast %168 : vector<1x1024xi1> to vector<1x1024xi1>
    %200 = vector.broadcast %199 : vector<1x1024xi1> to vector<16x1024xi1>
    %201 = arith.select %200, %197, %198 : vector<16x1024xi1>, vector<16x1024xf32>
    %202 = tpu.concatenate %173, %174, %179, %184, %185, %190, %195, %196, %201 in 0 : vector<16x1024xf32>, vector<16x1024xf32>, vector<16x1024xf32>, vector<16x1024xf32>, vector<16x1024xf32>, vector<16x1024xf32>, vector<16x1024xf32>, vector<16x1024xf32>, vector<16x1024xf32> -> vector<144x1024xf32>
    %c0_114 = arith.constant 0 : index
    %c0_115 = arith.constant 0 : index
    %203 = vector.load %arg6[%c0_114, %c0_115] : memref<16x144xf32, #tpu.memory_space<vmem>>, vector<16x144xf32>
    %cst_116 = arith.constant dense<0.000000e+00> : vector<16x1024xf32>
    %204 = tpu.matmul %203, %202, %cst_116 {dimension_numbers = #tpu.dot_dimension_numbers<[1], [0], [0], [1], [0, 0, 1, 1], [], []>} : vector<16x144xf32>, vector<144x1024xf32>, vector<16x1024xf32> -> vector<16x1024xf32>
    %c0_117 = arith.constant 0 : index
    %c0_118 = arith.constant 0 : index
    %205 = vector.load %arg7[%c0_117, %c0_118] : memref<16x1xf32, #tpu.memory_space<vmem>>, vector<16x1xf32>
    %206 = vector.broadcast %205 : vector<16x1xf32> to vector<16x1024xf32>
    %207 = arith.addf %204, %206 : vector<16x1024xf32>
    %208 = arith.negf %207 : vector<16x1024xf32>
    %209 = math.exp %208 : vector<16x1024xf32>
    %cst_119 = arith.constant 1.000000e+00 : f32
    %210 = vector.broadcast %cst_119 : f32 to vector<16x1024xf32>
    %211 = arith.addf %210, %209 : vector<16x1024xf32>
    %212 = arith.divf %210, %211 : vector<16x1024xf32>
    %213 = arith.mulf %207, %212 : vector<16x1024xf32>
    %c0_120 = arith.constant 0 : index
    %c0_121 = arith.constant 0 : index
    %214 = vector.load %arg8[%c0_120, %c0_121] : memref<3x16xf32, #tpu.memory_space<vmem>>, vector<3x16xf32>
    %cst_122 = arith.constant dense<0.000000e+00> : vector<3x1024xf32>
    %215 = tpu.matmul %214, %213, %cst_122 {dimension_numbers = #tpu.dot_dimension_numbers<[1], [0], [0], [1], [0, 0, 1, 1], [], []>} : vector<3x16xf32>, vector<16x1024xf32>, vector<3x1024xf32> -> vector<3x1024xf32>
    %c0_123 = arith.constant 0 : index
    %c0_124 = arith.constant 0 : index
    %c0_125 = arith.constant 0 : index
    %216 = vector.load %arg10[%c0_123, %c0_124, %c0_125] : memref<1x3x1024xf32, #tpu.memory_space<vmem>>, vector<1x3x1024xf32>
    %217 = vector.shape_cast %216 : vector<1x3x1024xf32> to vector<3x1024xf32>
    %218 = vector.shape_cast %215 : vector<3x1024xf32> to vector<1x3x1024xf32>
    tpu.vector_store %arg10[%c0_123, %c0_124, %c0_125], %218 {strides = array<i32>} : memref<1x3x1024xf32, #tpu.memory_space<vmem>>, vector<1x3x1024xf32>,
    return
  }
  func.func @transform_0(%arg0: i32) -> (i32, i32, i32) {
    %c0_i32 = arith.constant 0 : i32
    %c0_i32_0 = arith.constant 0 : i32
    %c0_i32_1 = arith.constant 0 : i32
    return %arg0, %c0_i32, %c0_i32_0 : i32, i32, i32
  }
  func.func @transform_1(%arg0: i32) -> (i32, i32) {
    %c0_i32 = arith.constant 0 : i32
    %c0_i32_0 = arith.constant 0 : i32
    %c0_i32_1 = arith.constant 0 : i32
    return %c0_i32, %c0_i32_0 : i32, i32
  }
  func.func @transform_2(%arg0: i32) -> (i32, i32) {
    %c0_i32 = arith.constant 0 : i32
    %c0_i32_0 = arith.constant 0 : i32
    %c0_i32_1 = arith.constant 0 : i32
    return %c0_i32, %c0_i32_0 : i32, i32
  }
  func.func @transform_3(%arg0: i32) -> (i32, i32) {
    %c0_i32 = arith.constant 0 : i32
    %c0_i32_0 = arith.constant 0 : i32
    %c0_i32_1 = arith.constant 0 : i32
    return %c0_i32, %c0_i32_0 : i32, i32
  }
  func.func @transform_4(%arg0: i32) -> (i32, i32) {
    %c0_i32 = arith.constant 0 : i32
    %c0_i32_0 = arith.constant 0 : i32
    %c0_i32_1 = arith.constant 0 : i32
    return %c0_i32, %c0_i32_0 : i32, i32
  }
  func.func @transform_5(%arg0: i32) -> (i32, i32) {
    %c0_i32 = arith.constant 0 : i32
    %c0_i32_0 = arith.constant 0 : i32
    %c0_i32_1 = arith.constant 0 : i32
    return %c0_i32, %c0_i32_0 : i32, i32
  }
  func.func @transform_6(%arg0: i32) -> (i32, i32) {
    %c0_i32 = arith.constant 0 : i32
    %c0_i32_0 = arith.constant 0 : i32
    %c0_i32_1 = arith.constant 0 : i32
    return %c0_i32, %c0_i32_0 : i32, i32
  }
  func.func @transform_7(%arg0: i32) -> (i32, i32) {
    %c0_i32 = arith.constant 0 : i32
    %c0_i32_0 = arith.constant 0 : i32
    %c0_i32_1 = arith.constant 0 : i32
    return %c0_i32, %c0_i32_0 : i32, i32
  }
  func.func @transform_8(%arg0: i32) -> (i32, i32) {
    %c0_i32 = arith.constant 0 : i32
    %c0_i32_0 = arith.constant 0 : i32
    %c0_i32_1 = arith.constant 0 : i32
    return %c0_i32, %c0_i32_0 : i32, i32
  }
  func.func @transform_9(%arg0: i32) -> (i32, i32, i32) {
    %c0_i32 = arith.constant 0 : i32
    %c0_i32_0 = arith.constant 0 : i32
    %c0_i32_1 = arith.constant 0 : i32
    return %arg0, %c0_i32, %c0_i32_0 : i32, i32, i32
  }
}

</mosaic_0001>

<llo_original>
// kernel: teco_upconv_forward.1
$region0: #{teco_upconv_forward.1}
  #allocation0 [shape = 'u32[]', space=smem, size = 0x4, offset = 0x4, fixed_abs, tag = 'smem constant byte address 0x4 - core index']
  #allocation1 [shape = 'u32[72,128]{1,0:T(1,128)}', space=vmem, size = 0x9000, scoped, tag = 'internal scratch']
  #allocation2 [shape = 'f32[16,290]{1,0:T(8,128)}', space=vmem, size = 0x6000, scoped, tag = 'scratch operand']
  #allocation3 [shape = 'f32[16,1090]{1,0:T(8,128)}', space=vmem, size = 0x12000, scoped, tag = 'scratch operand']
  %s0 = inlined_call_operand.vmem [shape: f32[2,16,256], index: 0, kind: input, shape index: {}]
  %s1 = inlined_call_operand.vmem [shape: f32[16,144], index: 1, kind: input, shape index: {}]
  %s2 = inlined_call_operand.vmem [shape: f32[16,1], index: 2, kind: input, shape index: {}]
  %s3 = inlined_call_operand.vmem [shape: f32[16,144], index: 3, kind: input, shape index: {}]
  %s4 = inlined_call_operand.vmem [shape: f32[16,1], index: 4, kind: input, shape index: {}]
  %s5 = inlined_call_operand.vmem [shape: f32[16,144], index: 5, kind: input, shape index: {}]
  %s6 = inlined_call_operand.vmem [shape: f32[16,1], index: 6, kind: input, shape index: {}]
  %s7 = inlined_call_operand.vmem [shape: f32[3,16], index: 7, kind: input, shape index: {}]
  %s8 = inlined_call_operand.vmem [shape: f32[256,1024], index: 8, kind: input, shape index: {}]
  %s9 = inlined_call_operand.vmem [shape: f32[2,3,1024], index: 9, kind: output, shape index: {}]
  %s10 = sld [smem:[#allocation0]]
  $region69: #{teco_upconv_forward.1} parent=0
    _
  %s12 = ssub.s32 1, %s10
  %s13 = scalar_select 0, %s12, %s10
  loop: start=0, step=1, limit=4
  $region2: #{teco_upconv_forward.1} parent=0 // loop_pre_header
    _
  $region3: #{teco_upconv_forward.1} parent=0 // loop_header
    %s15 = sphi 0, %s19
    %p16 = scmp.ge.s32.totalorder %s15, 4
    %s25 = sphi 0, %s27
    %s28 = sphi 0, %s25
    %s29 = sphi 0, %s28
    %s45 = sphi 0, %s29
    %s49 = sphi 0, %s49
    %s51 = sphi 0, %s49
    %s52 = sphi 0, %s51
    %s66 = sphi 0, %s52
    %s70 = sphi 0, %s70
    %s72 = sphi 0, %s70
    %s73 = sphi 0, %s72
    %s87 = sphi 0, %s73
    %s91 = sphi 0, %s91
    %s93 = sphi 0, %s91
    %s94 = sphi 0, %s93
    %s108 = sphi 0, %s94
    %s112 = sphi 0, %s112
    %s114 = sphi 0, %s112
    %s115 = sphi 0, %s114
    %s129 = sphi 0, %s115
    %s133 = sphi 0, %s133
    %s135 = sphi 0, %s133
    %s136 = sphi 0, %s135
    %s150 = sphi 0, %s136
    %s154 = sphi 0, %s154
    %s156 = sphi 0, %s154
    %s157 = sphi 0, %s156
    %s171 = sphi 0, %s157
    %s175 = sphi 0, %s175
    %s177 = sphi 0, %s175
    %s178 = sphi 0, %s177
    %s192 = sphi 0, %s178
    %s196 = sphi 0, %s196
    %s198 = sphi 0, %s196
    %s199 = sphi 0, %s198
    %s213 = sphi 0, %s199
    %s219 = sphi 0, %s221
    %s222 = sphi 0, %s219
    %s223 = sphi 0, %s222
    %s239 = sphi 0, %s223
  $region4: #{teco_upconv_forward.1} parent=0 // loop_header_branch
    %18 = sbr.rel (%p16) target = $region8
  $region5: #{teco_upconv_forward.1} parent=0 // loop_body
    %s20 = ssub.s32 %s15, 1
    %s21 = ssub.s32 %s15, 2
    %s22 = sadd.s32 %s15, 1
    %s23 = ssub.s32 %s15, %s22
    %p24 = scmp.eq.s32.totalorder %s23, 0
    %s26 = sadd.s32 %s25, 1
    %s27 = scalar_select %p24, %s25, %s26
    %p30 = pneg %p24
    %p31 = scmp.eq.s32.totalorder %s15, 1
    %p32 = por %p30, %p31
    %p33 = scmp.ne.s32.totalorder %s25, %s28
    %p34 = scmp.eq.s32.totalorder %s15, 0
    %p35 = por %p33, %p34
    %p36 = scmp.ne.s32.totalorder %s25, %s28
    %p37 = scmp.eq.s32.totalorder %s20, 1
    %p38 = por %p36, %p37
    %p39 = scmp.ne.s32.totalorder %s28, %s29
    %p40 = scmp.eq.s32.totalorder %s20, 0
    %p41 = por %p39, %p40
    %p42 = scmp.ne.s32.totalorder %s28, %s29
    %p43 = scmp.eq.s32.totalorder %s21, 1
    %p44 = por %p42, %p43
    %p46 = scmp.ne.s32.totalorder %s29, %s45
    %p47 = scmp.eq.s32.totalorder %s21, 0
    %p48 = por %p46, %p47
    %s50 = sadd.s32 %s49, 1
    %p53 = scmp.eq.s32.totalorder %s15, 1
    %p54 = scmp.ne.s32.totalorder %s49, %s51
    %p55 = scmp.eq.s32.totalorder %s15, 0
    %p56 = por %p54, %p55
    %p57 = scmp.ne.s32.totalorder %s49, %s51
    %p58 = scmp.eq.s32.totalorder %s20, 1
    %p59 = por %p57, %p58
    %p60 = scmp.ne.s32.totalorder %s51, %s52
    %p61 = scmp.eq.s32.totalorder %s20, 0
    %p62 = por %p60, %p61
    %p63 = scmp.ne.s32.totalorder %s51, %s52
    %p64 = scmp.eq.s32.totalorder %s21, 1
    %p65 = por %p63, %p64
    %p67 = scmp.ne.s32.totalorder %s52, %s66
    %p68 = scmp.eq.s32.totalorder %s21, 0
    %p69 = por %p67, %p68
    %s71 = sadd.s32 %s70, 1
    %p74 = scmp.eq.s32.totalorder %s15, 1
    %p75 = scmp.ne.s32.totalorder %s70, %s72
    %p76 = scmp.eq.s32.totalorder %s15, 0
    %p77 = por %p75, %p76
    %p78 = scmp.ne.s32.totalorder %s70, %s72
    %p79 = scmp.eq.s32.totalorder %s20, 1
    %p80 = por %p78, %p79
    %p81 = scmp.ne.s32.totalorder %s72, %s73
    %p82 = scmp.eq.s32.totalorder %s20, 0
    %p83 = por %p81, %p82
    %p84 = scmp.ne.s32.totalorder %s72, %s73
    %p85 = scmp.eq.s32.totalorder %s21, 1
    %p86 = por %p84, %p85
    %p88 = scmp.ne.s32.totalorder %s73, %s87
    %p89 = scmp.eq.s32.totalorder %s21, 0
    %p90 = por %p88, %p89
    %s92 = sadd.s32 %s91, 1
    %p95 = scmp.eq.s32.totalorder %s15, 1
    %p96 = scmp.ne.s32.totalorder %s91, %s93
    %p97 = scmp.eq.s32.totalorder %s15, 0
    %p98 = por %p96, %p97
    %p99 = scmp.ne.s32.totalorder %s91, %s93
    %p100 = scmp.eq.s32.totalorder %s20, 1
    %p101 = por %p99, %p100
    %p102 = scmp.ne.s32.totalorder %s93, %s94
    %p103 = scmp.eq.s32.totalorder %s20, 0
    %p104 = por %p102, %p103
    %p105 = scmp.ne.s32.totalorder %s93, %s94
    %p106 = scmp.eq.s32.totalorder %s21, 1
    %p107 = por %p105, %p106
    %p109 = scmp.ne.s32.totalorder %s94, %s108
    %p110 = scmp.eq.s32.totalorder %s21, 0
    %p111 = por %p109, %p110
    %s113 = sadd.s32 %s112, 1
    %p116 = scmp.eq.s32.totalorder %s15, 1
    %p117 = scmp.ne.s32.totalorder %s112, %s114
    %p118 = scmp.eq.s32.totalorder %s15, 0
    %p119 = por %p117, %p118
    %p120 = scmp.ne.s32.totalorder %s112, %s114
    %p121 = scmp.eq.s32.totalorder %s20, 1
    %p122 = por %p120, %p121
    %p123 = scmp.ne.s32.totalorder %s114, %s115
    %p124 = scmp.eq.s32.totalorder %s20, 0
    %p125 = por %p123, %p124
    %p126 = scmp.ne.s32.totalorder %s114, %s115
    %p127 = scmp.eq.s32.totalorder %s21, 1
    %p128 = por %p126, %p127
    %p130 = scmp.ne.s32.totalorder %s115, %s129
    %p131 = scmp.eq.s32.totalorder %s21, 0
    %p132 = por %p130, %p131
    %s134 = sadd.s32 %s133, 1
    %p137 = scmp.eq.s32.totalorder %s15, 1
    %p138 = scmp.ne.s32.totalorder %s133, %s135
    %p139 = scmp.eq.s32.totalorder %s15, 0
    %p140 = por %p138, %p139
    %p141 = scmp.ne.s32.totalorder %s133, %s135
    %p142 = scmp.eq.s32.totalorder %s20, 1
    %p143 = por %p141, %p142
    %p144 = scmp.ne.s32.totalorder %s135, %s136
    %p145 = scmp.eq.s32.totalorder %s20, 0
    %p146 = por %p144, %p145
    %p147 = scmp.ne.s32.totalorder %s135, %s136
    %p148 = scmp.eq.s32.totalorder %s21, 1
    %p149 = por %p147, %p148
    %p151 = scmp.ne.s32.totalorder %s136, %s150
    %p152 = scmp.eq.s32.totalorder %s21, 0
    %p153 = por %p151, %p152
    %s155 = sadd.s32 %s154, 1
    %p158 = scmp.eq.s32.totalorder %s15, 1
    %p159 = scmp.ne.s32.totalorder %s154, %s156
    %p160 = scmp.eq.s32.totalorder %s15, 0
    %p161 = por %p159, %p160
    %p162 = scmp.ne.s32.totalorder %s154, %s156
    %p163 = scmp.eq.s32.totalorder %s20, 1
    %p164 = por %p162, %p163
    %p165 = scmp.ne.s32.totalorder %s156, %s157
    %p166 = scmp.eq.s32.totalorder %s20, 0
    %p167 = por %p165, %p166
    %p168 = scmp.ne.s32.totalorder %s156, %s157
    %p169 = scmp.eq.s32.totalorder %s21, 1
    %p170 = por %p168, %p169
    %p172 = scmp.ne.s32.totalorder %s157, %s171
    %p173 = scmp.eq.s32.totalorder %s21, 0
    %p174 = por %p172, %p173
    %s176 = sadd.s32 %s175, 1
    %p179 = scmp.eq.s32.totalorder %s15, 1
    %p180 = scmp.ne.s32.totalorder %s175, %s177
    %p181 = scmp.eq.s32.totalorder %s15, 0
    %p182 = por %p180, %p181
    %p183 = scmp.ne.s32.totalorder %s175, %s177
    %p184 = scmp.eq.s32.totalorder %s20, 1
    %p185 = por %p183, %p184
    %p186 = scmp.ne.s32.totalorder %s177, %s178
    %p187 = scmp.eq.s32.totalorder %s20, 0
    %p188 = por %p186, %p187
    %p189 = scmp.ne.s32.totalorder %s177, %s178
    %p190 = scmp.eq.s32.totalorder %s21, 1
    %p191 = por %p189, %p190
    %p193 = scmp.ne.s32.totalorder %s178, %s192
    %p194 = scmp.eq.s32.totalorder %s21, 0
    %p195 = por %p193, %p194
    %s197 = sadd.s32 %s196, 1
    %p200 = scmp.eq.s32.totalorder %s15, 1
    %p201 = scmp.ne.s32.totalorder %s196, %s198
    %p202 = scmp.eq.s32.totalorder %s15, 0
    %p203 = por %p201, %p202
    %p204 = scmp.ne.s32.totalorder %s196, %s198
    %p205 = scmp.eq.s32.totalorder %s20, 1
    %p206 = por %p204, %p205
    %p207 = scmp.ne.s32.totalorder %s198, %s199
    %p208 = scmp.eq.s32.totalorder %s20, 0
    %p209 = por %p207, %p208
    %p210 = scmp.ne.s32.totalorder %s198, %s199
    %p211 = scmp.eq.s32.totalorder %s21, 1
    %p212 = por %p210, %p211
    %p214 = scmp.ne.s32.totalorder %s199, %s213
    %p215 = scmp.eq.s32.totalorder %s21, 0
    %p216 = por %p214, %p215
    %s217 = ssub.s32 %s15, %s22
    %p218 = scmp.eq.s32.totalorder %s217, 0
    %s220 = sadd.s32 %s219, 1
    %s221 = scalar_select %p218, %s219, %s220
    %p224 = pneg %p218
    %p225 = scmp.eq.s32.totalorder %s15, 1
    %p226 = por %p224, %p225
    %p227 = scmp.ne.s32.totalorder %s219, %s222
    %p228 = scmp.eq.s32.totalorder %s15, 0
    %p229 = por %p227, %p228
    %p230 = scmp.ne.s32.totalorder %s219, %s222
    %p231 = scmp.eq.s32.totalorder %s20, 1
    %p232 = por %p230, %p231
    %p233 = scmp.ne.s32.totalorder %s222, %s223
    %p234 = scmp.eq.s32.totalorder %s20, 0
    %p235 = por %p233, %p234
    %p236 = scmp.ne.s32.totalorder %s222, %s223
    %p237 = scmp.eq.s32.totalorder %s21, 1
    %p238 = por %p236, %p237
    %p240 = scmp.ne.s32.totalorder %s223, %s239
    %p241 = scmp.eq.s32.totalorder %s21, 0
    %p242 = por %p240, %p241
    %p243 = scmp.le.s32.totalorder 1, %s15
    %p244 = scmp.lt.s32.totalorder %s15, 3
    %p245 = pnand %p243, %p244
    %p246 = pneg %p245
    // Predicated region
    $region9: #{teco_upconv_forward.1} parent=5 // pred_check
      _
    $region10: #{teco_upconv_forward.1} parent=5 // pred_check_branch
      %248 = sbr.rel (%p245) target = $region12
    $region11: #{teco_upconv_forward.1} parent=5 // pred_region
      %s249 = ssub.s32 %s15, 1
      // Predicated region
      $region13: #{teco_upconv_forward.1} parent=11 // pred_check
        %p250 = pneg %p62
      $region14: #{teco_upconv_forward.1} parent=11 // pred_check_branch
        %252 = sbr.rel (%p250) target = $region16
      $region15: #{teco_upconv_forward.1} parent=11 // pred_region
        _
      $region16: #{teco_upconv_forward.1} parent=11 // pred_fallthru
        _
      // Predicated region
      $region17: #{teco_upconv_forward.1} parent=11 // pred_check
        %p253 = pneg %p83
      $region18: #{teco_upconv_forward.1} parent=11 // pred_check_branch
        %255 = sbr.rel (%p253) target = $region20
      $region19: #{teco_upconv_forward.1} parent=11 // pred_region
        _
      $region20: #{teco_upconv_forward.1} parent=11 // pred_fallthru
        _
      // Predicated region
      $region21: #{teco_upconv_forward.1} parent=11 // pred_check
        %p256 = pneg %p104
      $region22: #{teco_upconv_forward.1} parent=11 // pred_check_branch
        %258 = sbr.rel (%p256) target = $region24
      $region23: #{teco_upconv_forward.1} parent=11 // pred_region
        _
      $region24: #{teco_upconv_forward.1} parent=11 // pred_fallthru
        _
      // Predicated region
      $region25: #{teco_upconv_forward.1} parent=11 // pred_check
        %p259 = pneg %p125
      $region26: #{teco_upconv_forward.1} parent=11 // pred_check_branch
        %261 = sbr.rel (%p259) target = $region28
      $region27: #{teco_upconv_forward.1} parent=11 // pred_region
        _
      $region28: #{teco_upconv_forward.1} parent=11 // pred_fallthru
        _
      // Predicated region
      $region29: #{teco_upconv_forward.1} parent=11 // pred_check
        %p262 = pneg %p146
      $region30: #{teco_upconv_forward.1} parent=11 // pred_check_branch
        %264 = sbr.rel (%p262) target = $region32
      $region31: #{teco_upconv_forward.1} parent=11 // pred_region
        _
      $region32: #{teco_upconv_forward.1} parent=11 // pred_fallthru
        _
      // Predicated region
      $region33: #{teco_upconv_forward.1} parent=11 // pred_check
        %p265 = pneg %p167
      $region34: #{teco_upconv_forward.1} parent=11 // pred_check_branch
        %267 = sbr.rel (%p265) target = $region36
      $region35: #{teco_upconv_forward.1} parent=11 // pred_region
        _
      $region36: #{teco_upconv_forward.1} parent=11 // pred_fallthru
        _
      // Predicated region
      $region37: #{teco_upconv_forward.1} parent=11 // pred_check
        %p268 = pneg %p188
      $region38: #{teco_upconv_forward.1} parent=11 // pred_check_branch
        %270 = sbr.rel (%p268) target = $region40
      $region39: #{teco_upconv_forward.1} parent=11 // pred_region
        _
      $region40: #{teco_upconv_forward.1} parent=11 // pred_fallthru
        _
      // Predicated region
      $region41: #{teco_upconv_forward.1} parent=11 // pred_check
        %p271 = pneg %p209
      $region42: #{teco_upconv_forward.1} parent=11 // pred_check_branch
        %273 = sbr.rel (%p271) target = $region44
      $region43: #{teco_upconv_forward.1} parent=11 // pred_region
        _
      $region44: #{teco_upconv_forward.1} parent=11 // pred_fallthru
        _
    $region12: #{teco_upconv_forward.1} parent=5 // pred_fallthru
      _
    %p274 = scmp.lt.s32.totalorder %s15, 2
    // Predicated region
    $region45: #{teco_upconv_forward.1} parent=5 // pred_check
      %p275 = pneg %p274
    $region46: #{teco_upconv_forward.1} parent=5 // pred_check_branch
      %277 = sbr.rel (%p275) target = $region48
    $region47: #{teco_upconv_forward.1} parent=5 // pred_region
      // Predicated region
      $region49: #{teco_upconv_forward.1} parent=47 // pred_check
        %p278 = pneg %p35
      $region50: #{teco_upconv_forward.1} parent=47 // pred_check_branch
        %280 = sbr.rel (%p278) target = $region52
      $region51: #{teco_upconv_forward.1} parent=47 // pred_region
        %p281 = scmp.lt.s32.totalorder %s15, 1
        %s282 = scalar_select %p281, %s15, 1
        %s283 = smul.addr %s282, 4
        %s284 = smul.addr %s283, 8
        %s285 = scalar_lea.vmem %s0, %s284
      $region52: #{teco_upconv_forward.1} parent=47 // pred_fallthru
        _
    $region48: #{teco_upconv_forward.1} parent=5 // pred_fallthru
      _
    %p286 = scmp.le.s32.totalorder 1, %s15
    %p287 = scmp.lt.s32.totalorder %s15, 3
    %p288 = pnand %p286, %p287
    %p289 = pneg %p288
    // Predicated region
    $region53: #{teco_upconv_forward.1} parent=5 // pred_check
      _
    $region54: #{teco_upconv_forward.1} parent=5 // pred_check_branch
      %291 = sbr.rel (%p288) target = $region56
    $region55: #{teco_upconv_forward.1} parent=5 // pred_region
      %s292 = ssub.s32 %s15, 1
      %p293 = scmp.lt.s32.totalorder %s20, 1
      %s294 = scalar_select %p293, %s20, 1
      %s295 = smul.addr %s294, 4
      %s296 = smul.addr %s295, 8
      %s297 = scalar_lea.vmem %s0, %s296
      %p298 = pneg %p41
      %p299 = pneg %p38
      %p300 = pneg %p62
      %p301 = pneg %p59
      %p302 = pneg %p83
      %p303 = pneg %p80
      %p304 = pneg %p104
      %p305 = pneg %p101
      %p306 = pneg %p125
      %p307 = pneg %p122
      %p308 = pneg %p146
      %p309 = pneg %p143
      %p310 = pneg %p167
      %p311 = pneg %p164
      %p312 = pneg %p188
      %p313 = pneg %p185
      %p314 = pneg %p209
      %p315 = pneg %p206
      %p316 = pneg %p235
      %p317 = pneg %p232
      %p318 = scmp.lt.s32.totalorder %s20, 1
      %s319 = scalar_select %p318, %s20, 1
      %s320 = smul.addr %s319, 8
      %s321 = smul.addr %s320, 4
      %s322 = scalar_lea.vmem %s9, %s321
      %p323 = scmp.lt.s32.totalorder %s20, 1
      %s324 = scalar_select %p323, %s20, 1
      %s325 = smul.addr %s324, 4
      %s326 = smul.addr %s325, 8
      %s327 = scalar_lea.vmem %s0, %s326
      %p328 = scmp.lt.s32.totalorder %s20, 1
      %s329 = scalar_select %p328, %s20, 1
      %s330 = smul.addr %s329, 8
      %s331 = smul.addr %s330, 4
      %s332 = scalar_lea.vmem %s9, %s331
      %v333 = vld [vmem:[%s327] sm:$0xff]
      %v334 = vld [vmem:[%s327 + $0x8] sm:$0xff]
      %v335 = vld [vmem:[%s327 + $0x10] sm:$0xff]
      %v336 = vld [vmem:[%s327 + $0x18] sm:$0xff]
      %vm337 = vcmask 138240
      %338 = vst.msk [vmem:[#allocation2] sm:$0xff] %vm337, 0.0
      %339 = vst.msk [vmem:[#allocation2 + $0x18] sm:$0xff] %vm337, 0.0
      %vm340 = vcmask 277640
      %341 = vst.msk [vmem:[#allocation2 + $0x10] sm:$0xff] %vm340, 0.0
      %342 = vst.msk [vmem:[#allocation2 + $0x28] sm:$0xff] %vm340, 0.0
      %347 = vrot.lane.b32.xlu0 %v333, 17
      %v348 = vpop.permute.xlu0 %347
      %349 = vrot.lane.b32.xlu0 %v334, 17
      %v350 = vpop.permute.xlu0 %349
      %351 = vrot.lane.b32.xlu0 %v335, 17
      %v352 = vpop.permute.xlu0 %351
      %353 = vrot.lane.b32.xlu0 %v336, 17
      %v354 = vpop.permute.xlu0 %353
      %v355 = vsel %vm337, %v348, %v350
      %v356 = vsel %vm337, %v352, %v354
      %vm363 = vcmask 1047688
      %364 = vst.msk [vmem:[#allocation2] sm:$0xff] %vm363, %v348
      %365 = vst [vmem:[#allocation2 + $0x8] sm:$0xff] %v355
      %366 = vst.msk [vmem:[#allocation2 + $0x10] sm:$0xff] %vm337, %v350
      %367 = vst.msk [vmem:[#allocation2 + $0x18] sm:$0xff] %vm363, %v352
      %368 = vst [vmem:[#allocation2 + $0x20] sm:$0xff] %v356
      %369 = vst.msk [vmem:[#allocation2 + $0x28] sm:$0xff] %vm337, %v354
      %v370 = vlaneseq
      %v371 = vand.u32 %v370, 127
      %v372 = vadd.s32 %v371, 128
      %vm373 = vcmp.lt.s32.totalorder %v371, 0
      %v374 = vsub.s32 0, %v371
      %v375 = vsel %vm373, %v374, %v371
      %v376 = vshrl.u32 %v375, 4
      %v377 = vand.u32 %v375, 15
      %v378 = vsub.s32 0, %v377
      %v379 = vsel %vm373, %v378, %v377
      %vm380 = vcmp.lt.s32.totalorder %v372, 0
      %v381 = vsub.s32 0, %v372
      %v382 = vsel %vm380, %v381, %v372
      %v383 = vshrl.u32 %v382, 4
      %v384 = vand.u32 %v382, 15
      %v385 = vsub.s32 0, %v384
      %v386 = vsel %vm380, %v385, %v384
      %vm387 = vcmp.ne.s32.totalorder %v379, 0
      %vm388 = vcmp.ne.s32.totalorder %v386, 0
      %vm389 = vcmp.lt.s32.totalorder %v379, 0
      %vm390 = vcmp.lt.s32.totalorder %v386, 0
      %vm391 = vmand %vm389, %vm387
      %vm392 = vmand %vm390, %vm388
      %v393 = vadd.s32 %v379, 16
      %v394 = vadd.s32 %v386, 16
      %v395 = vsel %vm391, %v393, %v379
      %v396 = vsel %vm392, %v394, %v386
      %vm397 = vcmp.ne.s32.totalorder %v395, 0
      %vm398 = vcmp.ne.s32.totalorder %v396, 0
      %vm399 = vcmp.ne.s32.totalorder %v395, 15
      %vm400 = vcmp.ne.s32.totalorder %v396, 15
      %v401 = vld [vmem:[#allocation2] sm:$0xff]
      %v402 = vld [vmem:[#allocation2 + $0x8] sm:$0xff]
      %v403 = vld [vmem:[#allocation2 + $0x18] sm:$0xff]
      %v404 = vld [vmem:[#allocation2 + $0x20] sm:$0xff]
      %v405 = vsel %vm397, 1, 0
      %v406 = vsel %vm398, 1, 0
      %vm407 = vcmp.eq.s32.totalorder %v405, 1
      %vm408 = vcmp.eq.s32.totalorder %v406, 1
      %v409 = vsel %vm407, %v401, 0.0
      %v410 = vsel %vm408, %v402, 0.0
      %v411 = vsel %vm407, %v403, 0.0
      %v412 = vsel %vm408, %v404, 0.0
      %v413 = vld [vmem:[#allocation2 + $0x10] sm:$0xff]
      %v414 = vld [vmem:[#allocation2 + $0x28] sm:$0xff]
      %v415 = vsel %vm399, 1, 0
      %v416 = vsel %vm400, 1, 0
      %vm417 = vcmp.eq.s32.totalorder %v415, 1
      %vm418 = vcmp.eq.s32.totalorder %v416, 1
      %425 = vrot.lane.b32.xlu0 %v401, 126
      %v426 = vpop.permute.xlu0 %425
      %427 = vrot.lane.b32.xlu0 %v402, 126
      %v428 = vpop.permute.xlu0 %427
      %429 = vrot.lane.b32.xlu0 %v413, 126
      %v430 = vpop.permute.xlu0 %429
      %431 = vrot.lane.b32.xlu0 %v403, 126
      %v432 = vpop.permute.xlu0 %431
      %433 = vrot.lane.b32.xlu0 %v404, 126
      %v434 = vpop.permute.xlu0 %433
      %435 = vrot.lane.b32.xlu0 %v414, 126
      %v436 = vpop.permute.xlu0 %435
      %vm437 = vcmask 1031168
      %v438 = vsel %vm437, %v426, %v428
      %v439 = vsel %vm437, %v428, %v430
      %v440 = vsel %vm437, %v432, %v434
      %v441 = vsel %vm437, %v434, %v436
      %v446 = vsel %vm417, %v438, 0.0
      %v447 = vsel %vm418, %v439, 0.0
      %v448 = vsel %vm417, %v440, 0.0
      %v449 = vsel %vm418, %v441, 0.0
      %450 = vrot.lane.b32.xlu0 %v401, 112
      %v451 = vpop.permute.xlu0 %450
      %452 = vrot.lane.b32.xlu0 %v402, 112
      %v453 = vpop.permute.xlu0 %452
      %454 = vrot.lane.b32.xlu0 %v413, 112
      %v455 = vpop.permute.xlu0 %454
      %456 = vrot.lane.b32.xlu0 %v403, 112
      %v457 = vpop.permute.xlu0 %456
      %458 = vrot.lane.b32.xlu0 %v404, 112
      %v459 = vpop.permute.xlu0 %458
      %460 = vrot.lane.b32.xlu0 %v414, 112
      %v461 = vpop.permute.xlu0 %460
      %vm462 = vcmask 916480
      %v463 = vsel %vm462, %v451, %v453
      %v464 = vsel %vm462, %v453, %v455
      %v465 = vsel %vm462, %v457, %v459
      %v466 = vsel %vm462, %v459, %v461
      %v471 = vsel %vm407, %v463, 0.0
      %v472 = vsel %vm408, %v464, 0.0
      %v473 = vsel %vm407, %v465, 0.0
      %v474 = vsel %vm408, %v466, 0.0
      %475 = vrot.lane.b32.xlu0 %v401, 110
      %v476 = vpop.permute.xlu0 %475
      %477 = vrot.lane.b32.xlu0 %v402, 110
      %v478 = vpop.permute.xlu0 %477
      %479 = vrot.lane.b32.xlu0 %v413, 110
      %v480 = vpop.permute.xlu0 %479
      %481 = vrot.lane.b32.xlu0 %v403, 110
      %v482 = vpop.permute.xlu0 %481
      %483 = vrot.lane.b32.xlu0 %v404, 110
      %v484 = vpop.permute.xlu0 %483
      %485 = vrot.lane.b32.xlu0 %v414, 110
      %v486 = vpop.permute.xlu0 %485
      %vm487 = vcmask 900096
      %v488 = vsel %vm487, %v476, %v478
      %v489 = vsel %vm487, %v478, %v480
      %v490 = vsel %vm487, %v482, %v484
      %v491 = vsel %vm487, %v484, %v486
      %v496 = vsel %vm417, %v488, 0.0
      %v497 = vsel %vm418, %v489, 0.0
      %v498 = vsel %vm417, %v490, 0.0
      %v499 = vsel %vm418, %v491, 0.0
      %500 = vrot.lane.b32.xlu0 %v401, 96
      %v501 = vpop.permute.xlu0 %500
      %502 = vrot.lane.b32.xlu0 %v402, 96
      %v503 = vpop.permute.xlu0 %502
      %504 = vrot.lane.b32.xlu0 %v413, 96
      %v505 = vpop.permute.xlu0 %504
      %506 = vrot.lane.b32.xlu0 %v403, 96
      %v507 = vpop.permute.xlu0 %506
      %508 = vrot.lane.b32.xlu0 %v404, 96
      %v509 = vpop.permute.xlu0 %508
      %510 = vrot.lane.b32.xlu0 %v414, 96
      %v511 = vpop.permute.xlu0 %510
      %vm512 = vcmask 785408
      %v513 = vsel %vm512, %v501, %v503
      %v514 = vsel %vm512, %v503, %v505
      %v515 = vsel %vm512, %v507, %v509
      %v516 = vsel %vm512, %v509, %v511
      %v521 = vsel %vm407, %v513, 0.0
      %v522 = vsel %vm408, %v514, 0.0
      %v523 = vsel %vm407, %v515, 0.0
      %v524 = vsel %vm408, %v516, 0.0
      %525 = vrot.lane.b32.xlu0 %v401, 94
      %v526 = vpop.permute.xlu0 %525
      %527 = vrot.lane.b32.xlu0 %v402, 94
      %v528 = vpop.permute.xlu0 %527
      %529 = vrot.lane.b32.xlu0 %v413, 94
      %v530 = vpop.permute.xlu0 %529
      %531 = vrot.lane.b32.xlu0 %v403, 94
      %v532 = vpop.permute.xlu0 %531
      %533 = vrot.lane.b32.xlu0 %v404, 94
      %v534 = vpop.permute.xlu0 %533
      %535 = vrot.lane.b32.xlu0 %v414, 94
      %v536 = vpop.permute.xlu0 %535
      %vm537 = vcmask 769024
      %v538 = vsel %vm537, %v526, %v528
      %v539 = vsel %vm537, %v528, %v530
      %v540 = vsel %vm537, %v532, %v534
      %v541 = vsel %vm537, %v534, %v536
      %v546 = vsel %vm417, %v538, 0.0
      %v547 = vsel %vm418, %v539, 0.0
      %v548 = vsel %vm417, %v540, 0.0
      %v549 = vsel %vm418, %v541, 0.0
      %550 = vrot.lane.b32.xlu0 %v401, 127
      %v551 = vpop.permute.xlu0 %550
      %552 = vrot.lane.b32.xlu0 %v402, 127
      %v553 = vpop.permute.xlu0 %552
      %554 = vrot.lane.b32.xlu0 %v413, 127
      %v555 = vpop.permute.xlu0 %554
      %556 = vrot.lane.b32.xlu0 %v403, 127
      %v557 = vpop.permute.xlu0 %556
      %558 = vrot.lane.b32.xlu0 %v404, 127
      %v559 = vpop.permute.xlu0 %558
      %560 = vrot.lane.b32.xlu0 %v414, 127
      %v561 = vpop.permute.xlu0 %560
      %vm562 = vcmask 1039360
      %v563 = vsel %vm562, %v551, %v553
      %v564 = vsel %vm562, %v553, %v555
      %v565 = vsel %vm562, %v557, %v559
      %v566 = vsel %vm562, %v559, %v561
      %571 = vrot.lane.b32.xlu0 %v401, 111
      %v572 = vpop.permute.xlu0 %571
      %573 = vrot.lane.b32.xlu0 %v402, 111
      %v574 = vpop.permute.xlu0 %573
      %575 = vrot.lane.b32.xlu0 %v413, 111
      %v576 = vpop.permute.xlu0 %575
      %577 = vrot.lane.b32.xlu0 %v403, 111
      %v578 = vpop.permute.xlu0 %577
      %579 = vrot.lane.b32.xlu0 %v404, 111
      %v580 = vpop.permute.xlu0 %579
      %581 = vrot.lane.b32.xlu0 %v414, 111
      %v582 = vpop.permute.xlu0 %581
      %vm583 = vcmask 908288
      %v584 = vsel %vm583, %v572, %v574
      %v585 = vsel %vm583, %v574, %v576
      %v586 = vsel %vm583, %v578, %v580
      %v587 = vsel %vm583, %v580, %v582
      %592 = vrot.lane.b32.xlu0 %v401, 95
      %v593 = vpop.permute.xlu0 %592
      %594 = vrot.lane.b32.xlu0 %v402, 95
      %v595 = vpop.permute.xlu0 %594
      %596 = vrot.lane.b32.xlu0 %v413, 95
      %v597 = vpop.permute.xlu0 %596
      %598 = vrot.lane.b32.xlu0 %v403, 95
      %v599 = vpop.permute.xlu0 %598
      %600 = vrot.lane.b32.xlu0 %v404, 95
      %v601 = vpop.permute.xlu0 %600
      %602 = vrot.lane.b32.xlu0 %v414, 95
      %v603 = vpop.permute.xlu0 %602
      %vm604 = vcmask 777216
      %v605 = vsel %vm604, %v593, %v595
      %v606 = vsel %vm604, %v595, %v597
      %v607 = vsel %vm604, %v599, %v601
      %v608 = vsel %vm604, %v601, %v603
      %v613 = vld [vmem:[%s1] sm:$0xff]
      %v614 = vld [vmem:[%s1 + $0x8] sm:$0xff]
      %v615 = vld [vmem:[%s1 + $0x10] sm:$0xff]
      %v616 = vld [vmem:[%s1 + $0x18] sm:$0xff]
      %v617 = vld [vmem:[%s2] sm:$0xff]
      %v618 = vld [vmem:[%s2 + $0x8] sm:$0xff]
      %620 = vset.pattern.permute.xlu0 0
      %621 = vperm.xlu0 %620, %v617
      %v622 = vpop.permute.xlu0 %621
      %625 = vset.pattern.permute.xlu0 0
      %626 = vperm.xlu0 %625, %v618
      %v627 = vpop.permute.xlu0 %626
      %vm629 = vcmask 130048
      %v631 = vsel %vm629, %v614, 0
      %v634 = vsel %vm629, %v616, 0
      %636 = vmatpush.msra.mxu0 %v607
      %637 = vmatpush.msra.mxu0 %v605
      %638 = vmatpush.msra.mxu0 %v523
      %639 = vmatpush.msra.mxu0 %v521
      %640 = vmatpush.msra.mxu0 %v498
      %641 = vmatpush.msra.mxu0 %v496
      %642 = vmatpush.msra.mxu0 %v586
      %643 = vmatpush.msra.mxu0 %v584
      %644 = vmatpush.msra.mxu0 %v473
      %645 = vmatpush.msra.mxu0 %v471
      %646 = vmatpush.msra.mxu0 %v448
      %647 = vmatpush.msra.mxu0 %v446
      %648 = vmatpush.msra.mxu0 %v565
      %649 = vmatpush.msra.mxu0 %v563
      %650 = vmatpush.msra.mxu0 %v411
      %651 = vmatpush.msra.mxu0 %v409
      %652 = vmatmul.f32.gmra.mxu0 %v613
      %v653 = vpop.f32.mrf.mxu0
      %v654 = vadd.f32 %v622, %v653
      %655 = vmatmul.f32.gmra.mxu0 %v615
      %v656 = vpop.f32.mrf.mxu0
      %v657 = vadd.f32 %v627, %v656
      %658 = vdwg.mxu0
      %659 = vmatpush.msra.mxu0 0.0
      %660 = vmatpush.msra.mxu0 0.0
      %661 = vmatpush.msra.mxu0 0.0
      %662 = vmatpush.msra.mxu0 0.0
      %663 = vmatpush.msra.mxu0 0.0
      %664 = vmatpush.msra.mxu0 0.0
      %665 = vmatpush.msra.mxu0 0.0
      %666 = vmatpush.msra.mxu0 0.0
      %667 = vmatpush.msra.mxu0 0.0
      %668 = vmatpush.msra.mxu0 0.0
      %669 = vmatpush.msra.mxu0 0.0
      %670 = vmatpush.msra.mxu0 0.0
      %671 = vmatpush.msra.mxu0 0.0
      %672 = vmatpush.msra.mxu0 0.0
      %673 = vmatpush.msra.mxu0 %v548
      %674 = vmatpush.msra.mxu0 %v546
      %675 = vmatmul.f32.gmra.mxu0 %v631
      %v676 = vpop.f32.mrf.mxu0
      %v677 = vadd.f32 %v654, %v676
      %678 = vmatmul.f32.gmra.mxu0 %v634
      %v679 = vpop.f32.mrf.mxu0
      %v680 = vadd.f32 %v657, %v679
      %681 = vdwg.mxu0
      %682 = vmatpush.msra.mxu0 %v608
      %683 = vmatpush.msra.mxu0 %v606
      %684 = vmatpush.msra.mxu0 %v524
      %685 = vmatpush.msra.mxu0 %v522
      %686 = vmatpush.msra.mxu0 %v499
      %687 = vmatpush.msra.mxu0 %v497
      %688 = vmatpush.msra.mxu0 %v587
      %689 = vmatpush.msra.mxu0 %v585
      %690 = vmatpush.msra.mxu0 %v474
      %691 = vmatpush.msra.mxu0 %v472
      %692 = vmatpush.msra.mxu0 %v449
      %693 = vmatpush.msra.mxu0 %v447
      %694 = vmatpush.msra.mxu0 %v566
      %695 = vmatpush.msra.mxu0 %v564
      %696 = vmatpush.msra.mxu0 %v412
      %697 = vmatpush.msra.mxu0 %v410
      %698 = vmatmul.f32.gmra.mxu0 %v613
      %v699 = vpop.f32.mrf.mxu0
      %v700 = vadd.f32 %v622, %v699
      %701 = vmatmul.f32.gmra.mxu0 %v615
      %v702 = vpop.f32.mrf.mxu0
      %v703 = vadd.f32 %v627, %v702
      %704 = vdwg.mxu0
      %705 = vmatpush.msra.mxu0 0.0
      %706 = vmatpush.msra.mxu0 0.0
      %707 = vmatpush.msra.mxu0 0.0
      %708 = vmatpush.msra.mxu0 0.0
      %709 = vmatpush.msra.mxu0 0.0
      %710 = vmatpush.msra.mxu0 0.0
      %711 = vmatpush.msra.mxu0 0.0
      %712 = vmatpush.msra.mxu0 0.0
      %713 = vmatpush.msra.mxu0 0.0
      %714 = vmatpush.msra.mxu0 0.0
      %715 = vmatpush.msra.mxu0 0.0
      %716 = vmatpush.msra.mxu0 0.0
      %717 = vmatpush.msra.mxu0 0.0
      %718 = vmatpush.msra.mxu0 0.0
      %719 = vmatpush.msra.mxu0 %v549
      %720 = vmatpush.msra.mxu0 %v547
      %721 = vmatmul.f32.gmra.mxu0 %v631
      %v722 = vpop.f32.mrf.mxu0
      %v723 = vadd.f32 %v700, %v722
      %724 = vmatmul.f32.gmra.mxu0 %v634
      %v725 = vpop.f32.mrf.mxu0
      %v726 = vadd.f32 %v703, %v725
      %727 = vdwg.mxu0
      %v728 = vxor.u32 %v677, 2147483648
      %v729 = vxor.u32 %v723, 2147483648
      %v730 = vxor.u32 %v680, 2147483648
      %v731 = vxor.u32 %v726, 2147483648
      %v732 = vmul.f32 %v728, 1.442695
      %v733 = vpow.pop %v732
      %v734 = vmul.f32 %v729, 1.442695
      %v735 = vpow.pop %v734
      %v736 = vmul.f32 %v730, 1.442695
      %v737 = vpow.pop %v736
      %v738 = vmul.f32 %v731, 1.442695
      %v739 = vpow.pop %v738
      %v740 = vadd.f32 %v733, 1.0
      %v741 = vadd.f32 %v735, 1.0
      %v742 = vadd.f32 %v737, 1.0
      %v743 = vadd.f32 %v739, 1.0
      %v744 = vrcp.pop %v740
      %v745 = vmul.f32 %v740, %v744
      %v746 = vsub.f32 1.0, %v745
      %v747 = vmul.f32 %v744, %v746
      %v748 = vadd.f32 %v744, %v747
      %vm749 = vweird.f32 %v740
      %vm750 = vweird.f32 %v744
      %vm751 = vmor %vm749, %vm750
      %v752 = vsel %vm751, %v744, %v748
      %v753 = vand.u32 2147483647, %v740
      %vm754 = vcmp.eq.f32.partialorder %v753, 8.507059e+37
      %v755 = vand.u32 %v740, 2147483648
      %v756 = vor.u32 1.1754944e-38, %v755
      %v757 = vsel %vm754, %v756, %v752
      %v758 = vmul.f32 1.0, %v757
      %v759 = vrcp.pop %v741
      %v760 = vmul.f32 %v741, %v759
      %v761 = vsub.f32 1.0, %v760
      %v762 = vmul.f32 %v759, %v761
      %v763 = vadd.f32 %v759, %v762
      %vm764 = vweird.f32 %v741
      %vm765 = vweird.f32 %v759
      %vm766 = vmor %vm764, %vm765
      %v767 = vsel %vm766, %v759, %v763
      %v768 = vand.u32 2147483647, %v741
      %vm769 = vcmp.eq.f32.partialorder %v768, 8.507059e+37
      %v770 = vand.u32 %v741, 2147483648
      %v771 = vor.u32 1.1754944e-38, %v770
      %v772 = vsel %vm769, %v771, %v767
      %v773 = vmul.f32 1.0, %v772
      %v774 = vrcp.pop %v742
      %v775 = vmul.f32 %v742, %v774
      %v776 = vsub.f32 1.0, %v775
      %v777 = vmul.f32 %v774, %v776
      %v778 = vadd.f32 %v774, %v777
      %vm779 = vweird.f32 %v742
      %vm780 = vweird.f32 %v774
      %vm781 = vmor %vm779, %vm780
      %v782 = vsel %vm781, %v774, %v778
      %v783 = vand.u32 2147483647, %v742
      %vm784 = vcmp.eq.f32.partialorder %v783, 8.507059e+37
      %v785 = vand.u32 %v742, 2147483648
      %v786 = vor.u32 1.1754944e-38, %v785
      %v787 = vsel %vm784, %v786, %v782
      %v788 = vmul.f32 1.0, %v787
      %v789 = vrcp.pop %v743
      %v790 = vmul.f32 %v743, %v789
      %v791 = vsub.f32 1.0, %v790
      %v792 = vmul.f32 %v789, %v791
      %v793 = vadd.f32 %v789, %v792
      %vm794 = vweird.f32 %v743
      %vm795 = vweird.f32 %v789
      %vm796 = vmor %vm794, %vm795
      %v797 = vsel %vm796, %v789, %v793
      %v798 = vand.u32 2147483647, %v743
      %vm799 = vcmp.eq.f32.partialorder %v798, 8.507059e+37
      %v800 = vand.u32 %v743, 2147483648
      %v801 = vor.u32 1.1754944e-38, %v800
      %v802 = vsel %vm799, %v801, %v797
      %v803 = vmul.f32 1.0, %v802
      %v804 = vmul.f32 %v677, %v758
      %v805 = vmul.f32 %v723, %v773
      %v806 = vmul.f32 %v680, %v788
      %v807 = vmul.f32 %v726, %v803
      %808 = vst.msk [vmem:[#allocation2] sm:$0xff] %vm337, 0.0
      %809 = vst.msk [vmem:[#allocation2 + $0x18] sm:$0xff] %vm337, 0.0
      %810 = vst.msk [vmem:[#allocation2 + $0x10] sm:$0xff] %vm340, 0.0
      %811 = vst.msk [vmem:[#allocation2 + $0x28] sm:$0xff] %vm340, 0.0
      %816 = vrot.lane.b32.xlu0 %v804, 17
      %v817 = vpop.permute.xlu0 %816
      %818 = vrot.lane.b32.xlu0 %v805, 17
      %v819 = vpop.permute.xlu0 %818
      %820 = vrot.lane.b32.xlu0 %v806, 17
      %v821 = vpop.permute.xlu0 %820
      %822 = vrot.lane.b32.xlu0 %v807, 17
      %v823 = vpop.permute.xlu0 %822
      %v824 = vsel %vm337, %v817, %v819
      %v825 = vsel %vm337, %v821, %v823
      %832 = vst.msk [vmem:[#allocation2] sm:$0xff] %vm363, %v817
      %833 = vst [vmem:[#allocation2 + $0x8] sm:$0xff] %v824
      %834 = vst.msk [vmem:[#allocation2 + $0x10] sm:$0xff] %vm337, %v819
      %835 = vst.msk [vmem:[#allocation2 + $0x18] sm:$0xff] %vm363, %v821
      %836 = vst [vmem:[#allocation2 + $0x20] sm:$0xff] %v825
      %837 = vst.msk [vmem:[#allocation2 + $0x28] sm:$0xff] %vm337, %v823
      %v838 = vld [vmem:[#allocation2] sm:$0xff]
      %v839 = vld [vmem:[#allocation2 + $0x8] sm:$0xff]
      %v840 = vld [vmem:[#allocation2 + $0x18] sm:$0xff]
      %v841 = vld [vmem:[#allocation2 + $0x20] sm:$0xff]
      %v842 = vsel %vm407, %v838, 0.0
      %v843 = vsel %vm408, %v839, 0.0
      %v844 = vsel %vm407, %v840, 0.0
      %v845 = vsel %vm408, %v841, 0.0
      %v846 = vld [vmem:[#allocation2 + $0x10] sm:$0xff]
      %v847 = vld [vmem:[#allocation2 + $0x28] sm:$0xff]
      %854 = vrot.lane.b32.xlu0 %v838, 126
      %v855 = vpop.permute.xlu0 %854
      %856 = vrot.lane.b32.xlu0 %v839, 126
      %v857 = vpop.permute.xlu0 %856
      %858 = vrot.lane.b32.xlu0 %v846, 126
      %v859 = vpop.permute.xlu0 %858
      %860 = vrot.lane.b32.xlu0 %v840, 126
      %v861 = vpop.permute.xlu0 %860
      %862 = vrot.lane.b32.xlu0 %v841, 126
      %v863 = vpop.permute.xlu0 %862
      %864 = vrot.lane.b32.xlu0 %v847, 126
      %v865 = vpop.permute.xlu0 %864
      %v866 = vsel %vm437, %v855, %v857
      %v867 = vsel %vm437, %v857, %v859
      %v868 = vsel %vm437, %v861, %v863
      %v869 = vsel %vm437, %v863, %v865
      %v874 = vsel %vm417, %v866, 0.0
      %v875 = vsel %vm418, %v867, 0.0
      %v876 = vsel %vm417, %v868, 0.0
      %v877 = vsel %vm418, %v869, 0.0
      %878 = vrot.lane.b32.xlu0 %v838, 112
      %v879 = vpop.permute.xlu0 %878
      %880 = vrot.lane.b32.xlu0 %v839, 112
      %v881 = vpop.permute.xlu0 %880
      %882 = vrot.lane.b32.xlu0 %v846, 112
      %v883 = vpop.permute.xlu0 %882
      %884 = vrot.lane.b32.xlu0 %v840, 112
      %v885 = vpop.permute.xlu0 %884
      %886 = vrot.lane.b32.xlu0 %v841, 112
      %v887 = vpop.permute.xlu0 %886
      %888 = vrot.lane.b32.xlu0 %v847, 112
      %v889 = vpop.permute.xlu0 %888
      %v890 = vsel %vm462, %v879, %v881
      %v891 = vsel %vm462, %v881, %v883
      %v892 = vsel %vm462, %v885, %v887
      %v893 = vsel %vm462, %v887, %v889
      %v898 = vsel %vm407, %v890, 0.0
      %v899 = vsel %vm408, %v891, 0.0
      %v900 = vsel %vm407, %v892, 0.0
      %v901 = vsel %vm408, %v893, 0.0
      %902 = vrot.lane.b32.xlu0 %v838, 110
      %v903 = vpop.permute.xlu0 %902
      %904 = vrot.lane.b32.xlu0 %v839, 110
      %v905 = vpop.permute.xlu0 %904
      %906 = vrot.lane.b32.xlu0 %v846, 110
      %v907 = vpop.permute.xlu0 %906
      %908 = vrot.lane.b32.xlu0 %v840, 110
      %v909 = vpop.permute.xlu0 %908
      %910 = vrot.lane.b32.xlu0 %v841, 110
      %v911 = vpop.permute.xlu0 %910
      %912 = vrot.lane.b32.xlu0 %v847, 110
      %v913 = vpop.permute.xlu0 %912
      %v914 = vsel %vm487, %v903, %v905
      %v915 = vsel %vm487, %v905, %v907
      %v916 = vsel %vm487, %v909, %v911
      %v917 = vsel %vm487, %v911, %v913
      %v922 = vsel %vm417, %v914, 0.0
      %v923 = vsel %vm418, %v915, 0.0
      %v924 = vsel %vm417, %v916, 0.0
      %v925 = vsel %vm418, %v917, 0.0
      %926 = vrot.lane.b32.xlu0 %v838, 96
      %v927 = vpop.permute.xlu0 %926
      %928 = vrot.lane.b32.xlu0 %v839, 96
      %v929 = vpop.permute.xlu0 %928
      %930 = vrot.lane.b32.xlu0 %v846, 96
      %v931 = vpop.permute.xlu0 %930
      %932 = vrot.lane.b32.xlu0 %v840, 96
      %v933 = vpop.permute.xlu0 %932
      %934 = vrot.lane.b32.xlu0 %v841, 96
      %v935 = vpop.permute.xlu0 %934
      %936 = vrot.lane.b32.xlu0 %v847, 96
      %v937 = vpop.permute.xlu0 %936
      %v938 = vsel %vm512, %v927, %v929
      %v939 = vsel %vm512, %v929, %v931
      %v940 = vsel %vm512, %v933, %v935
      %v941 = vsel %vm512, %v935, %v937
      %v946 = vsel %vm407, %v938, 0.0
      %v947 = vsel %vm408, %v939, 0.0
      %v948 = vsel %vm407, %v940, 0.0
      %v949 = vsel %vm408, %v941, 0.0
      %950 = vrot.lane.b32.xlu0 %v838, 94
      %v951 = vpop.permute.xlu0 %950
      %952 = vrot.lane.b32.xlu0 %v839, 94
      %v953 = vpop.permute.xlu0 %952
      %954 = vrot.lane.b32.xlu0 %v846, 94
      %v955 = vpop.permute.xlu0 %954
      %956 = vrot.lane.b32.xlu0 %v840, 94
      %v957 = vpop.permute.xlu0 %956
      %958 = vrot.lane.b32.xlu0 %v841, 94
      %v959 = vpop.permute.xlu0 %958
      %960 = vrot.lane.b32.xlu0 %v847, 94
      %v961 = vpop.permute.xlu0 %960
      %v962 = vsel %vm537, %v951, %v953
      %v963 = vsel %vm537, %v953, %v955
      %v964 = vsel %vm537, %v957, %v959
      %v965 = vsel %vm537, %v959, %v961
      %v970 = vsel %vm417, %v962, 0.0
      %v971 = vsel %vm418, %v963, 0.0
      %v972 = vsel %vm417, %v964, 0.0
      %v973 = vsel %vm418, %v965, 0.0
      %974 = vrot.lane.b32.xlu0 %v838, 127
      %v975 = vpop.permute.xlu0 %974
      %976 = vrot.lane.b32.xlu0 %v839, 127
      %v977 = vpop.permute.xlu0 %976
      %978 = vrot.lane.b32.xlu0 %v846, 127
      %v979 = vpop.permute.xlu0 %978
      %980 = vrot.lane.b32.xlu0 %v840, 127
      %v981 = vpop.permute.xlu0 %980
      %982 = vrot.lane.b32.xlu0 %v841, 127
      %v983 = vpop.permute.xlu0 %982
      %984 = vrot.lane.b32.xlu0 %v847, 127
      %v985 = vpop.permute.xlu0 %984
      %v986 = vsel %vm562, %v975, %v977
      %v987 = vsel %vm562, %v977, %v979
      %v988 = vsel %vm562, %v981, %v983
      %v989 = vsel %vm562, %v983, %v985
      %994 = vrot.lane.b32.xlu0 %v838, 111
      %v995 = vpop.permute.xlu0 %994
      %996 = vrot.lane.b32.xlu0 %v839, 111
      %v997 = vpop.permute.xlu0 %996
      %998 = vrot.lane.b32.xlu0 %v846, 111
      %v999 = vpop.permute.xlu0 %998
      %1000 = vrot.lane.b32.xlu0 %v840, 111
      %v1001 = vpop.permute.xlu0 %1000
      %1002 = vrot.lane.b32.xlu0 %v841, 111
      %v1003 = vpop.permute.xlu0 %1002
      %1004 = vrot.lane.b32.xlu0 %v847, 111
      %v1005 = vpop.permute.xlu0 %1004
      %v1006 = vsel %vm583, %v995, %v997
      %v1007 = vsel %vm583, %v997, %v999
      %v1008 = vsel %vm583, %v1001, %v1003
      %v1009 = vsel %vm583, %v1003, %v1005
      %1014 = vrot.lane.b32.xlu0 %v838, 95
      %v1015 = vpop.permute.xlu0 %1014
      %1016 = vrot.lane.b32.xlu0 %v839, 95
      %v1017 = vpop.permute.xlu0 %1016
      %1018 = vrot.lane.b32.xlu0 %v846, 95
      %v1019 = vpop.permute.xlu0 %1018
      %1020 = vrot.lane.b32.xlu0 %v840, 95
      %v1021 = vpop.permute.xlu0 %1020
      %1022 = vrot.lane.b32.xlu0 %v841, 95
      %v1023 = vpop.permute.xlu0 %1022
      %1024 = vrot.lane.b32.xlu0 %v847, 95
      %v1025 = vpop.permute.xlu0 %1024
      %v1026 = vsel %vm604, %v1015, %v1017
      %v1027 = vsel %vm604, %v1017, %v1019
      %v1028 = vsel %vm604, %v1021, %v1023
      %v1029 = vsel %vm604, %v1023, %v1025
      %v1034 = vld [vmem:[%s3] sm:$0xff]
      %v1035 = vld [vmem:[%s3 + $0x8] sm:$0xff]
      %v1036 = vld [vmem:[%s3 + $0x10] sm:$0xff]
      %v1037 = vld [vmem:[%s3 + $0x18] sm:$0xff]
      %v1038 = vld [vmem:[%s4] sm:$0xff]
      %v1039 = vld [vmem:[%s4 + $0x8] sm:$0xff]
      %1041 = vset.pattern.permute.xlu0 0
      %1042 = vperm.xlu0 %1041, %v1038
      %v1043 = vpop.permute.xlu0 %1042
      %1046 = vset.pattern.permute.xlu0 0
      %1047 = vperm.xlu0 %1046, %v1039
      %v1048 = vpop.permute.xlu0 %1047
      %v1051 = vsel %vm629, %v1035, 0
      %v1054 = vsel %vm629, %v1037, 0
      %1056 = vmatpush.msra.mxu0 %v1028
      %1057 = vmatpush.msra.mxu0 %v1026
      %1058 = vmatpush.msra.mxu0 %v948
      %1059 = vmatpush.msra.mxu0 %v946
      %1060 = vmatpush.msra.mxu0 %v924
      %1061 = vmatpush.msra.mxu0 %v922
      %1062 = vmatpush.msra.mxu0 %v1008
      %1063 = vmatpush.msra.mxu0 %v1006
      %1064 = vmatpush.msra.mxu0 %v900
      %1065 = vmatpush.msra.mxu0 %v898
      %1066 = vmatpush.msra.mxu0 %v876
      %1067 = vmatpush.msra.mxu0 %v874
      %1068 = vmatpush.msra.mxu0 %v988
      %1069 = vmatpush.msra.mxu0 %v986
      %1070 = vmatpush.msra.mxu0 %v844
      %1071 = vmatpush.msra.mxu0 %v842
      %1072 = vmatmul.f32.gmra.mxu0 %v1034
      %v1073 = vpop.f32.mrf.mxu0
      %v1074 = vadd.f32 %v1043, %v1073
      %1075 = vmatmul.f32.gmra.mxu0 %v1036
      %v1076 = vpop.f32.mrf.mxu0
      %v1077 = vadd.f32 %v1048, %v1076
      %1078 = vdwg.mxu0
      %1079 = vmatpush.msra.mxu0 0.0
      %1080 = vmatpush.msra.mxu0 0.0
      %1081 = vmatpush.msra.mxu0 0.0
      %1082 = vmatpush.msra.mxu0 0.0
      %1083 = vmatpush.msra.mxu0 0.0
      %1084 = vmatpush.msra.mxu0 0.0
      %1085 = vmatpush.msra.mxu0 0.0
      %1086 = vmatpush.msra.mxu0 0.0
      %1087 = vmatpush.msra.mxu0 0.0
      %1088 = vmatpush.msra.mxu0 0.0
      %1089 = vmatpush.msra.mxu0 0.0
      %1090 = vmatpush.msra.mxu0 0.0
      %1091 = vmatpush.msra.mxu0 0.0
      %1092 = vmatpush.msra.mxu0 0.0
      %1093 = vmatpush.msra.mxu0 %v972
      %1094 = vmatpush.msra.mxu0 %v970
      %1095 = vmatmul.f32.gmra.mxu0 %v1051
      %v1096 = vpop.f32.mrf.mxu0
      %v1097 = vadd.f32 %v1074, %v1096
      %1098 = vmatmul.f32.gmra.mxu0 %v1054
      %v1099 = vpop.f32.mrf.mxu0
      %v1100 = vadd.f32 %v1077, %v1099
      %1101 = vdwg.mxu0
      %1102 = vmatpush.msra.mxu0 %v1029
      %1103 = vmatpush.msra.mxu0 %v1027
      %1104 = vmatpush.msra.mxu0 %v949
      %1105 = vmatpush.msra.mxu0 %v947
      %1106 = vmatpush.msra.mxu0 %v925
      %1107 = vmatpush.msra.mxu0 %v923
      %1108 = vmatpush.msra.mxu0 %v1009
      %1109 = vmatpush.msra.mxu0 %v1007
      %1110 = vmatpush.msra.mxu0 %v901
      %1111 = vmatpush.msra.mxu0 %v899
      %1112 = vmatpush.msra.mxu0 %v877
      %1113 = vmatpush.msra.mxu0 %v875
      %1114 = vmatpush.msra.mxu0 %v989
      %1115 = vmatpush.msra.mxu0 %v987
      %1116 = vmatpush.msra.mxu0 %v845
      %1117 = vmatpush.msra.mxu0 %v843
      %1118 = vmatmul.f32.gmra.mxu0 %v1034
      %v1119 = vpop.f32.mrf.mxu0
      %v1120 = vadd.f32 %v1043, %v1119
      %1121 = vmatmul.f32.gmra.mxu0 %v1036
      %v1122 = vpop.f32.mrf.mxu0
      %v1123 = vadd.f32 %v1048, %v1122
      %1124 = vdwg.mxu0
      %1125 = vmatpush.msra.mxu0 0.0
      %1126 = vmatpush.msra.mxu0 0.0
      %1127 = vmatpush.msra.mxu0 0.0
      %1128 = vmatpush.msra.mxu0 0.0
      %1129 = vmatpush.msra.mxu0 0.0
      %1130 = vmatpush.msra.mxu0 0.0
      %1131 = vmatpush.msra.mxu0 0.0
      %1132 = vmatpush.msra.mxu0 0.0
      %1133 = vmatpush.msra.mxu0 0.0
      %1134 = vmatpush.msra.mxu0 0.0
      %1135 = vmatpush.msra.mxu0 0.0
      %1136 = vmatpush.msra.mxu0 0.0
      %1137 = vmatpush.msra.mxu0 0.0
      %1138 = vmatpush.msra.mxu0 0.0
      %1139 = vmatpush.msra.mxu0 %v973
      %1140 = vmatpush.msra.mxu0 %v971
      %1141 = vmatmul.f32.gmra.mxu0 %v1051
      %v1142 = vpop.f32.mrf.mxu0
      %v1143 = vadd.f32 %v1120, %v1142
      %1144 = vmatmul.f32.gmra.mxu0 %v1054
      %v1145 = vpop.f32.mrf.mxu0
      %v1146 = vadd.f32 %v1123, %v1145
      %1147 = vdwg.mxu0
      %v1148 = vxor.u32 %v1097, 2147483648
      %v1149 = vxor.u32 %v1143, 2147483648
      %v1150 = vxor.u32 %v1100, 2147483648
      %v1151 = vxor.u32 %v1146, 2147483648
      %v1152 = vmul.f32 %v1148, 1.442695
      %v1153 = vpow.pop %v1152
      %v1154 = vmul.f32 %v1149, 1.442695
      %v1155 = vpow.pop %v1154
      %v1156 = vmul.f32 %v1150, 1.442695
      %v1157 = vpow.pop %v1156
      %v1158 = vmul.f32 %v1151, 1.442695
      %v1159 = vpow.pop %v1158
      %v1160 = vadd.f32 %v1153, 1.0
      %v1161 = vadd.f32 %v1155, 1.0
      %v1162 = vadd.f32 %v1157, 1.0
      %v1163 = vadd.f32 %v1159, 1.0
      %v1164 = vrcp.pop %v1160
      %v1165 = vmul.f32 %v1160, %v1164
      %v1166 = vsub.f32 1.0, %v1165
      %v1167 = vmul.f32 %v1164, %v1166
      %v1168 = vadd.f32 %v1164, %v1167
      %vm1169 = vweird.f32 %v1160
      %vm1170 = vweird.f32 %v1164
      %vm1171 = vmor %vm1169, %vm1170
      %v1172 = vsel %vm1171, %v1164, %v1168
      %v1173 = vand.u32 2147483647, %v1160
      %vm1174 = vcmp.eq.f32.partialorder %v1173, 8.507059e+37
      %v1175 = vand.u32 %v1160, 2147483648
      %v1176 = vor.u32 1.1754944e-38, %v1175
      %v1177 = vsel %vm1174, %v1176, %v1172
      %v1178 = vmul.f32 1.0, %v1177
      %v1179 = vrcp.pop %v1161
      %v1180 = vmul.f32 %v1161, %v1179
      %v1181 = vsub.f32 1.0, %v1180
      %v1182 = vmul.f32 %v1179, %v1181
      %v1183 = vadd.f32 %v1179, %v1182
      %vm1184 = vweird.f32 %v1161
      %vm1185 = vweird.f32 %v1179
      %vm1186 = vmor %vm1184, %vm1185
      %v1187 = vsel %vm1186, %v1179, %v1183
      %v1188 = vand.u32 2147483647, %v1161
      %vm1189 = vcmp.eq.f32.partialorder %v1188, 8.507059e+37
      %v1190 = vand.u32 %v1161, 2147483648
      %v1191 = vor.u32 1.1754944e-38, %v1190
      %v1192 = vsel %vm1189, %v1191, %v1187
      %v1193 = vmul.f32 1.0, %v1192
      %v1194 = vrcp.pop %v1162
      %v1195 = vmul.f32 %v1162, %v1194
      %v1196 = vsub.f32 1.0, %v1195
      %v1197 = vmul.f32 %v1194, %v1196
      %v1198 = vadd.f32 %v1194, %v1197
      %vm1199 = vweird.f32 %v1162
      %vm1200 = vweird.f32 %v1194
      %vm1201 = vmor %vm1199, %vm1200
      %v1202 = vsel %vm1201, %v1194, %v1198
      %v1203 = vand.u32 2147483647, %v1162
      %vm1204 = vcmp.eq.f32.partialorder %v1203, 8.507059e+37
      %v1205 = vand.u32 %v1162, 2147483648
      %v1206 = vor.u32 1.1754944e-38, %v1205
      %v1207 = vsel %vm1204, %v1206, %v1202
      %v1208 = vmul.f32 1.0, %v1207
      %v1209 = vrcp.pop %v1163
      %v1210 = vmul.f32 %v1163, %v1209
      %v1211 = vsub.f32 1.0, %v1210
      %v1212 = vmul.f32 %v1209, %v1211
      %v1213 = vadd.f32 %v1209, %v1212
      %vm1214 = vweird.f32 %v1163
      %vm1215 = vweird.f32 %v1209
      %vm1216 = vmor %vm1214, %vm1215
      %v1217 = vsel %vm1216, %v1209, %v1213
      %v1218 = vand.u32 2147483647, %v1163
      %vm1219 = vcmp.eq.f32.partialorder %v1218, 8.507059e+37
      %v1220 = vand.u32 %v1163, 2147483648
      %v1221 = vor.u32 1.1754944e-38, %v1220
      %v1222 = vsel %vm1219, %v1221, %v1217
      %v1223 = vmul.f32 1.0, %v1222
      %v1224 = vmul.f32 %v1097, %v1178
      %v1225 = vmul.f32 %v1143, %v1193
      %v1226 = vmul.f32 %v1100, %v1208
      %v1227 = vmul.f32 %v1146, %v1223
      %v1228 = vld [vmem:[%s8] sm:$0xff]
      %v1229 = vld [vmem:[%s8 + $0x8] sm:$0xff]
      %v1230 = vld [vmem:[%s8 + $0x10] sm:$0xff]
      %v1231 = vld [vmem:[%s8 + $0x18] sm:$0xff]
      %v1232 = vld [vmem:[%s8 + $0x20] sm:$0xff]
      %v1233 = vld [vmem:[%s8 + $0x28] sm:$0xff]
      %v1234 = vld [vmem:[%s8 + $0x30] sm:$0xff]
      %v1235 = vld [vmem:[%s8 + $0x38] sm:$0xff]
      %v1236 = vld [vmem:[%s8 + $0x40] sm:$0xff]
      %v1237 = vld [vmem:[%s8 + $0x48] sm:$0xff]
      %v1238 = vld [vmem:[%s8 + $0x50] sm:$0xff]
      %v1239 = vld [vmem:[%s8 + $0x58] sm:$0xff]
      %v1240 = vld [vmem:[%s8 + $0x60] sm:$0xff]
      %v1241 = vld [vmem:[%s8 + $0x68] sm:$0xff]
      %v1242 = vld [vmem:[%s8 + $0x70] sm:$0xff]
      %v1243 = vld [vmem:[%s8 + $0x78] sm:$0xff]
      %v1244 = vld [vmem:[%s8 + $0x80] sm:$0xff]
      %v1245 = vld [vmem:[%s8 + $0x88] sm:$0xff]
      %v1246 = vld [vmem:[%s8 + $0x90] sm:$0xff]
      %v1247 = vld [vmem:[%s8 + $0x98] sm:$0xff]
      %v1248 = vld [vmem:[%s8 + $0xa0] sm:$0xff]
      %v1249 = vld [vmem:[%s8 + $0xa8] sm:$0xff]
      %v1250 = vld [vmem:[%s8 + $0xb0] sm:$0xff]
      %v1251 = vld [vmem:[%s8 + $0xb8] sm:$0xff]
      %v1252 = vld [vmem:[%s8 + $0xc0] sm:$0xff]
      %v1253 = vld [vmem:[%s8 + $0xc8] sm:$0xff]
      %v1254 = vld [vmem:[%s8 + $0xd0] sm:$0xff]
      %v1255 = vld [vmem:[%s8 + $0xd8] sm:$0xff]
      %v1256 = vld [vmem:[%s8 + $0xe0] sm:$0xff]
      %v1257 = vld [vmem:[%s8 + $0xe8] sm:$0xff]
      %v1258 = vld [vmem:[%s8 + $0xf0] sm:$0xff]
      %v1259 = vld [vmem:[%s8 + $0xf8] sm:$0xff]
      %v1260 = vld [vmem:[%s8 + $0x100] sm:$0xff]
      %v1261 = vld [vmem:[%s8 + $0x108] sm:$0xff]
      %v1262 = vld [vmem:[%s8 + $0x110] sm:$0xff]
      %v1263 = vld [vmem:[%s8 + $0x118] sm:$0xff]
      %v1264 = vld [vmem:[%s8 + $0x120] sm:$0xff]
      %v1265 = vld [vmem:[%s8 + $0x128] sm:$0xff]
      %v1266 = vld [vmem:[%s8 + $0x130] sm:$0xff]
      %v1267 = vld [vmem:[%s8 + $0x138] sm:$0xff]
      %v1268 = vld [vmem:[%s8 + $0x140] sm:$0xff]
      %v1269 = vld [vmem:[%s8 + $0x148] sm:$0xff]
      %v1270 = vld [vmem:[%s8 + $0x150] sm:$0xff]
      %v1271 = vld [vmem:[%s8 + $0x158] sm:$0xff]
      %v1272 = vld [vmem:[%s8 + $0x160] sm:$0xff]
      %v1273 = vld [vmem:[%s8 + $0x168] sm:$0xff]
      %v1274 = vld [vmem:[%s8 + $0x170] sm:$0xff]
      %v1275 = vld [vmem:[%s8 + $0x178] sm:$0xff]
      %v1276 = vld [vmem:[%s8 + $0x180] sm:$0xff]
      %v1277 = vld [vmem:[%s8 + $0x188] sm:$0xff]
      %v1278 = vld [vmem:[%s8 + $0x190] sm:$0xff]
      %v1279 = vld [vmem:[%s8 + $0x198] sm:$0xff]
      %v1280 = vld [vmem:[%s8 + $0x1a0] sm:$0xff]
      %v1281 = vld [vmem:[%s8 + $0x1a8] sm:$0xff]
      %v1282 = vld [vmem:[%s8 + $0x1b0] sm:$0xff]
      %v1283 = vld [vmem:[%s8 + $0x1b8] sm:$0xff]
      %v1284 = vld [vmem:[%s8 + $0x1c0] sm:$0xff]
      %v1285 = vld [vmem:[%s8 + $0x1c8] sm:$0xff]
      %v1286 = vld [vmem:[%s8 + $0x1d0] sm:$0xff]
      %v1287 = vld [vmem:[%s8 + $0x1d8] sm:$0xff]
      %v1288 = vld [vmem:[%s8 + $0x1e0] sm:$0xff]
      %v1289 = vld [vmem:[%s8 + $0x1e8] sm:$0xff]
      %v1290 = vld [vmem:[%s8 + $0x1f0] sm:$0xff]
      %v1291 = vld [vmem:[%s8 + $0x1f8] sm:$0xff]
      %v1292 = vld [vmem:[%s8 + $0x200] sm:$0xff]
      %v1293 = vld [vmem:[%s8 + $0x208] sm:$0xff]
      %v1294 = vld [vmem:[%s8 + $0x210] sm:$0xff]
      %v1295 = vld [vmem:[%s8 + $0x218] sm:$0xff]
      %v1296 = vld [vmem:[%s8 + $0x220] sm:$0xff]
      %v1297 = vld [vmem:[%s8 + $0x228] sm:$0xff]
      %v1298 = vld [vmem:[%s8 + $0x230] sm:$0xff]
      %v1299 = vld [vmem:[%s8 + $0x238] sm:$0xff]
      %v1300 = vld [vmem:[%s8 + $0x240] sm:$0xff]
      %v1301 = vld [vmem:[%s8 + $0x248] sm:$0xff]
      %v1302 = vld [vmem:[%s8 + $0x250] sm:$0xff]
      %v1303 = vld [vmem:[%s8 + $0x258] sm:$0xff]
      %v1304 = vld [vmem:[%s8 + $0x260] sm:$0xff]
      %v1305 = vld [vmem:[%s8 + $0x268] sm:$0xff]
      %v1306 = vld [vmem:[%s8 + $0x270] sm:$0xff]
      %v1307 = vld [vmem:[%s8 + $0x278] sm:$0xff]
      %v1308 = vld [vmem:[%s8 + $0x280] sm:$0xff]
      %v1309 = vld [vmem:[%s8 + $0x288] sm:$0xff]
      %v1310 = vld [vmem:[%s8 + $0x290] sm:$0xff]
      %v1311 = vld [vmem:[%s8 + $0x298] sm:$0xff]
      %v1312 = vld [vmem:[%s8 + $0x2a0] sm:$0xff]
      %v1313 = vld [vmem:[%s8 + $0x2a8] sm:$0xff]
      %v1314 = vld [vmem:[%s8 + $0x2b0] sm:$0xff]
      %v1315 = vld [vmem:[%s8 + $0x2b8] sm:$0xff]
      %v1316 = vld [vmem:[%s8 + $0x2c0] sm:$0xff]
      %v1317 = vld [vmem:[%s8 + $0x2c8] sm:$0xff]
      %v1318 = vld [vmem:[%s8 + $0x2d0] sm:$0xff]
      %v1319 = vld [vmem:[%s8 + $0x2d8] sm:$0xff]
      %v1320 = vld [vmem:[%s8 + $0x2e0] sm:$0xff]
      %v1321 = vld [vmem:[%s8 + $0x2e8] sm:$0xff]
      %v1322 = vld [vmem:[%s8 + $0x2f0] sm:$0xff]
      %v1323 = vld [vmem:[%s8 + $0x2f8] sm:$0xff]
      %v1324 = vld [vmem:[%s8 + $0x300] sm:$0xff]
      %v1325 = vld [vmem:[%s8 + $0x308] sm:$0xff]
      %v1326 = vld [vmem:[%s8 + $0x310] sm:$0xff]
      %v1327 = vld [vmem:[%s8 + $0x318] sm:$0xff]
      %v1328 = vld [vmem:[%s8 + $0x320] sm:$0xff]
      %v1329 = vld [vmem:[%s8 + $0x328] sm:$0xff]
      %v1330 = vld [vmem:[%s8 + $0x330] sm:$0xff]
      %v1331 = vld [vmem:[%s8 + $0x338] sm:$0xff]
      %v1332 = vld [vmem:[%s8 + $0x340] sm:$0xff]
      %v1333 = vld [vmem:[%s8 + $0x348] sm:$0xff]
      %v1334 = vld [vmem:[%s8 + $0x350] sm:$0xff]
      %v1335 = vld [vmem:[%s8 + $0x358] sm:$0xff]
      %v1336 = vld [vmem:[%s8 + $0x360] sm:$0xff]
      %v1337 = vld [vmem:[%s8 + $0x368] sm:$0xff]
      %v1338 = vld [vmem:[%s8 + $0x370] sm:$0xff]
      %v1339 = vld [vmem:[%s8 + $0x378] sm:$0xff]
      %v1340 = vld [vmem:[%s8 + $0x380] sm:$0xff]
      %v1341 = vld [vmem:[%s8 + $0x388] sm:$0xff]
      %v1342 = vld [vmem:[%s8 + $0x390] sm:$0xff]
      %v1343 = vld [vmem:[%s8 + $0x398] sm:$0xff]
      %v1344 = vld [vmem:[%s8 + $0x3a0] sm:$0xff]
      %v1345 = vld [vmem:[%s8 + $0x3a8] sm:$0xff]
      %v1346 = vld [vmem:[%s8 + $0x3b0] sm:$0xff]
      %v1347 = vld [vmem:[%s8 + $0x3b8] sm:$0xff]
      %v1348 = vld [vmem:[%s8 + $0x3c0] sm:$0xff]
      %v1349 = vld [vmem:[%s8 + $0x3c8] sm:$0xff]
      %v1350 = vld [vmem:[%s8 + $0x3d0] sm:$0xff]
      %v1351 = vld [vmem:[%s8 + $0x3d8] sm:$0xff]
      %v1352 = vld [vmem:[%s8 + $0x3e0] sm:$0xff]
      %v1353 = vld [vmem:[%s8 + $0x3e8] sm:$0xff]
      %v1354 = vld [vmem:[%s8 + $0x3f0] sm:$0xff]
      %v1355 = vld [vmem:[%s8 + $0x3f8] sm:$0xff]
      %v1356 = vld [vmem:[%s8 + $0x400] sm:$0xff]
      %v1357 = vld [vmem:[%s8 + $0x408] sm:$0xff]
      %v1358 = vld [vmem:[%s8 + $0x410] sm:$0xff]
      %v1359 = vld [vmem:[%s8 + $0x418] sm:$0xff]
      %v1360 = vld [vmem:[%s8 + $0x420] sm:$0xff]
      %v1361 = vld [vmem:[%s8 + $0x428] sm:$0xff]
      %v1362 = vld [vmem:[%s8 + $0x430] sm:$0xff]
      %v1363 = vld [vmem:[%s8 + $0x438] sm:$0xff]
      %v1364 = vld [vmem:[%s8 + $0x440] sm:$0xff]
      %v1365 = vld [vmem:[%s8 + $0x448] sm:$0xff]
      %v1366 = vld [vmem:[%s8 + $0x450] sm:$0xff]
      %v1367 = vld [vmem:[%s8 + $0x458] sm:$0xff]
      %v1368 = vld [vmem:[%s8 + $0x460] sm:$0xff]
      %v1369 = vld [vmem:[%s8 + $0x468] sm:$0xff]
      %v1370 = vld [vmem:[%s8 + $0x470] sm:$0xff]
      %v1371 = vld [vmem:[%s8 + $0x478] sm:$0xff]
      %v1372 = vld [vmem:[%s8 + $0x480] sm:$0xff]
      %v1373 = vld [vmem:[%s8 + $0x488] sm:$0xff]
      %v1374 = vld [vmem:[%s8 + $0x490] sm:$0xff]
      %v1375 = vld [vmem:[%s8 + $0x498] sm:$0xff]
      %v1376 = vld [vmem:[%s8 + $0x4a0] sm:$0xff]
      %v1377 = vld [vmem:[%s8 + $0x4a8] sm:$0xff]
      %v1378 = vld [vmem:[%s8 + $0x4b0] sm:$0xff]
      %v1379 = vld [vmem:[%s8 + $0x4b8] sm:$0xff]
      %v1380 = vld [vmem:[%s8 + $0x4c0] sm:$0xff]
      %v1381 = vld [vmem:[%s8 + $0x4c8] sm:$0xff]
      %v1382 = vld [vmem:[%s8 + $0x4d0] sm:$0xff]
      %v1383 = vld [vmem:[%s8 + $0x4d8] sm:$0xff]
      %v1384 = vld [vmem:[%s8 + $0x4e0] sm:$0xff]
      %v1385 = vld [vmem:[%s8 + $0x4e8] sm:$0xff]
      %v1386 = vld [vmem:[%s8 + $0x4f0] sm:$0xff]
      %v1387 = vld [vmem:[%s8 + $0x4f8] sm:$0xff]
      %v1388 = vld [vmem:[%s8 + $0x500] sm:$0xff]
      %v1389 = vld [vmem:[%s8 + $0x508] sm:$0xff]
      %v1390 = vld [vmem:[%s8 + $0x510] sm:$0xff]
      %v1391 = vld [vmem:[%s8 + $0x518] sm:$0xff]
      %v1392 = vld [vmem:[%s8 + $0x520] sm:$0xff]
      %v1393 = vld [vmem:[%s8 + $0x528] sm:$0xff]
      %v1394 = vld [vmem:[%s8 + $0x530] sm:$0xff]
      %v1395 = vld [vmem:[%s8 + $0x538] sm:$0xff]
      %v1396 = vld [vmem:[%s8 + $0x540] sm:$0xff]
      %v1397 = vld [vmem:[%s8 + $0x548] sm:$0xff]
      %v1398 = vld [vmem:[%s8 + $0x550] sm:$0xff]
      %v1399 = vld [vmem:[%s8 + $0x558] sm:$0xff]
      %v1400 = vld [vmem:[%s8 + $0x560] sm:$0xff]
      %v1401 = vld [vmem:[%s8 + $0x568] sm:$0xff]
      %v1402 = vld [vmem:[%s8 + $0x570] sm:$0xff]
      %v1403 = vld [vmem:[%s8 + $0x578] sm:$0xff]
      %v1404 = vld [vmem:[%s8 + $0x580] sm:$0xff]
      %v1405 = vld [vmem:[%s8 + $0x588] sm:$0xff]
      %v1406 = vld [vmem:[%s8 + $0x590] sm:$0xff]
      %v1407 = vld [vmem:[%s8 + $0x598] sm:$0xff]
      %v1408 = vld [vmem:[%s8 + $0x5a0] sm:$0xff]
      %v1409 = vld [vmem:[%s8 + $0x5a8] sm:$0xff]
      %v1410 = vld [vmem:[%s8 + $0x5b0] sm:$0xff]
      %v1411 = vld [vmem:[%s8 + $0x5b8] sm:$0xff]
      %v1412 = vld [vmem:[%s8 + $0x5c0] sm:$0xff]
      %v1413 = vld [vmem:[%s8 + $0x5c8] sm:$0xff]
      %v1414 = vld [vmem:[%s8 + $0x5d0] sm:$0xff]
      %v1415 = vld [vmem:[%s8 + $0x5d8] sm:$0xff]
      %v1416 = vld [vmem:[%s8 + $0x5e0] sm:$0xff]
      %v1417 = vld [vmem:[%s8 + $0x5e8] sm:$0xff]
      %v1418 = vld [vmem:[%s8 + $0x5f0] sm:$0xff]
      %v1419 = vld [vmem:[%s8 + $0x5f8] sm:$0xff]
      %v1420 = vld [vmem:[%s8 + $0x600] sm:$0xff]
      %v1421 = vld [vmem:[%s8 + $0x608] sm:$0xff]
      %v1422 = vld [vmem:[%s8 + $0x610] sm:$0xff]
      %v1423 = vld [vmem:[%s8 + $0x618] sm:$0xff]
      %v1424 = vld [vmem:[%s8 + $0x620] sm:$0xff]
      %v1425 = vld [vmem:[%s8 + $0x628] sm:$0xff]
      %v1426 = vld [vmem:[%s8 + $0x630] sm:$0xff]
      %v1427 = vld [vmem:[%s8 + $0x638] sm:$0xff]
      %v1428 = vld [vmem:[%s8 + $0x640] sm:$0xff]
      %v1429 = vld [vmem:[%s8 + $0x648] sm:$0xff]
      %v1430 = vld [vmem:[%s8 + $0x650] sm:$0xff]
      %v1431 = vld [vmem:[%s8 + $0x658] sm:$0xff]
      %v1432 = vld [vmem:[%s8 + $0x660] sm:$0xff]
      %v1433 = vld [vmem:[%s8 + $0x668] sm:$0xff]
      %v1434 = vld [vmem:[%s8 + $0x670] sm:$0xff]
      %v1435 = vld [vmem:[%s8 + $0x678] sm:$0xff]
      %v1436 = vld [vmem:[%s8 + $0x680] sm:$0xff]
      %v1437 = vld [vmem:[%s8 + $0x688] sm:$0xff]
      %v1438 = vld [vmem:[%s8 + $0x690] sm:$0xff]
      %v1439 = vld [vmem:[%s8 + $0x698] sm:$0xff]
      %v1440 = vld [vmem:[%s8 + $0x6a0] sm:$0xff]
      %v1441 = vld [vmem:[%s8 + $0x6a8] sm:$0xff]
      %v1442 = vld [vmem:[%s8 + $0x6b0] sm:$0xff]
      %v1443 = vld [vmem:[%s8 + $0x6b8] sm:$0xff]
      %v1444 = vld [vmem:[%s8 + $0x6c0] sm:$0xff]
      %v1445 = vld [vmem:[%s8 + $0x6c8] sm:$0xff]
      %v1446 = vld [vmem:[%s8 + $0x6d0] sm:$0xff]
      %v1447 = vld [vmem:[%s8 + $0x6d8] sm:$0xff]
      %v1448 = vld [vmem:[%s8 + $0x6e0] sm:$0xff]
      %v1449 = vld [vmem:[%s8 + $0x6e8] sm:$0xff]
      %v1450 = vld [vmem:[%s8 + $0x6f0] sm:$0xff]
      %v1451 = vld [vmem:[%s8 + $0x6f8] sm:$0xff]
      %v1452 = vld [vmem:[%s8 + $0x700] sm:$0xff]
      %v1453 = vld [vmem:[%s8 + $0x708] sm:$0xff]
      %v1454 = vld [vmem:[%s8 + $0x710] sm:$0xff]
      %v1455 = vld [vmem:[%s8 + $0x718] sm:$0xff]
      %v1456 = vld [vmem:[%s8 + $0x720] sm:$0xff]
      %v1457 = vld [vmem:[%s8 + $0x728] sm:$0xff]
      %v1458 = vld [vmem:[%s8 + $0x730] sm:$0xff]
      %v1459 = vld [vmem:[%s8 + $0x738] sm:$0xff]
      %v1460 = vld [vmem:[%s8 + $0x740] sm:$0xff]
      %v1461 = vld [vmem:[%s8 + $0x748] sm:$0xff]
      %v1462 = vld [vmem:[%s8 + $0x750] sm:$0xff]
      %v1463 = vld [vmem:[%s8 + $0x758] sm:$0xff]
      %v1464 = vld [vmem:[%s8 + $0x760] sm:$0xff]
      %v1465 = vld [vmem:[%s8 + $0x768] sm:$0xff]
      %v1466 = vld [vmem:[%s8 + $0x770] sm:$0xff]
      %v1467 = vld [vmem:[%s8 + $0x778] sm:$0xff]
      %v1468 = vld [vmem:[%s8 + $0x780] sm:$0xff]
      %v1469 = vld [vmem:[%s8 + $0x788] sm:$0xff]
      %v1470 = vld [vmem:[%s8 + $0x790] sm:$0xff]
      %v1471 = vld [vmem:[%s8 + $0x798] sm:$0xff]
      %v1472 = vld [vmem:[%s8 + $0x7a0] sm:$0xff]
      %v1473 = vld [vmem:[%s8 + $0x7a8] sm:$0xff]
      %v1474 = vld [vmem:[%s8 + $0x7b0] sm:$0xff]
      %v1475 = vld [vmem:[%s8 + $0x7b8] sm:$0xff]
      %v1476 = vld [vmem:[%s8 + $0x7c0] sm:$0xff]
      %v1477 = vld [vmem:[%s8 + $0x7c8] sm:$0xff]
      %v1478 = vld [vmem:[%s8 + $0x7d0] sm:$0xff]
      %v1479 = vld [vmem:[%s8 + $0x7d8] sm:$0xff]
      %v1480 = vld [vmem:[%s8 + $0x7e0] sm:$0xff]
      %v1481 = vld [vmem:[%s8 + $0x7e8] sm:$0xff]
      %v1482 = vld [vmem:[%s8 + $0x7f0] sm:$0xff]
      %v1483 = vld [vmem:[%s8 + $0x7f8] sm:$0xff]
      %1484 = vmatpush.msra.mxu0 %v1348
      %1485 = vmatpush.msra.mxu0 %v1340
      %1486 = vmatpush.msra.mxu0 %v1332
      %1487 = vmatpush.msra.mxu0 %v1324
      %1488 = vmatpush.msra.mxu0 %v1316
      %1489 = vmatpush.msra.mxu0 %v1308
      %1490 = vmatpush.msra.mxu0 %v1300
      %1491 = vmatpush.msra.mxu0 %v1292
      %1492 = vmatpush.msra.mxu0 %v1284
      %1493 = vmatpush.msra.mxu0 %v1276
      %1494 = vmatpush.msra.mxu0 %v1268
      %1495 = vmatpush.msra.mxu0 %v1260
      %1496 = vmatpush.msra.mxu0 %v1252
      %1497 = vmatpush.msra.mxu0 %v1244
      %1498 = vmatpush.msra.mxu0 %v1236
      %1499 = vmatpush.msra.mxu0 %v1228
      %1500 = vmatmul.f32.gmra.mxu0 %v1224
      %v1501 = vpop.f32.mrf.mxu0
      %v1502 = vadd.f32 0.0, %v1501
      %1503 = vmatmul.f32.gmra.mxu0 %v1226
      %v1504 = vpop.f32.mrf.mxu0
      %v1505 = vadd.f32 0.0, %v1504
      %1506 = vdwg.mxu0
      %1507 = vmatpush.msra.mxu0 %v1476
      %1508 = vmatpush.msra.mxu0 %v1468
      %1509 = vmatpush.msra.mxu0 %v1460
      %1510 = vmatpush.msra.mxu0 %v1452
      %1511 = vmatpush.msra.mxu0 %v1444
      %1512 = vmatpush.msra.mxu0 %v1436
      %1513 = vmatpush.msra.mxu0 %v1428
      %1514 = vmatpush.msra.mxu0 %v1420
      %1515 = vmatpush.msra.mxu0 %v1412
      %1516 = vmatpush.msra.mxu0 %v1404
      %1517 = vmatpush.msra.mxu0 %v1396
      %1518 = vmatpush.msra.mxu0 %v1388
      %1519 = vmatpush.msra.mxu0 %v1380
      %1520 = vmatpush.msra.mxu0 %v1372
      %1521 = vmatpush.msra.mxu0 %v1364
      %1522 = vmatpush.msra.mxu0 %v1356
      %1523 = vmatmul.f32.gmra.mxu0 %v1225
      %v1524 = vpop.f32.mrf.mxu0
      %v1525 = vadd.f32 %v1502, %v1524
      %1526 = vmatmul.f32.gmra.mxu0 %v1227
      %v1527 = vpop.f32.mrf.mxu0
      %v1528 = vadd.f32 %v1505, %v1527
      %1529 = vdwg.mxu0
      %1530 = vmatpush.msra.mxu0 %v1349
      %1531 = vmatpush.msra.mxu0 %v1341
      %1532 = vmatpush.msra.mxu0 %v1333
      %1533 = vmatpush.msra.mxu0 %v1325
      %1534 = vmatpush.msra.mxu0 %v1317
      %1535 = vmatpush.msra.mxu0 %v1309
      %1536 = vmatpush.msra.mxu0 %v1301
      %1537 = vmatpush.msra.mxu0 %v1293
      %1538 = vmatpush.msra.mxu0 %v1285
      %1539 = vmatpush.msra.mxu0 %v1277
      %1540 = vmatpush.msra.mxu0 %v1269
      %1541 = vmatpush.msra.mxu0 %v1261
      %1542 = vmatpush.msra.mxu0 %v1253
      %1543 = vmatpush.msra.mxu0 %v1245
      %1544 = vmatpush.msra.mxu0 %v1237
      %1545 = vmatpush.msra.mxu0 %v1229
      %1546 = vmatmul.f32.gmra.mxu0 %v1224
      %v1547 = vpop.f32.mrf.mxu0
      %v1548 = vadd.f32 0.0, %v1547
      %1549 = vmatmul.f32.gmra.mxu0 %v1226
      %v1550 = vpop.f32.mrf.mxu0
      %v1551 = vadd.f32 0.0, %v1550
      %1552 = vdwg.mxu0
      %1553 = vmatpush.msra.mxu0 %v1477
      %1554 = vmatpush.msra.mxu0 %v1469
      %1555 = vmatpush.msra.mxu0 %v1461
      %1556 = vmatpush.msra.mxu0 %v1453
      %1557 = vmatpush.msra.mxu0 %v1445
      %1558 = vmatpush.msra.mxu0 %v1437
      %1559 = vmatpush.msra.mxu0 %v1429
      %1560 = vmatpush.msra.mxu0 %v1421
      %1561 = vmatpush.msra.mxu0 %v1413
      %1562 = vmatpush.msra.mxu0 %v1405
      %1563 = vmatpush.msra.mxu0 %v1397
      %1564 = vmatpush.msra.mxu0 %v1389
      %1565 = vmatpush.msra.mxu0 %v1381
      %1566 = vmatpush.msra.mxu0 %v1373
      %1567 = vmatpush.msra.mxu0 %v1365
      %1568 = vmatpush.msra.mxu0 %v1357
      %1569 = vmatmul.f32.gmra.mxu0 %v1225
      %v1570 = vpop.f32.mrf.mxu0
      %v1571 = vadd.f32 %v1548, %v1570
      %1572 = vmatmul.f32.gmra.mxu0 %v1227
      %v1573 = vpop.f32.mrf.mxu0
      %v1574 = vadd.f32 %v1551, %v1573
      %1575 = vdwg.mxu0
      %1576 = vmatpush.msra.mxu0 %v1350
      %1577 = vmatpush.msra.mxu0 %v1342
      %1578 = vmatpush.msra.mxu0 %v1334
      %1579 = vmatpush.msra.mxu0 %v1326
      %1580 = vmatpush.msra.mxu0 %v1318
      %1581 = vmatpush.msra.mxu0 %v1310
      %1582 = vmatpush.msra.mxu0 %v1302
      %1583 = vmatpush.msra.mxu0 %v1294
      %1584 = vmatpush.msra.mxu0 %v1286
      %1585 = vmatpush.msra.mxu0 %v1278
      %1586 = vmatpush.msra.mxu0 %v1270
      %1587 = vmatpush.msra.mxu0 %v1262
      %1588 = vmatpush.msra.mxu0 %v1254
      %1589 = vmatpush.msra.mxu0 %v1246
      %1590 = vmatpush.msra.mxu0 %v1238
      %1591 = vmatpush.msra.mxu0 %v1230
      %1592 = vmatmul.f32.gmra.mxu0 %v1224
      %v1593 = vpop.f32.mrf.mxu0
      %v1594 = vadd.f32 0.0, %v1593
      %1595 = vmatmul.f32.gmra.mxu0 %v1226
      %v1596 = vpop.f32.mrf.mxu0
      %v1597 = vadd.f32 0.0, %v1596
      %1598 = vdwg.mxu0
      %1599 = vmatpush.msra.mxu0 %v1478
      %1600 = vmatpush.msra.mxu0 %v1470
      %1601 = vmatpush.msra.mxu0 %v1462
      %1602 = vmatpush.msra.mxu0 %v1454
      %1603 = vmatpush.msra.mxu0 %v1446
      %1604 = vmatpush.msra.mxu0 %v1438
      %1605 = vmatpush.msra.mxu0 %v1430
      %1606 = vmatpush.msra.mxu0 %v1422
      %1607 = vmatpush.msra.mxu0 %v1414
      %1608 = vmatpush.msra.mxu0 %v1406
      %1609 = vmatpush.msra.mxu0 %v1398
      %1610 = vmatpush.msra.mxu0 %v1390
      %1611 = vmatpush.msra.mxu0 %v1382
      %1612 = vmatpush.msra.mxu0 %v1374
      %1613 = vmatpush.msra.mxu0 %v1366
      %1614 = vmatpush.msra.mxu0 %v1358
      %1615 = vmatmul.f32.gmra.mxu0 %v1225
      %v1616 = vpop.f32.mrf.mxu0
      %v1617 = vadd.f32 %v1594, %v1616
      %1618 = vmatmul.f32.gmra.mxu0 %v1227
      %v1619 = vpop.f32.mrf.mxu0
      %v1620 = vadd.f32 %v1597, %v1619
      %1621 = vdwg.mxu0
      %1622 = vmatpush.msra.mxu0 %v1351
      %1623 = vmatpush.msra.mxu0 %v1343
      %1624 = vmatpush.msra.mxu0 %v1335
      %1625 = vmatpush.msra.mxu0 %v1327
      %1626 = vmatpush.msra.mxu0 %v1319
      %1627 = vmatpush.msra.mxu0 %v1311
      %1628 = vmatpush.msra.mxu0 %v1303
      %1629 = vmatpush.msra.mxu0 %v1295
      %1630 = vmatpush.msra.mxu0 %v1287
      %1631 = vmatpush.msra.mxu0 %v1279
      %1632 = vmatpush.msra.mxu0 %v1271
      %1633 = vmatpush.msra.mxu0 %v1263
      %1634 = vmatpush.msra.mxu0 %v1255
      %1635 = vmatpush.msra.mxu0 %v1247
      %1636 = vmatpush.msra.mxu0 %v1239
      %1637 = vmatpush.msra.mxu0 %v1231
      %1638 = vmatmul.f32.gmra.mxu0 %v1224
      %v1639 = vpop.f32.mrf.mxu0
      %v1640 = vadd.f32 0.0, %v1639
      %1641 = vmatmul.f32.gmra.mxu0 %v1226
      %v1642 = vpop.f32.mrf.mxu0
      %v1643 = vadd.f32 0.0, %v1642
      %1644 = vdwg.mxu0
      %1645 = vmatpush.msra.mxu0 %v1479
      %1646 = vmatpush.msra.mxu0 %v1471
      %1647 = vmatpush.msra.mxu0 %v1463
      %1648 = vmatpush.msra.mxu0 %v1455
      %1649 = vmatpush.msra.mxu0 %v1447
      %1650 = vmatpush.msra.mxu0 %v1439
      %1651 = vmatpush.msra.mxu0 %v1431
      %1652 = vmatpush.msra.mxu0 %v1423
      %1653 = vmatpush.msra.mxu0 %v1415
      %1654 = vmatpush.msra.mxu0 %v1407
      %1655 = vmatpush.msra.mxu0 %v1399
      %1656 = vmatpush.msra.mxu0 %v1391
      %1657 = vmatpush.msra.mxu0 %v1383
      %1658 = vmatpush.msra.mxu0 %v1375
      %1659 = vmatpush.msra.mxu0 %v1367
      %1660 = vmatpush.msra.mxu0 %v1359
      %1661 = vmatmul.f32.gmra.mxu0 %v1225
      %v1662 = vpop.f32.mrf.mxu0
      %v1663 = vadd.f32 %v1640, %v1662
      %1664 = vmatmul.f32.gmra.mxu0 %v1227
      %v1665 = vpop.f32.mrf.mxu0
      %v1666 = vadd.f32 %v1643, %v1665
      %1667 = vdwg.mxu0
      %1668 = vmatpush.msra.mxu0 %v1352
      %1669 = vmatpush.msra.mxu0 %v1344
      %1670 = vmatpush.msra.mxu0 %v1336
      %1671 = vmatpush.msra.mxu0 %v1328
      %1672 = vmatpush.msra.mxu0 %v1320
      %1673 = vmatpush.msra.mxu0 %v1312
      %1674 = vmatpush.msra.mxu0 %v1304
      %1675 = vmatpush.msra.mxu0 %v1296
      %1676 = vmatpush.msra.mxu0 %v1288
      %1677 = vmatpush.msra.mxu0 %v1280
      %1678 = vmatpush.msra.mxu0 %v1272
      %1679 = vmatpush.msra.mxu0 %v1264
      %1680 = vmatpush.msra.mxu0 %v1256
      %1681 = vmatpush.msra.mxu0 %v1248
      %1682 = vmatpush.msra.mxu0 %v1240
      %1683 = vmatpush.msra.mxu0 %v1232
      %1684 = vmatmul.f32.gmra.mxu0 %v1224
      %v1685 = vpop.f32.mrf.mxu0
      %v1686 = vadd.f32 0.0, %v1685
      %1687 = vmatmul.f32.gmra.mxu0 %v1226
      %v1688 = vpop.f32.mrf.mxu0
      %v1689 = vadd.f32 0.0, %v1688
      %1690 = vdwg.mxu0
      %1691 = vmatpush.msra.mxu0 %v1480
      %1692 = vmatpush.msra.mxu0 %v1472
      %1693 = vmatpush.msra.mxu0 %v1464
      %1694 = vmatpush.msra.mxu0 %v1456
      %1695 = vmatpush.msra.mxu0 %v1448
      %1696 = vmatpush.msra.mxu0 %v1440
      %1697 = vmatpush.msra.mxu0 %v1432
      %1698 = vmatpush.msra.mxu0 %v1424
      %1699 = vmatpush.msra.mxu0 %v1416
      %1700 = vmatpush.msra.mxu0 %v1408
      %1701 = vmatpush.msra.mxu0 %v1400
      %1702 = vmatpush.msra.mxu0 %v1392
      %1703 = vmatpush.msra.mxu0 %v1384
      %1704 = vmatpush.msra.mxu0 %v1376
      %1705 = vmatpush.msra.mxu0 %v1368
      %1706 = vmatpush.msra.mxu0 %v1360
      %1707 = vmatmul.f32.gmra.mxu0 %v1225
      %v1708 = vpop.f32.mrf.mxu0
      %v1709 = vadd.f32 %v1686, %v1708
      %1710 = vmatmul.f32.gmra.mxu0 %v1227
      %v1711 = vpop.f32.mrf.mxu0
      %v1712 = vadd.f32 %v1689, %v1711
      %1713 = vdwg.mxu0
      %1714 = vmatpush.msra.mxu0 %v1353
      %1715 = vmatpush.msra.mxu0 %v1345
      %1716 = vmatpush.msra.mxu0 %v1337
      %1717 = vmatpush.msra.mxu0 %v1329
      %1718 = vmatpush.msra.mxu0 %v1321
      %1719 = vmatpush.msra.mxu0 %v1313
      %1720 = vmatpush.msra.mxu0 %v1305
      %1721 = vmatpush.msra.mxu0 %v1297
      %1722 = vmatpush.msra.mxu0 %v1289
      %1723 = vmatpush.msra.mxu0 %v1281
      %1724 = vmatpush.msra.mxu0 %v1273
      %1725 = vmatpush.msra.mxu0 %v1265
      %1726 = vmatpush.msra.mxu0 %v1257
      %1727 = vmatpush.msra.mxu0 %v1249
      %1728 = vmatpush.msra.mxu0 %v1241
      %1729 = vmatpush.msra.mxu0 %v1233
      %1730 = vmatmul.f32.gmra.mxu0 %v1224
      %v1731 = vpop.f32.mrf.mxu0
      %v1732 = vadd.f32 0.0, %v1731
      %1733 = vmatmul.f32.gmra.mxu0 %v1226
      %v1734 = vpop.f32.mrf.mxu0
      %v1735 = vadd.f32 0.0, %v1734
      %1736 = vdwg.mxu0
      %1737 = vmatpush.msra.mxu0 %v1481
      %1738 = vmatpush.msra.mxu0 %v1473
      %1739 = vmatpush.msra.mxu0 %v1465
      %1740 = vmatpush.msra.mxu0 %v1457
      %1741 = vmatpush.msra.mxu0 %v1449
      %1742 = vmatpush.msra.mxu0 %v1441
      %1743 = vmatpush.msra.mxu0 %v1433
      %1744 = vmatpush.msra.mxu0 %v1425
      %1745 = vmatpush.msra.mxu0 %v1417
      %1746 = vmatpush.msra.mxu0 %v1409
      %1747 = vmatpush.msra.mxu0 %v1401
      %1748 = vmatpush.msra.mxu0 %v1393
      %1749 = vmatpush.msra.mxu0 %v1385
      %1750 = vmatpush.msra.mxu0 %v1377
      %1751 = vmatpush.msra.mxu0 %v1369
      %1752 = vmatpush.msra.mxu0 %v1361
      %1753 = vmatmul.f32.gmra.mxu0 %v1225
      %v1754 = vpop.f32.mrf.mxu0
      %v1755 = vadd.f32 %v1732, %v1754
      %1756 = vmatmul.f32.gmra.mxu0 %v1227
      %v1757 = vpop.f32.mrf.mxu0
      %v1758 = vadd.f32 %v1735, %v1757
      %1759 = vdwg.mxu0
      %1760 = vmatpush.msra.mxu0 %v1354
      %1761 = vmatpush.msra.mxu0 %v1346
      %1762 = vmatpush.msra.mxu0 %v1338
      %1763 = vmatpush.msra.mxu0 %v1330
      %1764 = vmatpush.msra.mxu0 %v1322
      %1765 = vmatpush.msra.mxu0 %v1314
      %1766 = vmatpush.msra.mxu0 %v1306
      %1767 = vmatpush.msra.mxu0 %v1298
      %1768 = vmatpush.msra.mxu0 %v1290
      %1769 = vmatpush.msra.mxu0 %v1282
      %1770 = vmatpush.msra.mxu0 %v1274
      %1771 = vmatpush.msra.mxu0 %v1266
      %1772 = vmatpush.msra.mxu0 %v1258
      %1773 = vmatpush.msra.mxu0 %v1250
      %1774 = vmatpush.msra.mxu0 %v1242
      %1775 = vmatpush.msra.mxu0 %v1234
      %1776 = vmatmul.f32.gmra.mxu0 %v1224
      %v1777 = vpop.f32.mrf.mxu0
      %v1778 = vadd.f32 0.0, %v1777
      %1779 = vmatmul.f32.gmra.mxu0 %v1226
      %v1780 = vpop.f32.mrf.mxu0
      %v1781 = vadd.f32 0.0, %v1780
      %1782 = vdwg.mxu0
      %1783 = vmatpush.msra.mxu0 %v1482
      %1784 = vmatpush.msra.mxu0 %v1474
      %1785 = vmatpush.msra.mxu0 %v1466
      %1786 = vmatpush.msra.mxu0 %v1458
      %1787 = vmatpush.msra.mxu0 %v1450
      %1788 = vmatpush.msra.mxu0 %v1442
      %1789 = vmatpush.msra.mxu0 %v1434
      %1790 = vmatpush.msra.mxu0 %v1426
      %1791 = vmatpush.msra.mxu0 %v1418
      %1792 = vmatpush.msra.mxu0 %v1410
      %1793 = vmatpush.msra.mxu0 %v1402
      %1794 = vmatpush.msra.mxu0 %v1394
      %1795 = vmatpush.msra.mxu0 %v1386
      %1796 = vmatpush.msra.mxu0 %v1378
      %1797 = vmatpush.msra.mxu0 %v1370
      %1798 = vmatpush.msra.mxu0 %v1362
      %1799 = vmatmul.f32.gmra.mxu0 %v1225
      %v1800 = vpop.f32.mrf.mxu0
      %v1801 = vadd.f32 %v1778, %v1800
      %1802 = vmatmul.f32.gmra.mxu0 %v1227
      %v1803 = vpop.f32.mrf.mxu0
      %v1804 = vadd.f32 %v1781, %v1803
      %1805 = vdwg.mxu0
      %1806 = vmatpush.msra.mxu0 %v1355
      %1807 = vmatpush.msra.mxu0 %v1347
      %1808 = vmatpush.msra.mxu0 %v1339
      %1809 = vmatpush.msra.mxu0 %v1331
      %1810 = vmatpush.msra.mxu0 %v1323
      %1811 = vmatpush.msra.mxu0 %v1315
      %1812 = vmatpush.msra.mxu0 %v1307
      %1813 = vmatpush.msra.mxu0 %v1299
      %1814 = vmatpush.msra.mxu0 %v1291
      %1815 = vmatpush.msra.mxu0 %v1283
      %1816 = vmatpush.msra.mxu0 %v1275
      %1817 = vmatpush.msra.mxu0 %v1267
      %1818 = vmatpush.msra.mxu0 %v1259
      %1819 = vmatpush.msra.mxu0 %v1251
      %1820 = vmatpush.msra.mxu0 %v1243
      %1821 = vmatpush.msra.mxu0 %v1235
      %1822 = vmatmul.f32.gmra.mxu0 %v1224
      %v1823 = vpop.f32.mrf.mxu0
      %v1824 = vadd.f32 0.0, %v1823
      %1825 = vmatmul.f32.gmra.mxu0 %v1226
      %v1826 = vpop.f32.mrf.mxu0
      %v1827 = vadd.f32 0.0, %v1826
      %1828 = vdwg.mxu0
      %1829 = vmatpush.msra.mxu0 %v1483
      %1830 = vmatpush.msra.mxu0 %v1475
      %1831 = vmatpush.msra.mxu0 %v1467
      %1832 = vmatpush.msra.mxu0 %v1459
      %1833 = vmatpush.msra.mxu0 %v1451
      %1834 = vmatpush.msra.mxu0 %v1443
      %1835 = vmatpush.msra.mxu0 %v1435
      %1836 = vmatpush.msra.mxu0 %v1427
      %1837 = vmatpush.msra.mxu0 %v1419
      %1838 = vmatpush.msra.mxu0 %v1411
      %1839 = vmatpush.msra.mxu0 %v1403
      %1840 = vmatpush.msra.mxu0 %v1395
      %1841 = vmatpush.msra.mxu0 %v1387
      %1842 = vmatpush.msra.mxu0 %v1379
      %1843 = vmatpush.msra.mxu0 %v1371
      %1844 = vmatpush.msra.mxu0 %v1363
      %1845 = vmatmul.f32.gmra.mxu0 %v1225
      %v1846 = vpop.f32.mrf.mxu0
      %v1847 = vadd.f32 %v1824, %v1846
      %1848 = vmatmul.f32.gmra.mxu0 %v1227
      %v1849 = vpop.f32.mrf.mxu0
      %v1850 = vadd.f32 %v1827, %v1849
      %1851 = vdwg.mxu0
      %vm1852 = vcmask 269312
      %1853 = vst.msk [vmem:[#allocation3] sm:$0xff] %vm1852, 0.0
      %1854 = vst.msk [vmem:[#allocation3 + $0x48] sm:$0xff] %vm1852, 0.0
      %vm1855 = vcmask 539912
      %1856 = vst.msk [vmem:[#allocation3 + $0x40] sm:$0xff] %vm1855, 0.0
      %1857 = vst.msk [vmem:[#allocation3 + $0x88] sm:$0xff] %vm1855, 0.0
      %1874 = vrot.lane.b32.xlu0 %v1525, 33
      %v1875 = vpop.permute.xlu0 %1874
      %1876 = vrot.lane.b32.xlu0 %v1571, 33
      %v1877 = vpop.permute.xlu0 %1876
      %1878 = vrot.lane.b32.xlu0 %v1617, 33
      %v1879 = vpop.permute.xlu0 %1878
      %1880 = vrot.lane.b32.xlu0 %v1663, 33
      %v1881 = vpop.permute.xlu0 %1880
      %1882 = vrot.lane.b32.xlu0 %v1709, 33
      %v1883 = vpop.permute.xlu0 %1882
      %1884 = vrot.lane.b32.xlu0 %v1755, 33
      %v1885 = vpop.permute.xlu0 %1884
      %1886 = vrot.lane.b32.xlu0 %v1801, 33
      %v1887 = vpop.permute.xlu0 %1886
      %1888 = vrot.lane.b32.xlu0 %v1847, 33
      %v1889 = vpop.permute.xlu0 %1888
      %1890 = vrot.lane.b32.xlu0 %v1528, 33
      %v1891 = vpop.permute.xlu0 %1890
      %1892 = vrot.lane.b32.xlu0 %v1574, 33
      %v1893 = vpop.permute.xlu0 %1892
      %1894 = vrot.lane.b32.xlu0 %v1620, 33
      %v1895 = vpop.permute.xlu0 %1894
      %1896 = vrot.lane.b32.xlu0 %v1666, 33
      %v1897 = vpop.permute.xlu0 %1896
      %1898 = vrot.lane.b32.xlu0 %v1712, 33
      %v1899 = vpop.permute.xlu0 %1898
      %1900 = vrot.lane.b32.xlu0 %v1758, 33
      %v1901 = vpop.permute.xlu0 %1900
      %1902 = vrot.lane.b32.xlu0 %v1804, 33
      %v1903 = vpop.permute.xlu0 %1902
      %1904 = vrot.lane.b32.xlu0 %v1850, 33
      %v1905 = vpop.permute.xlu0 %1904
      %v1906 = vsel %vm1852, %v1875, %v1877
      %v1907 = vsel %vm1852, %v1877, %v1879
      %v1908 = vsel %vm1852, %v1879, %v1881
      %v1909 = vsel %vm1852, %v1881, %v1883
      %v1910 = vsel %vm1852, %v1883, %v1885
      %v1911 = vsel %vm1852, %v1885, %v1887
      %v1912 = vsel %vm1852, %v1887, %v1889
      %v1913 = vsel %vm1852, %v1891, %v1893
      %v1914 = vsel %vm1852, %v1893, %v1895
      %v1915 = vsel %vm1852, %v1895, %v1897
      %v1916 = vsel %vm1852, %v1897, %v1899
      %v1917 = vsel %vm1852, %v1899, %v1901
      %v1918 = vsel %vm1852, %v1901, %v1903
      %v1919 = vsel %vm1852, %v1903, %v1905
      %vm1938 = vcmask 1047816
      %1939 = vst.msk [vmem:[#allocation3] sm:$0xff] %vm1938, %v1875
      %1940 = vst [vmem:[#allocation3 + $0x8] sm:$0xff] %v1906
      %1941 = vst [vmem:[#allocation3 + $0x10] sm:$0xff] %v1907
      %1942 = vst [vmem:[#allocation3 + $0x18] sm:$0xff] %v1908
      %1943 = vst [vmem:[#allocation3 + $0x20] sm:$0xff] %v1909
      %1944 = vst [vmem:[#allocation3 + $0x28] sm:$0xff] %v1910
      %1945 = vst [vmem:[#allocation3 + $0x30] sm:$0xff] %v1911
      %1946 = vst [vmem:[#allocation3 + $0x38] sm:$0xff] %v1912
      %1947 = vst.msk [vmem:[#allocation3 + $0x40] sm:$0xff] %vm1852, %v1889
      %1948 = vst.msk [vmem:[#allocation3 + $0x48] sm:$0xff] %vm1938, %v1891
      %1949 = vst [vmem:[#allocation3 + $0x50] sm:$0xff] %v1913
      %1950 = vst [vmem:[#allocation3 + $0x58] sm:$0xff] %v1914
      %1951 = vst [vmem:[#allocation3 + $0x60] sm:$0xff] %v1915
      %1952 = vst [vmem:[#allocation3 + $0x68] sm:$0xff] %v1916
      %1953 = vst [vmem:[#allocation3 + $0x70] sm:$0xff] %v1917
      %1954 = vst [vmem:[#allocation3 + $0x78] sm:$0xff] %v1918
      %1955 = vst [vmem:[#allocation3 + $0x80] sm:$0xff] %v1919
      %1956 = vst.msk [vmem:[#allocation3 + $0x88] sm:$0xff] %vm1852, %v1905
      %v1957 = vadd.s32 %v371, 256
      %v1958 = vadd.s32 %v371, 384
      %v1959 = vadd.s32 %v371, 512
      %v1960 = vadd.s32 %v371, 640
      %v1961 = vadd.s32 %v371, 768
      %v1962 = vadd.s32 %v371, 896
      %vm1963 = vcmp.lt.s32.totalorder %v371, 0
      %v1964 = vsub.s32 0, %v371
      %v1965 = vsel %vm1963, %v1964, %v371
      %v1966 = vshrl.u32 %v1965, 5
      %v1967 = vand.u32 %v1965, 31
      %v1968 = vsub.s32 0, %v1967
      %v1969 = vsel %vm1963, %v1968, %v1967
      %vm1970 = vcmp.lt.s32.totalorder %v372, 0
      %v1971 = vsub.s32 0, %v372
      %v1972 = vsel %vm1970, %v1971, %v372
      %v1973 = vshrl.u32 %v1972, 5
      %v1974 = vand.u32 %v1972, 31
      %v1975 = vsub.s32 0, %v1974
      %v1976 = vsel %vm1970, %v1975, %v1974
      %vm1977 = vcmp.lt.s32.totalorder %v1957, 0
      %v1978 = vsub.s32 0, %v1957
      %v1979 = vsel %vm1977, %v1978, %v1957
      %v1980 = vshrl.u32 %v1979, 5
      %v1981 = vand.u32 %v1979, 31
      %v1982 = vsub.s32 0, %v1981
      %v1983 = vsel %vm1977, %v1982, %v1981
      %vm1984 = vcmp.lt.s32.totalorder %v1958, 0
      %v1985 = vsub.s32 0, %v1958
      %v1986 = vsel %vm1984, %v1985, %v1958
      %v1987 = vshrl.u32 %v1986, 5
      %v1988 = vand.u32 %v1986, 31
      %v1989 = vsub.s32 0, %v1988
      %v1990 = vsel %vm1984, %v1989, %v1988
      %vm1991 = vcmp.lt.s32.totalorder %v1959, 0
      %v1992 = vsub.s32 0, %v1959
      %v1993 = vsel %vm1991, %v1992, %v1959
      %v1994 = vshrl.u32 %v1993, 5
      %v1995 = vand.u32 %v1993, 31
      %v1996 = vsub.s32 0, %v1995
      %v1997 = vsel %vm1991, %v1996, %v1995
      %vm1998 = vcmp.lt.s32.totalorder %v1960, 0
      %v1999 = vsub.s32 0, %v1960
      %v2000 = vsel %vm1998, %v1999, %v1960
      %v2001 = vshrl.u32 %v2000, 5
      %v2002 = vand.u32 %v2000, 31
      %v2003 = vsub.s32 0, %v2002
      %v2004 = vsel %vm1998, %v2003, %v2002
      %vm2005 = vcmp.lt.s32.totalorder %v1961, 0
      %v2006 = vsub.s32 0, %v1961
      %v2007 = vsel %vm2005, %v2006, %v1961
      %v2008 = vshrl.u32 %v2007, 5
      %v2009 = vand.u32 %v2007, 31
      %v2010 = vsub.s32 0, %v2009
      %v2011 = vsel %vm2005, %v2010, %v2009
      %vm2012 = vcmp.lt.s32.totalorder %v1962, 0
      %v2013 = vsub.s32 0, %v1962
      %v2014 = vsel %vm2012, %v2013, %v1962
      %v2015 = vshrl.u32 %v2014, 5
      %v2016 = vand.u32 %v2014, 31
      %v2017 = vsub.s32 0, %v2016
      %v2018 = vsel %vm2012, %v2017, %v2016
      %vm2019 = vcmp.ne.s32.totalorder %v1969, 0
      %vm2020 = vcmp.ne.s32.totalorder %v1976, 0
      %vm2021 = vcmp.ne.s32.totalorder %v1983, 0
      %vm2022 = vcmp.ne.s32.totalorder %v1990, 0
      %vm2023 = vcmp.ne.s32.totalorder %v1997, 0
      %vm2024 = vcmp.ne.s32.totalorder %v2004, 0
      %vm2025 = vcmp.ne.s32.totalorder %v2011, 0
      %vm2026 = vcmp.ne.s32.totalorder %v2018, 0
      %vm2027 = vcmp.lt.s32.totalorder %v1969, 0
      %vm2028 = vcmp.lt.s32.totalorder %v1976, 0
      %vm2029 = vcmp.lt.s32.totalorder %v1983, 0
      %vm2030 = vcmp.lt.s32.totalorder %v1990, 0
      %vm2031 = vcmp.lt.s32.totalorder %v1997, 0
      %vm2032 = vcmp.lt.s32.totalorder %v2004, 0
      %vm2033 = vcmp.lt.s32.totalorder %v2011, 0
      %vm2034 = vcmp.lt.s32.totalorder %v2018, 0
      %vm2035 = vmand %vm2027, %vm2019
      %vm2036 = vmand %vm2028, %vm2020
      %vm2037 = vmand %vm2029, %vm2021
      %vm2038 = vmand %vm2030, %vm2022
      %vm2039 = vmand %vm2031, %vm2023
      %vm2040 = vmand %vm2032, %vm2024
      %vm2041 = vmand %vm2033, %vm2025
      %vm2042 = vmand %vm2034, %vm2026
      %v2043 = vadd.s32 %v1969, 32
      %v2044 = vadd.s32 %v1976, 32
      %v2045 = vadd.s32 %v1983, 32
      %v2046 = vadd.s32 %v1990, 32
      %v2047 = vadd.s32 %v1997, 32
      %v2048 = vadd.s32 %v2004, 32
      %v2049 = vadd.s32 %v2011, 32
      %v2050 = vadd.s32 %v2018, 32
      %v2051 = vsel %vm2035, %v2043, %v1969
      %v2052 = vsel %vm2036, %v2044, %v1976
      %v2053 = vsel %vm2037, %v2045, %v1983
      %v2054 = vsel %vm2038, %v2046, %v1990
      %v2055 = vsel %vm2039, %v2047, %v1997
      %v2056 = vsel %vm2040, %v2048, %v2004
      %v2057 = vsel %vm2041, %v2049, %v2011
      %v2058 = vsel %vm2042, %v2050, %v2018
      %vm2059 = vcmp.ne.s32.totalorder %v2051, 0
      %vm2060 = vcmp.ne.s32.totalorder %v2052, 0
      %vm2061 = vcmp.ne.s32.totalorder %v2053, 0
      %vm2062 = vcmp.ne.s32.totalorder %v2054, 0
      %vm2063 = vcmp.ne.s32.totalorder %v2055, 0
      %vm2064 = vcmp.ne.s32.totalorder %v2056, 0
      %vm2065 = vcmp.ne.s32.totalorder %v2057, 0
      %vm2066 = vcmp.ne.s32.totalorder %v2058, 0
      %vm2067 = vcmp.ne.s32.totalorder %v2051, 31
      %vm2068 = vcmp.ne.s32.totalorder %v2052, 31
      %vm2069 = vcmp.ne.s32.totalorder %v2053, 31
      %vm2070 = vcmp.ne.s32.totalorder %v2054, 31
      %vm2071 = vcmp.ne.s32.totalorder %v2055, 31
      %vm2072 = vcmp.ne.s32.totalorder %v2056, 31
      %vm2073 = vcmp.ne.s32.totalorder %v2057, 31
      %vm2074 = vcmp.ne.s32.totalorder %v2058, 31
      %v2075 = vld [vmem:[#allocation3] sm:$0xff]
      %v2076 = vld [vmem:[#allocation3 + $0x8] sm:$0xff]
      %v2077 = vld [vmem:[#allocation3 + $0x10] sm:$0xff]
      %v2078 = vld [vmem:[#allocation3 + $0x18] sm:$0xff]
      %v2079 = vld [vmem:[#allocation3 + $0x20] sm:$0xff]
      %v2080 = vld [vmem:[#allocation3 + $0x28] sm:$0xff]
      %v2081 = vld [vmem:[#allocation3 + $0x30] sm:$0xff]
      %v2082 = vld [vmem:[#allocation3 + $0x38] sm:$0xff]
      %v2083 = vld [vmem:[#allocation3 + $0x48] sm:$0xff]
      %v2084 = vld [vmem:[#allocation3 + $0x50] sm:$0xff]
      %v2085 = vld [vmem:[#allocation3 + $0x58] sm:$0xff]
      %v2086 = vld [vmem:[#allocation3 + $0x60] sm:$0xff]
      %v2087 = vld [vmem:[#allocation3 + $0x68] sm:$0xff]
      %v2088 = vld [vmem:[#allocation3 + $0x70] sm:$0xff]
      %v2089 = vld [vmem:[#allocation3 + $0x78] sm:$0xff]
      %v2090 = vld [vmem:[#allocation3 + $0x80] sm:$0xff]
      %v2091 = vsel %vm2059, 1, 0
      %v2092 = vsel %vm2060, 1, 0
      %v2093 = vsel %vm2061, 1, 0
      %v2094 = vsel %vm2062, 1, 0
      %v2095 = vsel %vm2063, 1, 0
      %v2096 = vsel %vm2064, 1, 0
      %v2097 = vsel %vm2065, 1, 0
      %v2098 = vsel %vm2066, 1, 0
      %vm2099 = vcmp.eq.s32.totalorder %v2091, 1
      %vm2100 = vcmp.eq.s32.totalorder %v2092, 1
      %vm2101 = vcmp.eq.s32.totalorder %v2093, 1
      %vm2102 = vcmp.eq.s32.totalorder %v2094, 1
      %vm2103 = vcmp.eq.s32.totalorder %v2095, 1
      %vm2104 = vcmp.eq.s32.totalorder %v2096, 1
      %vm2105 = vcmp.eq.s32.totalorder %v2097, 1
      %vm2106 = vcmp.eq.s32.totalorder %v2098, 1
      %v2107 = vsel %vm2099, %v2075, 0.0
      %v2108 = vsel %vm2100, %v2076, 0.0
      %v2109 = vsel %vm2101, %v2077, 0.0
      %v2110 = vsel %vm2102, %v2078, 0.0
      %v2111 = vsel %vm2103, %v2079, 0.0
      %v2112 = vsel %vm2104, %v2080, 0.0
      %v2113 = vsel %vm2105, %v2081, 0.0
      %v2114 = vsel %vm2106, %v2082, 0.0
      %v2115 = vsel %vm2099, %v2083, 0.0
      %v2116 = vsel %vm2100, %v2084, 0.0
      %v2117 = vsel %vm2101, %v2085, 0.0
      %v2118 = vsel %vm2102, %v2086, 0.0
      %v2119 = vsel %vm2103, %v2087, 0.0
      %v2120 = vsel %vm2104, %v2088, 0.0
      %v2121 = vsel %vm2105, %v2089, 0.0
      %v2122 = vsel %vm2106, %v2090, 0.0
      %v2123 = vld [vmem:[#allocation3 + $0x40] sm:$0xff]
      %v2124 = vld [vmem:[#allocation3 + $0x88] sm:$0xff]
      %v2125 = vsel %vm2067, 1, 0
      %v2126 = vsel %vm2068, 1, 0
      %v2127 = vsel %vm2069, 1, 0
      %v2128 = vsel %vm2070, 1, 0
      %v2129 = vsel %vm2071, 1, 0
      %v2130 = vsel %vm2072, 1, 0
      %v2131 = vsel %vm2073, 1, 0
      %v2132 = vsel %vm2074, 1, 0
      %vm2133 = vcmp.eq.s32.totalorder %v2125, 1
      %vm2134 = vcmp.eq.s32.totalorder %v2126, 1
      %vm2135 = vcmp.eq.s32.totalorder %v2127, 1
      %vm2136 = vcmp.eq.s32.totalorder %v2128, 1
      %vm2137 = vcmp.eq.s32.totalorder %v2129, 1
      %vm2138 = vcmp.eq.s32.totalorder %v2130, 1
      %vm2139 = vcmp.eq.s32.totalorder %v2131, 1
      %vm2140 = vcmp.eq.s32.totalorder %v2132, 1
      %2159 = vrot.lane.b32.xlu0 %v2075, 126
      %v2160 = vpop.permute.xlu0 %2159
      %2161 = vrot.lane.b32.xlu0 %v2076, 126
      %v2162 = vpop.permute.xlu0 %2161
      %2163 = vrot.lane.b32.xlu0 %v2077, 126
      %v2164 = vpop.permute.xlu0 %2163
      %2165 = vrot.lane.b32.xlu0 %v2078, 126
      %v2166 = vpop.permute.xlu0 %2165
      %2167 = vrot.lane.b32.xlu0 %v2079, 126
      %v2168 = vpop.permute.xlu0 %2167
      %2169 = vrot.lane.b32.xlu0 %v2080, 126
      %v2170 = vpop.permute.xlu0 %2169
      %2171 = vrot.lane.b32.xlu0 %v2081, 126
      %v2172 = vpop.permute.xlu0 %2171
      %2173 = vrot.lane.b32.xlu0 %v2082, 126
      %v2174 = vpop.permute.xlu0 %2173
      %2175 = vrot.lane.b32.xlu0 %v2123, 126
      %v2176 = vpop.permute.xlu0 %2175
      %2177 = vrot.lane.b32.xlu0 %v2083, 126
      %v2178 = vpop.permute.xlu0 %2177
      %2179 = vrot.lane.b32.xlu0 %v2084, 126
      %v2180 = vpop.permute.xlu0 %2179
      %2181 = vrot.lane.b32.xlu0 %v2085, 126
      %v2182 = vpop.permute.xlu0 %2181
      %2183 = vrot.lane.b32.xlu0 %v2086, 126
      %v2184 = vpop.permute.xlu0 %2183
      %2185 = vrot.lane.b32.xlu0 %v2087, 126
      %v2186 = vpop.permute.xlu0 %2185
      %2187 = vrot.lane.b32.xlu0 %v2088, 126
      %v2188 = vpop.permute.xlu0 %2187
      %2189 = vrot.lane.b32.xlu0 %v2089, 126
      %v2190 = vpop.permute.xlu0 %2189
      %2191 = vrot.lane.b32.xlu0 %v2090, 126
      %v2192 = vpop.permute.xlu0 %2191
      %2193 = vrot.lane.b32.xlu0 %v2124, 126
      %v2194 = vpop.permute.xlu0 %2193
      %v2195 = vsel %vm437, %v2160, %v2162
      %v2196 = vsel %vm437, %v2162, %v2164
      %v2197 = vsel %vm437, %v2164, %v2166
      %v2198 = vsel %vm437, %v2166, %v2168
      %v2199 = vsel %vm437, %v2168, %v2170
      %v2200 = vsel %vm437, %v2170, %v2172
      %v2201 = vsel %vm437, %v2172, %v2174
      %v2202 = vsel %vm437, %v2174, %v2176
      %v2203 = vsel %vm437, %v2178, %v2180
      %v2204 = vsel %vm437, %v2180, %v2182
      %v2205 = vsel %vm437, %v2182, %v2184
      %v2206 = vsel %vm437, %v2184, %v2186
      %v2207 = vsel %vm437, %v2186, %v2188
      %v2208 = vsel %vm437, %v2188, %v2190
      %v2209 = vsel %vm437, %v2190, %v2192
      %v2210 = vsel %vm437, %v2192, %v2194
      %v2227 = vsel %vm2133, %v2195, 0.0
      %v2228 = vsel %vm2134, %v2196, 0.0
      %v2229 = vsel %vm2135, %v2197, 0.0
      %v2230 = vsel %vm2136, %v2198, 0.0
      %v2231 = vsel %vm2137, %v2199, 0.0
      %v2232 = vsel %vm2138, %v2200, 0.0
      %v2233 = vsel %vm2139, %v2201, 0.0
      %v2234 = vsel %vm2140, %v2202, 0.0
      %v2235 = vsel %vm2133, %v2203, 0.0
      %v2236 = vsel %vm2134, %v2204, 0.0
      %v2237 = vsel %vm2135, %v2205, 0.0
      %v2238 = vsel %vm2136, %v2206, 0.0
      %v2239 = vsel %vm2137, %v2207, 0.0
      %v2240 = vsel %vm2138, %v2208, 0.0
      %v2241 = vsel %vm2139, %v2209, 0.0
      %v2242 = vsel %vm2140, %v2210, 0.0
      %2243 = vrot.lane.b32.xlu0 %v2075, 96
      %v2244 = vpop.permute.xlu0 %2243
      %2245 = vrot.lane.b32.xlu0 %v2076, 96
      %v2246 = vpop.permute.xlu0 %2245
      %2247 = vrot.lane.b32.xlu0 %v2077, 96
      %v2248 = vpop.permute.xlu0 %2247
      %2249 = vrot.lane.b32.xlu0 %v2078, 96
      %v2250 = vpop.permute.xlu0 %2249
      %2251 = vrot.lane.b32.xlu0 %v2079, 96
      %v2252 = vpop.permute.xlu0 %2251
      %2253 = vrot.lane.b32.xlu0 %v2080, 96
      %v2254 = vpop.permute.xlu0 %2253
      %2255 = vrot.lane.b32.xlu0 %v2081, 96
      %v2256 = vpop.permute.xlu0 %2255
      %2257 = vrot.lane.b32.xlu0 %v2082, 96
      %v2258 = vpop.permute.xlu0 %2257
      %2259 = vrot.lane.b32.xlu0 %v2123, 96
      %v2260 = vpop.permute.xlu0 %2259
      %2261 = vrot.lane.b32.xlu0 %v2083, 96
      %v2262 = vpop.permute.xlu0 %2261
      %2263 = vrot.lane.b32.xlu0 %v2084, 96
      %v2264 = vpop.permute.xlu0 %2263
      %2265 = vrot.lane.b32.xlu0 %v2085, 96
      %v2266 = vpop.permute.xlu0 %2265
      %2267 = vrot.lane.b32.xlu0 %v2086, 96
      %v2268 = vpop.permute.xlu0 %2267
      %2269 = vrot.lane.b32.xlu0 %v2087, 96
      %v2270 = vpop.permute.xlu0 %2269
      %2271 = vrot.lane.b32.xlu0 %v2088, 96
      %v2272 = vpop.permute.xlu0 %2271
      %2273 = vrot.lane.b32.xlu0 %v2089, 96
      %v2274 = vpop.permute.xlu0 %2273
      %2275 = vrot.lane.b32.xlu0 %v2090, 96
      %v2276 = vpop.permute.xlu0 %2275
      %2277 = vrot.lane.b32.xlu0 %v2124, 96
      %v2278 = vpop.permute.xlu0 %2277
      %v2279 = vsel %vm512, %v2244, %v2246
      %v2280 = vsel %vm512, %v2246, %v2248
      %v2281 = vsel %vm512, %v2248, %v2250
      %v2282 = vsel %vm512, %v2250, %v2252
      %v2283 = vsel %vm512, %v2252, %v2254
      %v2284 = vsel %vm512, %v2254, %v2256
      %v2285 = vsel %vm512, %v2256, %v2258
      %v2286 = vsel %vm512, %v2258, %v2260
      %v2287 = vsel %vm512, %v2262, %v2264
      %v2288 = vsel %vm512, %v2264, %v2266
      %v2289 = vsel %vm512, %v2266, %v2268
      %v2290 = vsel %vm512, %v2268, %v2270
      %v2291 = vsel %vm512, %v2270, %v2272
      %v2292 = vsel %vm512, %v2272, %v2274
      %v2293 = vsel %vm512, %v2274, %v2276
      %v2294 = vsel %vm512, %v2276, %v2278
      %v2311 = vsel %vm2099, %v2279, 0.0
      %v2312 = vsel %vm2100, %v2280, 0.0
      %v2313 = vsel %vm2101, %v2281, 0.0
      %v2314 = vsel %vm2102, %v2282, 0.0
      %v2315 = vsel %vm2103, %v2283, 0.0
      %v2316 = vsel %vm2104, %v2284, 0.0
      %v2317 = vsel %vm2105, %v2285, 0.0
      %v2318 = vsel %vm2106, %v2286, 0.0
      %v2319 = vsel %vm2099, %v2287, 0.0
      %v2320 = vsel %vm2100, %v2288, 0.0
      %v2321 = vsel %vm2101, %v2289, 0.0
      %v2322 = vsel %vm2102, %v2290, 0.0
      %v2323 = vsel %vm2103, %v2291, 0.0
      %v2324 = vsel %vm2104, %v2292, 0.0
      %v2325 = vsel %vm2105, %v2293, 0.0
      %v2326 = vsel %vm2106, %v2294, 0.0
      %2327 = vrot.lane.b32.xlu0 %v2075, 94
      %v2328 = vpop.permute.xlu0 %2327
      %2329 = vrot.lane.b32.xlu0 %v2076, 94
      %v2330 = vpop.permute.xlu0 %2329
      %2331 = vrot.lane.b32.xlu0 %v2077, 94
      %v2332 = vpop.permute.xlu0 %2331
      %2333 = vrot.lane.b32.xlu0 %v2078, 94
      %v2334 = vpop.permute.xlu0 %2333
      %2335 = vrot.lane.b32.xlu0 %v2079, 94
      %v2336 = vpop.permute.xlu0 %2335
      %2337 = vrot.lane.b32.xlu0 %v2080, 94
      %v2338 = vpop.permute.xlu0 %2337
      %2339 = vrot.lane.b32.xlu0 %v2081, 94
      %v2340 = vpop.permute.xlu0 %2339
      %2341 = vrot.lane.b32.xlu0 %v2082, 94
      %v2342 = vpop.permute.xlu0 %2341
      %2343 = vrot.lane.b32.xlu0 %v2123, 94
      %v2344 = vpop.permute.xlu0 %2343
      %2345 = vrot.lane.b32.xlu0 %v2083, 94
      %v2346 = vpop.permute.xlu0 %2345
      %2347 = vrot.lane.b32.xlu0 %v2084, 94
      %v2348 = vpop.permute.xlu0 %2347
      %2349 = vrot.lane.b32.xlu0 %v2085, 94
      %v2350 = vpop.permute.xlu0 %2349
      %2351 = vrot.lane.b32.xlu0 %v2086, 94
      %v2352 = vpop.permute.xlu0 %2351
      %2353 = vrot.lane.b32.xlu0 %v2087, 94
      %v2354 = vpop.permute.xlu0 %2353
      %2355 = vrot.lane.b32.xlu0 %v2088, 94
      %v2356 = vpop.permute.xlu0 %2355
      %2357 = vrot.lane.b32.xlu0 %v2089, 94
      %v2358 = vpop.permute.xlu0 %2357
      %2359 = vrot.lane.b32.xlu0 %v2090, 94
      %v2360 = vpop.permute.xlu0 %2359
      %2361 = vrot.lane.b32.xlu0 %v2124, 94
      %v2362 = vpop.permute.xlu0 %2361
      %v2363 = vsel %vm537, %v2328, %v2330
      %v2364 = vsel %vm537, %v2330, %v2332
      %v2365 = vsel %vm537, %v2332, %v2334
      %v2366 = vsel %vm537, %v2334, %v2336
      %v2367 = vsel %vm537, %v2336, %v2338
      %v2368 = vsel %vm537, %v2338, %v2340
      %v2369 = vsel %vm537, %v2340, %v2342
      %v2370 = vsel %vm537, %v2342, %v2344
      %v2371 = vsel %vm537, %v2346, %v2348
      %v2372 = vsel %vm537, %v2348, %v2350
      %v2373 = vsel %vm537, %v2350, %v2352
      %v2374 = vsel %vm537, %v2352, %v2354
      %v2375 = vsel %vm537, %v2354, %v2356
      %v2376 = vsel %vm537, %v2356, %v2358
      %v2377 = vsel %vm537, %v2358, %v2360
      %v2378 = vsel %vm537, %v2360, %v2362
      %v2395 = vsel %vm2133, %v2363, 0.0
      %v2396 = vsel %vm2134, %v2364, 0.0
      %v2397 = vsel %vm2135, %v2365, 0.0
      %v2398 = vsel %vm2136, %v2366, 0.0
      %v2399 = vsel %vm2137, %v2367, 0.0
      %v2400 = vsel %vm2138, %v2368, 0.0
      %v2401 = vsel %vm2139, %v2369, 0.0
      %v2402 = vsel %vm2140, %v2370, 0.0
      %v2403 = vsel %vm2133, %v2371, 0.0
      %v2404 = vsel %vm2134, %v2372, 0.0
      %v2405 = vsel %vm2135, %v2373, 0.0
      %v2406 = vsel %vm2136, %v2374, 0.0
      %v2407 = vsel %vm2137, %v2375, 0.0
      %v2408 = vsel %vm2138, %v2376, 0.0
      %v2409 = vsel %vm2139, %v2377, 0.0
      %v2410 = vsel %vm2140, %v2378, 0.0
      %2411 = vrot.lane.b32.xlu0 %v2075, 64
      %v2412 = vpop.permute.xlu0 %2411
      %2413 = vrot.lane.b32.xlu0 %v2076, 64
      %v2414 = vpop.permute.xlu0 %2413
      %2415 = vrot.lane.b32.xlu0 %v2077, 64
      %v2416 = vpop.permute.xlu0 %2415
      %2417 = vrot.lane.b32.xlu0 %v2078, 64
      %v2418 = vpop.permute.xlu0 %2417
      %2419 = vrot.lane.b32.xlu0 %v2079, 64
      %v2420 = vpop.permute.xlu0 %2419
      %2421 = vrot.lane.b32.xlu0 %v2080, 64
      %v2422 = vpop.permute.xlu0 %2421
      %2423 = vrot.lane.b32.xlu0 %v2081, 64
      %v2424 = vpop.permute.xlu0 %2423
      %2425 = vrot.lane.b32.xlu0 %v2082, 64
      %v2426 = vpop.permute.xlu0 %2425
      %2427 = vrot.lane.b32.xlu0 %v2123, 64
      %v2428 = vpop.permute.xlu0 %2427
      %2429 = vrot.lane.b32.xlu0 %v2083, 64
      %v2430 = vpop.permute.xlu0 %2429
      %2431 = vrot.lane.b32.xlu0 %v2084, 64
      %v2432 = vpop.permute.xlu0 %2431
      %2433 = vrot.lane.b32.xlu0 %v2085, 64
      %v2434 = vpop.permute.xlu0 %2433
      %2435 = vrot.lane.b32.xlu0 %v2086, 64
      %v2436 = vpop.permute.xlu0 %2435
      %2437 = vrot.lane.b32.xlu0 %v2087, 64
      %v2438 = vpop.permute.xlu0 %2437
      %2439 = vrot.lane.b32.xlu0 %v2088, 64
      %v2440 = vpop.permute.xlu0 %2439
      %2441 = vrot.lane.b32.xlu0 %v2089, 64
      %v2442 = vpop.permute.xlu0 %2441
      %2443 = vrot.lane.b32.xlu0 %v2090, 64
      %v2444 = vpop.permute.xlu0 %2443
      %2445 = vrot.lane.b32.xlu0 %v2124, 64
      %v2446 = vpop.permute.xlu0 %2445
      %vm2447 = vcmask 523264
      %v2448 = vsel %vm2447, %v2412, %v2414
      %v2449 = vsel %vm2447, %v2414, %v2416
      %v2450 = vsel %vm2447, %v2416, %v2418
      %v2451 = vsel %vm2447, %v2418, %v2420
      %v2452 = vsel %vm2447, %v2420, %v2422
      %v2453 = vsel %vm2447, %v2422, %v2424
      %v2454 = vsel %vm2447, %v2424, %v2426
      %v2455 = vsel %vm2447, %v2426, %v2428
      %v2456 = vsel %vm2447, %v2430, %v2432
      %v2457 = vsel %vm2447, %v2432, %v2434
      %v2458 = vsel %vm2447, %v2434, %v2436
      %v2459 = vsel %vm2447, %v2436, %v2438
      %v2460 = vsel %vm2447, %v2438, %v2440
      %v2461 = vsel %vm2447, %v2440, %v2442
      %v2462 = vsel %vm2447, %v2442, %v2444
      %v2463 = vsel %vm2447, %v2444, %v2446
      %v2480 = vsel %vm2099, %v2448, 0.0
      %v2481 = vsel %vm2100, %v2449, 0.0
      %v2482 = vsel %vm2101, %v2450, 0.0
      %v2483 = vsel %vm2102, %v2451, 0.0
      %v2484 = vsel %vm2103, %v2452, 0.0
      %v2485 = vsel %vm2104, %v2453, 0.0
      %v2486 = vsel %vm2105, %v2454, 0.0
      %v2487 = vsel %vm2106, %v2455, 0.0
      %v2488 = vsel %vm2099, %v2456, 0.0
      %v2489 = vsel %vm2100, %v2457, 0.0
      %v2490 = vsel %vm2101, %v2458, 0.0
      %v2491 = vsel %vm2102, %v2459, 0.0
      %v2492 = vsel %vm2103, %v2460, 0.0
      %v2493 = vsel %vm2104, %v2461, 0.0
      %v2494 = vsel %vm2105, %v2462, 0.0
      %v2495 = vsel %vm2106, %v2463, 0.0
      %2496 = vrot.lane.b32.xlu0 %v2075, 62
      %v2497 = vpop.permute.xlu0 %2496
      %2498 = vrot.lane.b32.xlu0 %v2076, 62
      %v2499 = vpop.permute.xlu0 %2498
      %2500 = vrot.lane.b32.xlu0 %v2077, 62
      %v2501 = vpop.permute.xlu0 %2500
      %2502 = vrot.lane.b32.xlu0 %v2078, 62
      %v2503 = vpop.permute.xlu0 %2502
      %2504 = vrot.lane.b32.xlu0 %v2079, 62
      %v2505 = vpop.permute.xlu0 %2504
      %2506 = vrot.lane.b32.xlu0 %v2080, 62
      %v2507 = vpop.permute.xlu0 %2506
      %2508 = vrot.lane.b32.xlu0 %v2081, 62
      %v2509 = vpop.permute.xlu0 %2508
      %2510 = vrot.lane.b32.xlu0 %v2082, 62
      %v2511 = vpop.permute.xlu0 %2510
      %2512 = vrot.lane.b32.xlu0 %v2123, 62
      %v2513 = vpop.permute.xlu0 %2512
      %2514 = vrot.lane.b32.xlu0 %v2083, 62
      %v2515 = vpop.permute.xlu0 %2514
      %2516 = vrot.lane.b32.xlu0 %v2084, 62
      %v2517 = vpop.permute.xlu0 %2516
      %2518 = vrot.lane.b32.xlu0 %v2085, 62
      %v2519 = vpop.permute.xlu0 %2518
      %2520 = vrot.lane.b32.xlu0 %v2086, 62
      %v2521 = vpop.permute.xlu0 %2520
      %2522 = vrot.lane.b32.xlu0 %v2087, 62
      %v2523 = vpop.permute.xlu0 %2522
      %2524 = vrot.lane.b32.xlu0 %v2088, 62
      %v2525 = vpop.permute.xlu0 %2524
      %2526 = vrot.lane.b32.xlu0 %v2089, 62
      %v2527 = vpop.permute.xlu0 %2526
      %2528 = vrot.lane.b32.xlu0 %v2090, 62
      %v2529 = vpop.permute.xlu0 %2528
      %2530 = vrot.lane.b32.xlu0 %v2124, 62
      %v2531 = vpop.permute.xlu0 %2530
      %vm2532 = vcmask 506880
      %v2533 = vsel %vm2532, %v2497, %v2499
      %v2534 = vsel %vm2532, %v2499, %v2501
      %v2535 = vsel %vm2532, %v2501, %v2503
      %v2536 = vsel %vm2532, %v2503, %v2505
      %v2537 = vsel %vm2532, %v2505, %v2507
      %v2538 = vsel %vm2532, %v2507, %v2509
      %v2539 = vsel %vm2532, %v2509, %v2511
      %v2540 = vsel %vm2532, %v2511, %v2513
      %v2541 = vsel %vm2532, %v2515, %v2517
      %v2542 = vsel %vm2532, %v2517, %v2519
      %v2543 = vsel %vm2532, %v2519, %v2521
      %v2544 = vsel %vm2532, %v2521, %v2523
      %v2545 = vsel %vm2532, %v2523, %v2525
      %v2546 = vsel %vm2532, %v2525, %v2527
      %v2547 = vsel %vm2532, %v2527, %v2529
      %v2548 = vsel %vm2532, %v2529, %v2531
      %v2565 = vsel %vm2133, %v2533, 0.0
      %v2566 = vsel %vm2134, %v2534, 0.0
      %v2567 = vsel %vm2135, %v2535, 0.0
      %v2568 = vsel %vm2136, %v2536, 0.0
      %v2569 = vsel %vm2137, %v2537, 0.0
      %v2570 = vsel %vm2138, %v2538, 0.0
      %v2571 = vsel %vm2139, %v2539, 0.0
      %v2572 = vsel %vm2140, %v2540, 0.0
      %v2573 = vsel %vm2133, %v2541, 0.0
      %v2574 = vsel %vm2134, %v2542, 0.0
      %v2575 = vsel %vm2135, %v2543, 0.0
      %v2576 = vsel %vm2136, %v2544, 0.0
      %v2577 = vsel %vm2137, %v2545, 0.0
      %v2578 = vsel %vm2138, %v2546, 0.0
      %v2579 = vsel %vm2139, %v2547, 0.0
      %v2580 = vsel %vm2140, %v2548, 0.0
      %2581 = vrot.lane.b32.xlu0 %v2075, 127
      %v2582 = vpop.permute.xlu0 %2581
      %2583 = vrot.lane.b32.xlu0 %v2076, 127
      %v2584 = vpop.permute.xlu0 %2583
      %2585 = vrot.lane.b32.xlu0 %v2077, 127
      %v2586 = vpop.permute.xlu0 %2585
      %2587 = vrot.lane.b32.xlu0 %v2078, 127
      %v2588 = vpop.permute.xlu0 %2587
      %2589 = vrot.lane.b32.xlu0 %v2079, 127
      %v2590 = vpop.permute.xlu0 %2589
      %2591 = vrot.lane.b32.xlu0 %v2080, 127
      %v2592 = vpop.permute.xlu0 %2591
      %2593 = vrot.lane.b32.xlu0 %v2081, 127
      %v2594 = vpop.permute.xlu0 %2593
      %2595 = vrot.lane.b32.xlu0 %v2082, 127
      %v2596 = vpop.permute.xlu0 %2595
      %2597 = vrot.lane.b32.xlu0 %v2123, 127
      %v2598 = vpop.permute.xlu0 %2597
      %2599 = vrot.lane.b32.xlu0 %v2083, 127
      %v2600 = vpop.permute.xlu0 %2599
      %2601 = vrot.lane.b32.xlu0 %v2084, 127
      %v2602 = vpop.permute.xlu0 %2601
      %2603 = vrot.lane.b32.xlu0 %v2085, 127
      %v2604 = vpop.permute.xlu0 %2603
      %2605 = vrot.lane.b32.xlu0 %v2086, 127
      %v2606 = vpop.permute.xlu0 %2605
      %2607 = vrot.lane.b32.xlu0 %v2087, 127
      %v2608 = vpop.permute.xlu0 %2607
      %2609 = vrot.lane.b32.xlu0 %v2088, 127
      %v2610 = vpop.permute.xlu0 %2609
      %2611 = vrot.lane.b32.xlu0 %v2089, 127
      %v2612 = vpop.permute.xlu0 %2611
      %2613 = vrot.lane.b32.xlu0 %v2090, 127
      %v2614 = vpop.permute.xlu0 %2613
      %2615 = vrot.lane.b32.xlu0 %v2124, 127
      %v2616 = vpop.permute.xlu0 %2615
      %v2617 = vsel %vm562, %v2582, %v2584
      %v2618 = vsel %vm562, %v2584, %v2586
      %v2619 = vsel %vm562, %v2586, %v2588
      %v2620 = vsel %vm562, %v2588, %v2590
      %v2621 = vsel %vm562, %v2590, %v2592
      %v2622 = vsel %vm562, %v2592, %v2594
      %v2623 = vsel %vm562, %v2594, %v2596
      %v2624 = vsel %vm562, %v2596, %v2598
      %v2625 = vsel %vm562, %v2600, %v2602
      %v2626 = vsel %vm562, %v2602, %v2604
      %v2627 = vsel %vm562, %v2604, %v2606
      %v2628 = vsel %vm562, %v2606, %v2608
      %v2629 = vsel %vm562, %v2608, %v2610
      %v2630 = vsel %vm562, %v2610, %v2612
      %v2631 = vsel %vm562, %v2612, %v2614
      %v2632 = vsel %vm562, %v2614, %v2616
      %2649 = vrot.lane.b32.xlu0 %v2075, 95
      %v2650 = vpop.permute.xlu0 %2649
      %2651 = vrot.lane.b32.xlu0 %v2076, 95
      %v2652 = vpop.permute.xlu0 %2651
      %2653 = vrot.lane.b32.xlu0 %v2077, 95
      %v2654 = vpop.permute.xlu0 %2653
      %2655 = vrot.lane.b32.xlu0 %v2078, 95
      %v2656 = vpop.permute.xlu0 %2655
      %2657 = vrot.lane.b32.xlu0 %v2079, 95
      %v2658 = vpop.permute.xlu0 %2657
      %2659 = vrot.lane.b32.xlu0 %v2080, 95
      %v2660 = vpop.permute.xlu0 %2659
      %2661 = vrot.lane.b32.xlu0 %v2081, 95
      %v2662 = vpop.permute.xlu0 %2661
      %2663 = vrot.lane.b32.xlu0 %v2082, 95
      %v2664 = vpop.permute.xlu0 %2663
      %2665 = vrot.lane.b32.xlu0 %v2123, 95
      %v2666 = vpop.permute.xlu0 %2665
      %2667 = vrot.lane.b32.xlu0 %v2083, 95
      %v2668 = vpop.permute.xlu0 %2667
      %2669 = vrot.lane.b32.xlu0 %v2084, 95
      %v2670 = vpop.permute.xlu0 %2669
      %2671 = vrot.lane.b32.xlu0 %v2085, 95
      %v2672 = vpop.permute.xlu0 %2671
      %2673 = vrot.lane.b32.xlu0 %v2086, 95
      %v2674 = vpop.permute.xlu0 %2673
      %2675 = vrot.lane.b32.xlu0 %v2087, 95
      %v2676 = vpop.permute.xlu0 %2675
      %2677 = vrot.lane.b32.xlu0 %v2088, 95
      %v2678 = vpop.permute.xlu0 %2677
      %2679 = vrot.lane.b32.xlu0 %v2089, 95
      %v2680 = vpop.permute.xlu0 %2679
      %2681 = vrot.lane.b32.xlu0 %v2090, 95
      %v2682 = vpop.permute.xlu0 %2681
      %2683 = vrot.lane.b32.xlu0 %v2124, 95
      %v2684 = vpop.permute.xlu0 %2683
      %v2685 = vsel %vm604, %v2650, %v2652
      %v2686 = vsel %vm604, %v2652, %v2654
      %v2687 = vsel %vm604, %v2654, %v2656
      %v2688 = vsel %vm604, %v2656, %v2658
      %v2689 = vsel %vm604, %v2658, %v2660
      %v2690 = vsel %vm604, %v2660, %v2662
      %v2691 = vsel %vm604, %v2662, %v2664
      %v2692 = vsel %vm604, %v2664, %v2666
      %v2693 = vsel %vm604, %v2668, %v2670
      %v2694 = vsel %vm604, %v2670, %v2672
      %v2695 = vsel %vm604, %v2672, %v2674
      %v2696 = vsel %vm604, %v2674, %v2676
      %v2697 = vsel %vm604, %v2676, %v2678
      %v2698 = vsel %vm604, %v2678, %v2680
      %v2699 = vsel %vm604, %v2680, %v2682
      %v2700 = vsel %vm604, %v2682, %v2684
      %2717 = vrot.lane.b32.xlu0 %v2075, 63
      %v2718 = vpop.permute.xlu0 %2717
      %2719 = vrot.lane.b32.xlu0 %v2076, 63
      %v2720 = vpop.permute.xlu0 %2719
      %2721 = vrot.lane.b32.xlu0 %v2077, 63
      %v2722 = vpop.permute.xlu0 %2721
      %2723 = vrot.lane.b32.xlu0 %v2078, 63
      %v2724 = vpop.permute.xlu0 %2723
      %2725 = vrot.lane.b32.xlu0 %v2079, 63
      %v2726 = vpop.permute.xlu0 %2725
      %2727 = vrot.lane.b32.xlu0 %v2080, 63
      %v2728 = vpop.permute.xlu0 %2727
      %2729 = vrot.lane.b32.xlu0 %v2081, 63
      %v2730 = vpop.permute.xlu0 %2729
      %2731 = vrot.lane.b32.xlu0 %v2082, 63
      %v2732 = vpop.permute.xlu0 %2731
      %2733 = vrot.lane.b32.xlu0 %v2123, 63
      %v2734 = vpop.permute.xlu0 %2733
      %2735 = vrot.lane.b32.xlu0 %v2083, 63
      %v2736 = vpop.permute.xlu0 %2735
      %2737 = vrot.lane.b32.xlu0 %v2084, 63
      %v2738 = vpop.permute.xlu0 %2737
      %2739 = vrot.lane.b32.xlu0 %v2085, 63
      %v2740 = vpop.permute.xlu0 %2739
      %2741 = vrot.lane.b32.xlu0 %v2086, 63
      %v2742 = vpop.permute.xlu0 %2741
      %2743 = vrot.lane.b32.xlu0 %v2087, 63
      %v2744 = vpop.permute.xlu0 %2743
      %2745 = vrot.lane.b32.xlu0 %v2088, 63
      %v2746 = vpop.permute.xlu0 %2745
      %2747 = vrot.lane.b32.xlu0 %v2089, 63
      %v2748 = vpop.permute.xlu0 %2747
      %2749 = vrot.lane.b32.xlu0 %v2090, 63
      %v2750 = vpop.permute.xlu0 %2749
      %2751 = vrot.lane.b32.xlu0 %v2124, 63
      %v2752 = vpop.permute.xlu0 %2751
      %vm2753 = vcmask 515072
      %v2754 = vsel %vm2753, %v2718, %v2720
      %v2755 = vsel %vm2753, %v2720, %v2722
      %v2756 = vsel %vm2753, %v2722, %v2724
      %v2757 = vsel %vm2753, %v2724, %v2726
      %v2758 = vsel %vm2753, %v2726, %v2728
      %v2759 = vsel %vm2753, %v2728, %v2730
      %v2760 = vsel %vm2753, %v2730, %v2732
      %v2761 = vsel %vm2753, %v2732, %v2734
      %v2762 = vsel %vm2753, %v2736, %v2738
      %v2763 = vsel %vm2753, %v2738, %v2740
      %v2764 = vsel %vm2753, %v2740, %v2742
      %v2765 = vsel %vm2753, %v2742, %v2744
      %v2766 = vsel %vm2753, %v2744, %v2746
      %v2767 = vsel %vm2753, %v2746, %v2748
      %v2768 = vsel %vm2753, %v2748, %v2750
      %v2769 = vsel %vm2753, %v2750, %v2752
      %v2786 = vld [vmem:[%s5] sm:$0xff]
      %v2787 = vld [vmem:[%s5 + $0x8] sm:$0xff]
      %v2788 = vld [vmem:[%s5 + $0x10] sm:$0xff]
      %v2789 = vld [vmem:[%s5 + $0x18] sm:$0xff]
      %v2790 = vld [vmem:[%s6] sm:$0xff]
      %v2791 = vld [vmem:[%s6 + $0x8] sm:$0xff]
      %2793 = vset.pattern.permute.xlu0 0
      %2794 = vperm.xlu0 %2793, %v2790
      %v2795 = vpop.permute.xlu0 %2794
      %2798 = vset.pattern.permute.xlu0 0
      %2799 = vperm.xlu0 %2798, %v2791
      %v2800 = vpop.permute.xlu0 %2799
      %v2803 = vsel %vm629, %v2787, 0
      %v2806 = vsel %vm629, %v2789, 0
      %2808 = vmatpush.msra.mxu0 %v2762
      %2809 = vmatpush.msra.mxu0 %v2754
      %2810 = vmatpush.msra.mxu0 %v2488
      %2811 = vmatpush.msra.mxu0 %v2480
      %2812 = vmatpush.msra.mxu0 %v2403
      %2813 = vmatpush.msra.mxu0 %v2395
      %2814 = vmatpush.msra.mxu0 %v2693
      %2815 = vmatpush.msra.mxu0 %v2685
      %2816 = vmatpush.msra.mxu0 %v2319
      %2817 = vmatpush.msra.mxu0 %v2311
      %2818 = vmatpush.msra.mxu0 %v2235
      %2819 = vmatpush.msra.mxu0 %v2227
      %2820 = vmatpush.msra.mxu0 %v2625
      %2821 = vmatpush.msra.mxu0 %v2617
      %2822 = vmatpush.msra.mxu0 %v2115
      %2823 = vmatpush.msra.mxu0 %v2107
      %2824 = vmatmul.f32.gmra.mxu0 %v2786
      %v2825 = vpop.f32.mrf.mxu0
      %v2826 = vadd.f32 %v2795, %v2825
      %2827 = vmatmul.f32.gmra.mxu0 %v2788
      %v2828 = vpop.f32.mrf.mxu0
      %v2829 = vadd.f32 %v2800, %v2828
      %2830 = vdwg.mxu0
      %2831 = vmatpush.msra.mxu0 0.0
      %2832 = vmatpush.msra.mxu0 0.0
      %2833 = vmatpush.msra.mxu0 0.0
      %2834 = vmatpush.msra.mxu0 0.0
      %2835 = vmatpush.msra.mxu0 0.0
      %2836 = vmatpush.msra.mxu0 0.0
      %2837 = vmatpush.msra.mxu0 0.0
      %2838 = vmatpush.msra.mxu0 0.0
      %2839 = vmatpush.msra.mxu0 0.0
      %2840 = vmatpush.msra.mxu0 0.0
      %2841 = vmatpush.msra.mxu0 0.0
      %2842 = vmatpush.msra.mxu0 0.0
      %2843 = vmatpush.msra.mxu0 0.0
      %2844 = vmatpush.msra.mxu0 0.0
      %2845 = vmatpush.msra.mxu0 %v2573
      %2846 = vmatpush.msra.mxu0 %v2565
      %2847 = vmatmul.f32.gmra.mxu0 %v2803
      %v2848 = vpop.f32.mrf.mxu0
      %v2849 = vadd.f32 %v2826, %v2848
      %2850 = vmatmul.f32.gmra.mxu0 %v2806
      %v2851 = vpop.f32.mrf.mxu0
      %v2852 = vadd.f32 %v2829, %v2851
      %2853 = vdwg.mxu0
      %2854 = vmatpush.msra.mxu0 %v2763
      %2855 = vmatpush.msra.mxu0 %v2755
      %2856 = vmatpush.msra.mxu0 %v2489
      %2857 = vmatpush.msra.mxu0 %v2481
      %2858 = vmatpush.msra.mxu0 %v2404
      %2859 = vmatpush.msra.mxu0 %v2396
      %2860 = vmatpush.msra.mxu0 %v2694
      %2861 = vmatpush.msra.mxu0 %v2686
      %2862 = vmatpush.msra.mxu0 %v2320
      %2863 = vmatpush.msra.mxu0 %v2312
      %2864 = vmatpush.msra.mxu0 %v2236
      %2865 = vmatpush.msra.mxu0 %v2228
      %2866 = vmatpush.msra.mxu0 %v2626
      %2867 = vmatpush.msra.mxu0 %v2618
      %2868 = vmatpush.msra.mxu0 %v2116
      %2869 = vmatpush.msra.mxu0 %v2108
      %2870 = vmatmul.f32.gmra.mxu0 %v2786
      %v2871 = vpop.f32.mrf.mxu0
      %v2872 = vadd.f32 %v2795, %v2871
      %2873 = vmatmul.f32.gmra.mxu0 %v2788
      %v2874 = vpop.f32.mrf.mxu0
      %v2875 = vadd.f32 %v2800, %v2874
      %2876 = vdwg.mxu0
      %2877 = vmatpush.msra.mxu0 0.0
      %2878 = vmatpush.msra.mxu0 0.0
      %2879 = vmatpush.msra.mxu0 0.0
      %2880 = vmatpush.msra.mxu0 0.0
      %2881 = vmatpush.msra.mxu0 0.0
      %2882 = vmatpush.msra.mxu0 0.0
      %2883 = vmatpush.msra.mxu0 0.0
      %2884 = vmatpush.msra.mxu0 0.0
      %2885 = vmatpush.msra.mxu0 0.0
      %2886 = vmatpush.msra.mxu0 0.0
      %2887 = vmatpush.msra.mxu0 0.0
      %2888 = vmatpush.msra.mxu0 0.0
      %2889 = vmatpush.msra.mxu0 0.0
      %2890 = vmatpush.msra.mxu0 0.0
      %2891 = vmatpush.msra.mxu0 %v2574
      %2892 = vmatpush.msra.mxu0 %v2566
      %2893 = vmatmul.f32.gmra.mxu0 %v2803
      %v2894 = vpop.f32.mrf.mxu0
      %v2895 = vadd.f32 %v2872, %v2894
      %2896 = vmatmul.f32.gmra.mxu0 %v2806
      %v2897 = vpop.f32.mrf.mxu0
      %v2898 = vadd.f32 %v2875, %v2897
      %2899 = vdwg.mxu0
      %2900 = vmatpush.msra.mxu0 %v2764
      %2901 = vmatpush.msra.mxu0 %v2756
      %2902 = vmatpush.msra.mxu0 %v2490
      %2903 = vmatpush.msra.mxu0 %v2482
      %2904 = vmatpush.msra.mxu0 %v2405
      %2905 = vmatpush.msra.mxu0 %v2397
      %2906 = vmatpush.msra.mxu0 %v2695
      %2907 = vmatpush.msra.mxu0 %v2687
      %2908 = vmatpush.msra.mxu0 %v2321
      %2909 = vmatpush.msra.mxu0 %v2313
      %2910 = vmatpush.msra.mxu0 %v2237
      %2911 = vmatpush.msra.mxu0 %v2229
      %2912 = vmatpush.msra.mxu0 %v2627
      %2913 = vmatpush.msra.mxu0 %v2619
      %2914 = vmatpush.msra.mxu0 %v2117
      %2915 = vmatpush.msra.mxu0 %v2109
      %2916 = vmatmul.f32.gmra.mxu0 %v2786
      %v2917 = vpop.f32.mrf.mxu0
      %v2918 = vadd.f32 %v2795, %v2917
      %2919 = vmatmul.f32.gmra.mxu0 %v2788
      %v2920 = vpop.f32.mrf.mxu0
      %v2921 = vadd.f32 %v2800, %v2920
      %2922 = vdwg.mxu0
      %2923 = vmatpush.msra.mxu0 0.0
      %2924 = vmatpush.msra.mxu0 0.0
      %2925 = vmatpush.msra.mxu0 0.0
      %2926 = vmatpush.msra.mxu0 0.0
      %2927 = vmatpush.msra.mxu0 0.0
      %2928 = vmatpush.msra.mxu0 0.0
      %2929 = vmatpush.msra.mxu0 0.0
      %2930 = vmatpush.msra.mxu0 0.0
      %2931 = vmatpush.msra.mxu0 0.0
      %2932 = vmatpush.msra.mxu0 0.0
      %2933 = vmatpush.msra.mxu0 0.0
      %2934 = vmatpush.msra.mxu0 0.0
      %2935 = vmatpush.msra.mxu0 0.0
      %2936 = vmatpush.msra.mxu0 0.0
      %2937 = vmatpush.msra.mxu0 %v2575
      %2938 = vmatpush.msra.mxu0 %v2567
      %2939 = vmatmul.f32.gmra.mxu0 %v2803
      %v2940 = vpop.f32.mrf.mxu0
      %v2941 = vadd.f32 %v2918, %v2940
      %2942 = vmatmul.f32.gmra.mxu0 %v2806
      %v2943 = vpop.f32.mrf.mxu0
      %v2944 = vadd.f32 %v2921, %v2943
      %2945 = vdwg.mxu0
      %2946 = vmatpush.msra.mxu0 %v2765
      %2947 = vmatpush.msra.mxu0 %v2757
      %2948 = vmatpush.msra.mxu0 %v2491
      %2949 = vmatpush.msra.mxu0 %v2483
      %2950 = vmatpush.msra.mxu0 %v2406
      %2951 = vmatpush.msra.mxu0 %v2398
      %2952 = vmatpush.msra.mxu0 %v2696
      %2953 = vmatpush.msra.mxu0 %v2688
      %2954 = vmatpush.msra.mxu0 %v2322
      %2955 = vmatpush.msra.mxu0 %v2314
      %2956 = vmatpush.msra.mxu0 %v2238
      %2957 = vmatpush.msra.mxu0 %v2230
      %2958 = vmatpush.msra.mxu0 %v2628
      %2959 = vmatpush.msra.mxu0 %v2620
      %2960 = vmatpush.msra.mxu0 %v2118
      %2961 = vmatpush.msra.mxu0 %v2110
      %2962 = vmatmul.f32.gmra.mxu0 %v2786
      %v2963 = vpop.f32.mrf.mxu0
      %v2964 = vadd.f32 %v2795, %v2963
      %2965 = vmatmul.f32.gmra.mxu0 %v2788
      %v2966 = vpop.f32.mrf.mxu0
      %v2967 = vadd.f32 %v2800, %v2966
      %2968 = vdwg.mxu0
      %2969 = vmatpush.msra.mxu0 0.0
      %2970 = vmatpush.msra.mxu0 0.0
      %2971 = vmatpush.msra.mxu0 0.0
      %2972 = vmatpush.msra.mxu0 0.0
      %2973 = vmatpush.msra.mxu0 0.0
      %2974 = vmatpush.msra.mxu0 0.0
      %2975 = vmatpush.msra.mxu0 0.0
      %2976 = vmatpush.msra.mxu0 0.0
      %2977 = vmatpush.msra.mxu0 0.0
      %2978 = vmatpush.msra.mxu0 0.0
      %2979 = vmatpush.msra.mxu0 0.0
      %2980 = vmatpush.msra.mxu0 0.0
      %2981 = vmatpush.msra.mxu0 0.0
      %2982 = vmatpush.msra.mxu0 0.0
      %2983 = vmatpush.msra.mxu0 %v2576
      %2984 = vmatpush.msra.mxu0 %v2568
      %2985 = vmatmul.f32.gmra.mxu0 %v2803
      %v2986 = vpop.f32.mrf.mxu0
      %v2987 = vadd.f32 %v2964, %v2986
      %2988 = vmatmul.f32.gmra.mxu0 %v2806
      %v2989 = vpop.f32.mrf.mxu0
      %v2990 = vadd.f32 %v2967, %v2989
      %2991 = vdwg.mxu0
      %2992 = vmatpush.msra.mxu0 %v2766
      %2993 = vmatpush.msra.mxu0 %v2758
      %2994 = vmatpush.msra.mxu0 %v2492
      %2995 = vmatpush.msra.mxu0 %v2484
      %2996 = vmatpush.msra.mxu0 %v2407
      %2997 = vmatpush.msra.mxu0 %v2399
      %2998 = vmatpush.msra.mxu0 %v2697
      %2999 = vmatpush.msra.mxu0 %v2689
      %3000 = vmatpush.msra.mxu0 %v2323
      %3001 = vmatpush.msra.mxu0 %v2315
      %3002 = vmatpush.msra.mxu0 %v2239
      %3003 = vmatpush.msra.mxu0 %v2231
      %3004 = vmatpush.msra.mxu0 %v2629
      %3005 = vmatpush.msra.mxu0 %v2621
      %3006 = vmatpush.msra.mxu0 %v2119
      %3007 = vmatpush.msra.mxu0 %v2111
      %3008 = vmatmul.f32.gmra.mxu0 %v2786
      %v3009 = vpop.f32.mrf.mxu0
      %v3010 = vadd.f32 %v2795, %v3009
      %3011 = vmatmul.f32.gmra.mxu0 %v2788
      %v3012 = vpop.f32.mrf.mxu0
      %v3013 = vadd.f32 %v2800, %v3012
      %3014 = vdwg.mxu0
      %3015 = vmatpush.msra.mxu0 0.0
      %3016 = vmatpush.msra.mxu0 0.0
      %3017 = vmatpush.msra.mxu0 0.0
      %3018 = vmatpush.msra.mxu0 0.0
      %3019 = vmatpush.msra.mxu0 0.0
      %3020 = vmatpush.msra.mxu0 0.0
      %3021 = vmatpush.msra.mxu0 0.0
      %3022 = vmatpush.msra.mxu0 0.0
      %3023 = vmatpush.msra.mxu0 0.0
      %3024 = vmatpush.msra.mxu0 0.0
      %3025 = vmatpush.msra.mxu0 0.0
      %3026 = vmatpush.msra.mxu0 0.0
      %3027 = vmatpush.msra.mxu0 0.0
      %3028 = vmatpush.msra.mxu0 0.0
      %3029 = vmatpush.msra.mxu0 %v2577
      %3030 = vmatpush.msra.mxu0 %v2569
      %3031 = vmatmul.f32.gmra.mxu0 %v2803
      %v3032 = vpop.f32.mrf.mxu0
      %v3033 = vadd.f32 %v3010, %v3032
      %3034 = vmatmul.f32.gmra.mxu0 %v2806
      %v3035 = vpop.f32.mrf.mxu0
      %v3036 = vadd.f32 %v3013, %v3035
      %3037 = vdwg.mxu0
      %3038 = vmatpush.msra.mxu0 %v2767
      %3039 = vmatpush.msra.mxu0 %v2759
      %3040 = vmatpush.msra.mxu0 %v2493
      %3041 = vmatpush.msra.mxu0 %v2485
      %3042 = vmatpush.msra.mxu0 %v2408
      %3043 = vmatpush.msra.mxu0 %v2400
      %3044 = vmatpush.msra.mxu0 %v2698
      %3045 = vmatpush.msra.mxu0 %v2690
      %3046 = vmatpush.msra.mxu0 %v2324
      %3047 = vmatpush.msra.mxu0 %v2316
      %3048 = vmatpush.msra.mxu0 %v2240
      %3049 = vmatpush.msra.mxu0 %v2232
      %3050 = vmatpush.msra.mxu0 %v2630
      %3051 = vmatpush.msra.mxu0 %v2622
      %3052 = vmatpush.msra.mxu0 %v2120
      %3053 = vmatpush.msra.mxu0 %v2112
      %3054 = vmatmul.f32.gmra.mxu0 %v2786
      %v3055 = vpop.f32.mrf.mxu0
      %v3056 = vadd.f32 %v2795, %v3055
      %3057 = vmatmul.f32.gmra.mxu0 %v2788
      %v3058 = vpop.f32.mrf.mxu0
      %v3059 = vadd.f32 %v2800, %v3058
      %3060 = vdwg.mxu0
      %3061 = vmatpush.msra.mxu0 0.0
      %3062 = vmatpush.msra.mxu0 0.0
      %3063 = vmatpush.msra.mxu0 0.0
      %3064 = vmatpush.msra.mxu0 0.0
      %3065 = vmatpush.msra.mxu0 0.0
      %3066 = vmatpush.msra.mxu0 0.0
      %3067 = vmatpush.msra.mxu0 0.0
      %3068 = vmatpush.msra.mxu0 0.0
      %3069 = vmatpush.msra.mxu0 0.0
      %3070 = vmatpush.msra.mxu0 0.0
      %3071 = vmatpush.msra.mxu0 0.0
      %3072 = vmatpush.msra.mxu0 0.0
      %3073 = vmatpush.msra.mxu0 0.0
      %3074 = vmatpush.msra.mxu0 0.0
      %3075 = vmatpush.msra.mxu0 %v2578
      %3076 = vmatpush.msra.mxu0 %v2570
      %3077 = vmatmul.f32.gmra.mxu0 %v2803
      %v3078 = vpop.f32.mrf.mxu0
      %v3079 = vadd.f32 %v3056, %v3078
      %3080 = vmatmul.f32.gmra.mxu0 %v2806
      %v3081 = vpop.f32.mrf.mxu0
      %v3082 = vadd.f32 %v3059, %v3081
      %3083 = vdwg.mxu0
      %3084 = vmatpush.msra.mxu0 %v2768
      %3085 = vmatpush.msra.mxu0 %v2760
      %3086 = vmatpush.msra.mxu0 %v2494
      %3087 = vmatpush.msra.mxu0 %v2486
      %3088 = vmatpush.msra.mxu0 %v2409
      %3089 = vmatpush.msra.mxu0 %v2401
      %3090 = vmatpush.msra.mxu0 %v2699
      %3091 = vmatpush.msra.mxu0 %v2691
      %3092 = vmatpush.msra.mxu0 %v2325
      %3093 = vmatpush.msra.mxu0 %v2317
      %3094 = vmatpush.msra.mxu0 %v2241
      %3095 = vmatpush.msra.mxu0 %v2233
      %3096 = vmatpush.msra.mxu0 %v2631
      %3097 = vmatpush.msra.mxu0 %v2623
      %3098 = vmatpush.msra.mxu0 %v2121
      %3099 = vmatpush.msra.mxu0 %v2113
      %3100 = vmatmul.f32.gmra.mxu0 %v2786
      %v3101 = vpop.f32.mrf.mxu0
      %v3102 = vadd.f32 %v2795, %v3101
      %3103 = vmatmul.f32.gmra.mxu0 %v2788
      %v3104 = vpop.f32.mrf.mxu0
      %v3105 = vadd.f32 %v2800, %v3104
      %3106 = vdwg.mxu0
      %3107 = vmatpush.msra.mxu0 0.0
      %3108 = vmatpush.msra.mxu0 0.0
      %3109 = vmatpush.msra.mxu0 0.0
      %3110 = vmatpush.msra.mxu0 0.0
      %3111 = vmatpush.msra.mxu0 0.0
      %3112 = vmatpush.msra.mxu0 0.0
      %3113 = vmatpush.msra.mxu0 0.0
      %3114 = vmatpush.msra.mxu0 0.0
      %3115 = vmatpush.msra.mxu0 0.0
      %3116 = vmatpush.msra.mxu0 0.0
      %3117 = vmatpush.msra.mxu0 0.0
      %3118 = vmatpush.msra.mxu0 0.0
      %3119 = vmatpush.msra.mxu0 0.0
      %3120 = vmatpush.msra.mxu0 0.0
      %3121 = vmatpush.msra.mxu0 %v2579
      %3122 = vmatpush.msra.mxu0 %v2571
      %3123 = vmatmul.f32.gmra.mxu0 %v2803
      %v3124 = vpop.f32.mrf.mxu0
      %v3125 = vadd.f32 %v3102, %v3124
      %3126 = vmatmul.f32.gmra.mxu0 %v2806
      %v3127 = vpop.f32.mrf.mxu0
      %v3128 = vadd.f32 %v3105, %v3127
      %3129 = vdwg.mxu0
      %3130 = vmatpush.msra.mxu0 %v2769
      %3131 = vmatpush.msra.mxu0 %v2761
      %3132 = vmatpush.msra.mxu0 %v2495
      %3133 = vmatpush.msra.mxu0 %v2487
      %3134 = vmatpush.msra.mxu0 %v2410
      %3135 = vmatpush.msra.mxu0 %v2402
      %3136 = vmatpush.msra.mxu0 %v2700
      %3137 = vmatpush.msra.mxu0 %v2692
      %3138 = vmatpush.msra.mxu0 %v2326
      %3139 = vmatpush.msra.mxu0 %v2318
      %3140 = vmatpush.msra.mxu0 %v2242
      %3141 = vmatpush.msra.mxu0 %v2234
      %3142 = vmatpush.msra.mxu0 %v2632
      %3143 = vmatpush.msra.mxu0 %v2624
      %3144 = vmatpush.msra.mxu0 %v2122
      %3145 = vmatpush.msra.mxu0 %v2114
      %3146 = vmatmul.f32.gmra.mxu0 %v2786
      %v3147 = vpop.f32.mrf.mxu0
      %v3148 = vadd.f32 %v2795, %v3147
      %3149 = vmatmul.f32.gmra.mxu0 %v2788
      %v3150 = vpop.f32.mrf.mxu0
      %v3151 = vadd.f32 %v2800, %v3150
      %3152 = vdwg.mxu0
      %3153 = vmatpush.msra.mxu0 0.0
      %3154 = vmatpush.msra.mxu0 0.0
      %3155 = vmatpush.msra.mxu0 0.0
      %3156 = vmatpush.msra.mxu0 0.0
      %3157 = vmatpush.msra.mxu0 0.0
      %3158 = vmatpush.msra.mxu0 0.0
      %3159 = vmatpush.msra.mxu0 0.0
      %3160 = vmatpush.msra.mxu0 0.0
      %3161 = vmatpush.msra.mxu0 0.0
      %3162 = vmatpush.msra.mxu0 0.0
      %3163 = vmatpush.msra.mxu0 0.0
      %3164 = vmatpush.msra.mxu0 0.0
      %3165 = vmatpush.msra.mxu0 0.0
      %3166 = vmatpush.msra.mxu0 0.0
      %3167 = vmatpush.msra.mxu0 %v2580
      %3168 = vmatpush.msra.mxu0 %v2572
      %3169 = vmatmul.f32.gmra.mxu0 %v2803
      %v3170 = vpop.f32.mrf.mxu0
      %v3171 = vadd.f32 %v3148, %v3170
      %3172 = vmatmul.f32.gmra.mxu0 %v2806
      %v3173 = vpop.f32.mrf.mxu0
      %v3174 = vadd.f32 %v3151, %v3173
      %3175 = vdwg.mxu0
      %v3176 = vxor.u32 %v2849, 2147483648
      %v3177 = vxor.u32 %v2895, 2147483648
      %v3178 = vxor.u32 %v2941, 2147483648
      %v3179 = vxor.u32 %v2987, 2147483648
      %v3180 = vxor.u32 %v3033, 2147483648
      %v3181 = vxor.u32 %v3079, 2147483648
      %v3182 = vxor.u32 %v3125, 2147483648
      %v3183 = vxor.u32 %v3171, 2147483648
      %v3184 = vxor.u32 %v2852, 2147483648
      %v3185 = vxor.u32 %v2898, 2147483648
      %v3186 = vxor.u32 %v2944, 2147483648
      %v3187 = vxor.u32 %v2990, 2147483648
      %v3188 = vxor.u32 %v3036, 2147483648
      %v3189 = vxor.u32 %v3082, 2147483648
      %v3190 = vxor.u32 %v3128, 2147483648
      %v3191 = vxor.u32 %v3174, 2147483648
      %v3192 = vmul.f32 %v3176, 1.442695
      %v3193 = vpow.pop %v3192
      %v3194 = vmul.f32 %v3177, 1.442695
      %v3195 = vpow.pop %v3194
      %v3196 = vmul.f32 %v3178, 1.442695
      %v3197 = vpow.pop %v3196
      %v3198 = vmul.f32 %v3179, 1.442695
      %v3199 = vpow.pop %v3198
      %v3200 = vmul.f32 %v3180, 1.442695
      %v3201 = vpow.pop %v3200
      %v3202 = vmul.f32 %v3181, 1.442695
      %v3203 = vpow.pop %v3202
      %v3204 = vmul.f32 %v3182, 1.442695
      %v3205 = vpow.pop %v3204
      %v3206 = vmul.f32 %v3183, 1.442695
      %v3207 = vpow.pop %v3206
      %v3208 = vmul.f32 %v3184, 1.442695
      %v3209 = vpow.pop %v3208
      %v3210 = vmul.f32 %v3185, 1.442695
      %v3211 = vpow.pop %v3210
      %v3212 = vmul.f32 %v3186, 1.442695
      %v3213 = vpow.pop %v3212
      %v3214 = vmul.f32 %v3187, 1.442695
      %v3215 = vpow.pop %v3214
      %v3216 = vmul.f32 %v3188, 1.442695
      %v3217 = vpow.pop %v3216
      %v3218 = vmul.f32 %v3189, 1.442695
      %v3219 = vpow.pop %v3218
      %v3220 = vmul.f32 %v3190, 1.442695
      %v3221 = vpow.pop %v3220
      %v3222 = vmul.f32 %v3191, 1.442695
      %v3223 = vpow.pop %v3222
      %v3224 = vadd.f32 %v3193, 1.0
      %v3225 = vadd.f32 %v3195, 1.0
      %v3226 = vadd.f32 %v3197, 1.0
      %v3227 = vadd.f32 %v3199, 1.0
      %v3228 = vadd.f32 %v3201, 1.0
      %v3229 = vadd.f32 %v3203, 1.0
      %v3230 = vadd.f32 %v3205, 1.0
      %v3231 = vadd.f32 %v3207, 1.0
      %v3232 = vadd.f32 %v3209, 1.0
      %v3233 = vadd.f32 %v3211, 1.0
      %v3234 = vadd.f32 %v3213, 1.0
      %v3235 = vadd.f32 %v3215, 1.0
      %v3236 = vadd.f32 %v3217, 1.0
      %v3237 = vadd.f32 %v3219, 1.0
      %v3238 = vadd.f32 %v3221, 1.0
      %v3239 = vadd.f32 %v3223, 1.0
      %v3240 = vrcp.pop %v3224
      %v3241 = vmul.f32 %v3224, %v3240
      %v3242 = vsub.f32 1.0, %v3241
      %v3243 = vmul.f32 %v3240, %v3242
      %v3244 = vadd.f32 %v3240, %v3243
      %vm3245 = vweird.f32 %v3224
      %vm3246 = vweird.f32 %v3240
      %vm3247 = vmor %vm3245, %vm3246
      %v3248 = vsel %vm3247, %v3240, %v3244
      %v3249 = vand.u32 2147483647, %v3224
      %vm3250 = vcmp.eq.f32.partialorder %v3249, 8.507059e+37
      %v3251 = vand.u32 %v3224, 2147483648
      %v3252 = vor.u32 1.1754944e-38, %v3251
      %v3253 = vsel %vm3250, %v3252, %v3248
      %v3254 = vmul.f32 1.0, %v3253
      %v3255 = vrcp.pop %v3225
      %v3256 = vmul.f32 %v3225, %v3255
      %v3257 = vsub.f32 1.0, %v3256
      %v3258 = vmul.f32 %v3255, %v3257
      %v3259 = vadd.f32 %v3255, %v3258
      %vm3260 = vweird.f32 %v3225
      %vm3261 = vweird.f32 %v3255
      %vm3262 = vmor %vm3260, %vm3261
      %v3263 = vsel %vm3262, %v3255, %v3259
      %v3264 = vand.u32 2147483647, %v3225
      %vm3265 = vcmp.eq.f32.partialorder %v3264, 8.507059e+37
      %v3266 = vand.u32 %v3225, 2147483648
      %v3267 = vor.u32 1.1754944e-38, %v3266
      %v3268 = vsel %vm3265, %v3267, %v3263
      %v3269 = vmul.f32 1.0, %v3268
      %v3270 = vrcp.pop %v3226
      %v3271 = vmul.f32 %v3226, %v3270
      %v3272 = vsub.f32 1.0, %v3271
      %v3273 = vmul.f32 %v3270, %v3272
      %v3274 = vadd.f32 %v3270, %v3273
      %vm3275 = vweird.f32 %v3226
      %vm3276 = vweird.f32 %v3270
      %vm3277 = vmor %vm3275, %vm3276
      %v3278 = vsel %vm3277, %v3270, %v3274
      %v3279 = vand.u32 2147483647, %v3226
      %vm3280 = vcmp.eq.f32.partialorder %v3279, 8.507059e+37
      %v3281 = vand.u32 %v3226, 2147483648
      %v3282 = vor.u32 1.1754944e-38, %v3281
      %v3283 = vsel %vm3280, %v3282, %v3278
      %v3284 = vmul.f32 1.0, %v3283
      %v3285 = vrcp.pop %v3227
      %v3286 = vmul.f32 %v3227, %v3285
      %v3287 = vsub.f32 1.0, %v3286
      %v3288 = vmul.f32 %v3285, %v3287
      %v3289 = vadd.f32 %v3285, %v3288
      %vm3290 = vweird.f32 %v3227
      %vm3291 = vweird.f32 %v3285
      %vm3292 = vmor %vm3290, %vm3291
      %v3293 = vsel %vm3292, %v3285, %v3289
      %v3294 = vand.u32 2147483647, %v3227
      %vm3295 = vcmp.eq.f32.partialorder %v3294, 8.507059e+37
      %v3296 = vand.u32 %v3227, 2147483648
      %v3297 = vor.u32 1.1754944e-38, %v3296
      %v3298 = vsel %vm3295, %v3297, %v3293
      %v3299 = vmul.f32 1.0, %v3298
      %v3300 = vrcp.pop %v3228
      %v3301 = vmul.f32 %v3228, %v3300
      %v3302 = vsub.f32 1.0, %v3301
      %v3303 = vmul.f32 %v3300, %v3302
      %v3304 = vadd.f32 %v3300, %v3303
      %vm3305 = vweird.f32 %v3228
      %vm3306 = vweird.f32 %v3300
      %vm3307 = vmor %vm3305, %vm3306
      %v3308 = vsel %vm3307, %v3300, %v3304
      %v3309 = vand.u32 2147483647, %v3228
      %vm3310 = vcmp.eq.f32.partialorder %v3309, 8.507059e+37
      %v3311 = vand.u32 %v3228, 2147483648
      %v3312 = vor.u32 1.1754944e-38, %v3311
      %v3313 = vsel %vm3310, %v3312, %v3308
      %v3314 = vmul.f32 1.0, %v3313
      %v3315 = vrcp.pop %v3229
      %v3316 = vmul.f32 %v3229, %v3315
      %v3317 = vsub.f32 1.0, %v3316
      %v3318 = vmul.f32 %v3315, %v3317
      %v3319 = vadd.f32 %v3315, %v3318
      %vm3320 = vweird.f32 %v3229
      %vm3321 = vweird.f32 %v3315
      %vm3322 = vmor %vm3320, %vm3321
      %v3323 = vsel %vm3322, %v3315, %v3319
      %v3324 = vand.u32 2147483647, %v3229
      %vm3325 = vcmp.eq.f32.partialorder %v3324, 8.507059e+37
      %v3326 = vand.u32 %v3229, 2147483648
      %v3327 = vor.u32 1.1754944e-38, %v3326
      %v3328 = vsel %vm3325, %v3327, %v3323
      %v3329 = vmul.f32 1.0, %v3328
      %v3330 = vrcp.pop %v3230
      %v3331 = vmul.f32 %v3230, %v3330
      %v3332 = vsub.f32 1.0, %v3331
      %v3333 = vmul.f32 %v3330, %v3332
      %v3334 = vadd.f32 %v3330, %v3333
      %vm3335 = vweird.f32 %v3230
      %vm3336 = vweird.f32 %v3330
      %vm3337 = vmor %vm3335, %vm3336
      %v3338 = vsel %vm3337, %v3330, %v3334
      %v3339 = vand.u32 2147483647, %v3230
      %vm3340 = vcmp.eq.f32.partialorder %v3339, 8.507059e+37
      %v3341 = vand.u32 %v3230, 2147483648
      %v3342 = vor.u32 1.1754944e-38, %v3341
      %v3343 = vsel %vm3340, %v3342, %v3338
      %v3344 = vmul.f32 1.0, %v3343
      %v3345 = vrcp.pop %v3231
      %v3346 = vmul.f32 %v3231, %v3345
      %v3347 = vsub.f32 1.0, %v3346
      %v3348 = vmul.f32 %v3345, %v3347
      %v3349 = vadd.f32 %v3345, %v3348
      %vm3350 = vweird.f32 %v3231
      %vm3351 = vweird.f32 %v3345
      %vm3352 = vmor %vm3350, %vm3351
      %v3353 = vsel %vm3352, %v3345, %v3349
      %v3354 = vand.u32 2147483647, %v3231
      %vm3355 = vcmp.eq.f32.partialorder %v3354, 8.507059e+37
      %v3356 = vand.u32 %v3231, 2147483648
      %v3357 = vor.u32 1.1754944e-38, %v3356
      %v3358 = vsel %vm3355, %v3357, %v3353
      %v3359 = vmul.f32 1.0, %v3358
      %v3360 = vrcp.pop %v3232
      %v3361 = vmul.f32 %v3232, %v3360
      %v3362 = vsub.f32 1.0, %v3361
      %v3363 = vmul.f32 %v3360, %v3362
      %v3364 = vadd.f32 %v3360, %v3363
      %vm3365 = vweird.f32 %v3232
      %vm3366 = vweird.f32 %v3360
      %vm3367 = vmor %vm3365, %vm3366
      %v3368 = vsel %vm3367, %v3360, %v3364
      %v3369 = vand.u32 2147483647, %v3232
      %vm3370 = vcmp.eq.f32.partialorder %v3369, 8.507059e+37
      %v3371 = vand.u32 %v3232, 2147483648
      %v3372 = vor.u32 1.1754944e-38, %v3371
      %v3373 = vsel %vm3370, %v3372, %v3368
      %v3374 = vmul.f32 1.0, %v3373
      %v3375 = vrcp.pop %v3233
      %v3376 = vmul.f32 %v3233, %v3375
      %v3377 = vsub.f32 1.0, %v3376
      %v3378 = vmul.f32 %v3375, %v3377
      %v3379 = vadd.f32 %v3375, %v3378
      %vm3380 = vweird.f32 %v3233
      %vm3381 = vweird.f32 %v3375
      %vm3382 = vmor %vm3380, %vm3381
      %v3383 = vsel %vm3382, %v3375, %v3379
      %v3384 = vand.u32 2147483647, %v3233
      %vm3385 = vcmp.eq.f32.partialorder %v3384, 8.507059e+37
      %v3386 = vand.u32 %v3233, 2147483648
      %v3387 = vor.u32 1.1754944e-38, %v3386
      %v3388 = vsel %vm3385, %v3387, %v3383
      %v3389 = vmul.f32 1.0, %v3388
      %v3390 = vrcp.pop %v3234
      %v3391 = vmul.f32 %v3234, %v3390
      %v3392 = vsub.f32 1.0, %v3391
      %v3393 = vmul.f32 %v3390, %v3392
      %v3394 = vadd.f32 %v3390, %v3393
      %vm3395 = vweird.f32 %v3234
      %vm3396 = vweird.f32 %v3390
      %vm3397 = vmor %vm3395, %vm3396
      %v3398 = vsel %vm3397, %v3390, %v3394
      %v3399 = vand.u32 2147483647, %v3234
      %vm3400 = vcmp.eq.f32.partialorder %v3399, 8.507059e+37
      %v3401 = vand.u32 %v3234, 2147483648
      %v3402 = vor.u32 1.1754944e-38, %v3401
      %v3403 = vsel %vm3400, %v3402, %v3398
      %v3404 = vmul.f32 1.0, %v3403
      %v3405 = vrcp.pop %v3235
      %v3406 = vmul.f32 %v3235, %v3405
      %v3407 = vsub.f32 1.0, %v3406
      %v3408 = vmul.f32 %v3405, %v3407
      %v3409 = vadd.f32 %v3405, %v3408
      %vm3410 = vweird.f32 %v3235
      %vm3411 = vweird.f32 %v3405
      %vm3412 = vmor %vm3410, %vm3411
      %v3413 = vsel %vm3412, %v3405, %v3409
      %v3414 = vand.u32 2147483647, %v3235
      %vm3415 = vcmp.eq.f32.partialorder %v3414, 8.507059e+37
      %v3416 = vand.u32 %v3235, 2147483648
      %v3417 = vor.u32 1.1754944e-38, %v3416
      %v3418 = vsel %vm3415, %v3417, %v3413
      %v3419 = vmul.f32 1.0, %v3418
      %v3420 = vrcp.pop %v3236
      %v3421 = vmul.f32 %v3236, %v3420
      %v3422 = vsub.f32 1.0, %v3421
      %v3423 = vmul.f32 %v3420, %v3422
      %v3424 = vadd.f32 %v3420, %v3423
      %vm3425 = vweird.f32 %v3236
      %vm3426 = vweird.f32 %v3420
      %vm3427 = vmor %vm3425, %vm3426
      %v3428 = vsel %vm3427, %v3420, %v3424
      %v3429 = vand.u32 2147483647, %v3236
      %vm3430 = vcmp.eq.f32.partialorder %v3429, 8.507059e+37
      %v3431 = vand.u32 %v3236, 2147483648
      %v3432 = vor.u32 1.1754944e-38, %v3431
      %v3433 = vsel %vm3430, %v3432, %v3428
      %v3434 = vmul.f32 1.0, %v3433
      %v3435 = vrcp.pop %v3237
      %v3436 = vmul.f32 %v3237, %v3435
      %v3437 = vsub.f32 1.0, %v3436
      %v3438 = vmul.f32 %v3435, %v3437
      %v3439 = vadd.f32 %v3435, %v3438
      %vm3440 = vweird.f32 %v3237
      %vm3441 = vweird.f32 %v3435
      %vm3442 = vmor %vm3440, %vm3441
      %v3443 = vsel %vm3442, %v3435, %v3439
      %v3444 = vand.u32 2147483647, %v3237
      %vm3445 = vcmp.eq.f32.partialorder %v3444, 8.507059e+37
      %v3446 = vand.u32 %v3237, 2147483648
      %v3447 = vor.u32 1.1754944e-38, %v3446
      %v3448 = vsel %vm3445, %v3447, %v3443
      %v3449 = vmul.f32 1.0, %v3448
      %v3450 = vrcp.pop %v3238
      %v3451 = vmul.f32 %v3238, %v3450
      %v3452 = vsub.f32 1.0, %v3451
      %v3453 = vmul.f32 %v3450, %v3452
      %v3454 = vadd.f32 %v3450, %v3453
      %vm3455 = vweird.f32 %v3238
      %vm3456 = vweird.f32 %v3450
      %vm3457 = vmor %vm3455, %vm3456
      %v3458 = vsel %vm3457, %v3450, %v3454
      %v3459 = vand.u32 2147483647, %v3238
      %vm3460 = vcmp.eq.f32.partialorder %v3459, 8.507059e+37
      %v3461 = vand.u32 %v3238, 2147483648
      %v3462 = vor.u32 1.1754944e-38, %v3461
      %v3463 = vsel %vm3460, %v3462, %v3458
      %v3464 = vmul.f32 1.0, %v3463
      %v3465 = vrcp.pop %v3239
      %v3466 = vmul.f32 %v3239, %v3465
      %v3467 = vsub.f32 1.0, %v3466
      %v3468 = vmul.f32 %v3465, %v3467
      %v3469 = vadd.f32 %v3465, %v3468
      %vm3470 = vweird.f32 %v3239
      %vm3471 = vweird.f32 %v3465
      %vm3472 = vmor %vm3470, %vm3471
      %v3473 = vsel %vm3472, %v3465, %v3469
      %v3474 = vand.u32 2147483647, %v3239
      %vm3475 = vcmp.eq.f32.partialorder %v3474, 8.507059e+37
      %v3476 = vand.u32 %v3239, 2147483648
      %v3477 = vor.u32 1.1754944e-38, %v3476
      %v3478 = vsel %vm3475, %v3477, %v3473
      %v3479 = vmul.f32 1.0, %v3478
      %v3480 = vmul.f32 %v2849, %v3254
      %v3481 = vmul.f32 %v2895, %v3269
      %v3482 = vmul.f32 %v2941, %v3284
      %v3483 = vmul.f32 %v2987, %v3299
      %v3484 = vmul.f32 %v3033, %v3314
      %v3485 = vmul.f32 %v3079, %v3329
      %v3486 = vmul.f32 %v3125, %v3344
      %v3487 = vmul.f32 %v3171, %v3359
      %v3488 = vmul.f32 %v2852, %v3374
      %v3489 = vmul.f32 %v2898, %v3389
      %v3490 = vmul.f32 %v2944, %v3404
      %v3491 = vmul.f32 %v2990, %v3419
      %v3492 = vmul.f32 %v3036, %v3434
      %v3493 = vmul.f32 %v3082, %v3449
      %v3494 = vmul.f32 %v3128, %v3464
      %v3495 = vmul.f32 %v3174, %v3479
      %v3496 = vld [vmem:[%s7] sm:$0x7]
      %v3498 = vsel %vm629, %v3496, 0
      %3500 = vmatpush.msra.mxu0 0.0
      %3501 = vmatpush.msra.mxu0 0.0
      %3502 = vmatpush.msra.mxu0 0.0
      %3503 = vmatpush.msra.mxu0 0.0
      %3504 = vmatpush.msra.mxu0 0.0
      %3505 = vmatpush.msra.mxu0 0.0
      %3506 = vmatpush.msra.mxu0 0.0
      %3507 = vmatpush.msra.mxu0 0.0
      %3508 = vmatpush.msra.mxu0 0.0
      %3509 = vmatpush.msra.mxu0 0.0
      %3510 = vmatpush.msra.mxu0 0.0
      %3511 = vmatpush.msra.mxu0 0.0
      %3512 = vmatpush.msra.mxu0 0.0
      %3513 = vmatpush.msra.mxu0 0.0
      %3514 = vmatpush.msra.mxu0 %v3488
      %3515 = vmatpush.msra.mxu0 %v3480
      %3516 = vmatmul.f32.gmra.mxu0 %v3498
      %v3517 = vpop.f32.mrf.mxu0
      %v3518 = vadd.f32 0.0, %v3517
      %3519 = vdwg.mxu0
      %3520 = vmatpush.msra.mxu0 0.0
      %3521 = vmatpush.msra.mxu0 0.0
      %3522 = vmatpush.msra.mxu0 0.0
      %3523 = vmatpush.msra.mxu0 0.0
      %3524 = vmatpush.msra.mxu0 0.0
      %3525 = vmatpush.msra.mxu0 0.0
      %3526 = vmatpush.msra.mxu0 0.0
      %3527 = vmatpush.msra.mxu0 0.0
      %3528 = vmatpush.msra.mxu0 0.0
      %3529 = vmatpush.msra.mxu0 0.0
      %3530 = vmatpush.msra.mxu0 0.0
      %3531 = vmatpush.msra.mxu0 0.0
      %3532 = vmatpush.msra.mxu0 0.0
      %3533 = vmatpush.msra.mxu0 0.0
      %3534 = vmatpush.msra.mxu0 %v3489
      %3535 = vmatpush.msra.mxu0 %v3481
      %3536 = vmatmul.f32.gmra.mxu0 %v3498
      %v3537 = vpop.f32.mrf.mxu0
      %v3538 = vadd.f32 0.0, %v3537
      %3539 = vdwg.mxu0
      %3540 = vmatpush.msra.mxu0 0.0
      %3541 = vmatpush.msra.mxu0 0.0
      %3542 = vmatpush.msra.mxu0 0.0
      %3543 = vmatpush.msra.mxu0 0.0
      %3544 = vmatpush.msra.mxu0 0.0
      %3545 = vmatpush.msra.mxu0 0.0
      %3546 = vmatpush.msra.mxu0 0.0
      %3547 = vmatpush.msra.mxu0 0.0
      %3548 = vmatpush.msra.mxu0 0.0
      %3549 = vmatpush.msra.mxu0 0.0
      %3550 = vmatpush.msra.mxu0 0.0
      %3551 = vmatpush.msra.mxu0 0.0
      %3552 = vmatpush.msra.mxu0 0.0
      %3553 = vmatpush.msra.mxu0 0.0
      %3554 = vmatpush.msra.mxu0 %v3490
      %3555 = vmatpush.msra.mxu0 %v3482
      %3556 = vmatmul.f32.gmra.mxu0 %v3498
      %v3557 = vpop.f32.mrf.mxu0
      %v3558 = vadd.f32 0.0, %v3557
      %3559 = vdwg.mxu0
      %3560 = vmatpush.msra.mxu0 0.0
      %3561 = vmatpush.msra.mxu0 0.0
      %3562 = vmatpush.msra.mxu0 0.0
      %3563 = vmatpush.msra.mxu0 0.0
      %3564 = vmatpush.msra.mxu0 0.0
      %3565 = vmatpush.msra.mxu0 0.0
      %3566 = vmatpush.msra.mxu0 0.0
      %3567 = vmatpush.msra.mxu0 0.0
      %3568 = vmatpush.msra.mxu0 0.0
      %3569 = vmatpush.msra.mxu0 0.0
      %3570 = vmatpush.msra.mxu0 0.0
      %3571 = vmatpush.msra.mxu0 0.0
      %3572 = vmatpush.msra.mxu0 0.0
      %3573 = vmatpush.msra.mxu0 0.0
      %3574 = vmatpush.msra.mxu0 %v3491
      %3575 = vmatpush.msra.mxu0 %v3483
      %3576 = vmatmul.f32.gmra.mxu0 %v3498
      %v3577 = vpop.f32.mrf.mxu0
      %v3578 = vadd.f32 0.0, %v3577
      %3579 = vdwg.mxu0
      %3580 = vmatpush.msra.mxu0 0.0
      %3581 = vmatpush.msra.mxu0 0.0
      %3582 = vmatpush.msra.mxu0 0.0
      %3583 = vmatpush.msra.mxu0 0.0
      %3584 = vmatpush.msra.mxu0 0.0
      %3585 = vmatpush.msra.mxu0 0.0
      %3586 = vmatpush.msra.mxu0 0.0
      %3587 = vmatpush.msra.mxu0 0.0
      %3588 = vmatpush.msra.mxu0 0.0
      %3589 = vmatpush.msra.mxu0 0.0
      %3590 = vmatpush.msra.mxu0 0.0
      %3591 = vmatpush.msra.mxu0 0.0
      %3592 = vmatpush.msra.mxu0 0.0
      %3593 = vmatpush.msra.mxu0 0.0
      %3594 = vmatpush.msra.mxu0 %v3492
      %3595 = vmatpush.msra.mxu0 %v3484
      %3596 = vmatmul.f32.gmra.mxu0 %v3498
      %v3597 = vpop.f32.mrf.mxu0
      %v3598 = vadd.f32 0.0, %v3597
      %3599 = vdwg.mxu0
      %3600 = vmatpush.msra.mxu0 0.0
      %3601 = vmatpush.msra.mxu0 0.0
      %3602 = vmatpush.msra.mxu0 0.0
      %3603 = vmatpush.msra.mxu0 0.0
      %3604 = vmatpush.msra.mxu0 0.0
      %3605 = vmatpush.msra.mxu0 0.0
      %3606 = vmatpush.msra.mxu0 0.0
      %3607 = vmatpush.msra.mxu0 0.0
      %3608 = vmatpush.msra.mxu0 0.0
      %3609 = vmatpush.msra.mxu0 0.0
      %3610 = vmatpush.msra.mxu0 0.0
      %3611 = vmatpush.msra.mxu0 0.0
      %3612 = vmatpush.msra.mxu0 0.0
      %3613 = vmatpush.msra.mxu0 0.0
      %3614 = vmatpush.msra.mxu0 %v3493
      %3615 = vmatpush.msra.mxu0 %v3485
      %3616 = vmatmul.f32.gmra.mxu0 %v3498
      %v3617 = vpop.f32.mrf.mxu0
      %v3618 = vadd.f32 0.0, %v3617
      %3619 = vdwg.mxu0
      %3620 = vmatpush.msra.mxu0 0.0
      %3621 = vmatpush.msra.mxu0 0.0
      %3622 = vmatpush.msra.mxu0 0.0
      %3623 = vmatpush.msra.mxu0 0.0
      %3624 = vmatpush.msra.mxu0 0.0
      %3625 = vmatpush.msra.mxu0 0.0
      %3626 = vmatpush.msra.mxu0 0.0
      %3627 = vmatpush.msra.mxu0 0.0
      %3628 = vmatpush.msra.mxu0 0.0
      %3629 = vmatpush.msra.mxu0 0.0
      %3630 = vmatpush.msra.mxu0 0.0
      %3631 = vmatpush.msra.mxu0 0.0
      %3632 = vmatpush.msra.mxu0 0.0
      %3633 = vmatpush.msra.mxu0 0.0
      %3634 = vmatpush.msra.mxu0 %v3494
      %3635 = vmatpush.msra.mxu0 %v3486
      %3636 = vmatmul.f32.gmra.mxu0 %v3498
      %v3637 = vpop.f32.mrf.mxu0
      %v3638 = vadd.f32 0.0, %v3637
      %3639 = vdwg.mxu0
      %3640 = vmatpush.msra.mxu0 0.0
      %3641 = vmatpush.msra.mxu0 0.0
      %3642 = vmatpush.msra.mxu0 0.0
      %3643 = vmatpush.msra.mxu0 0.0
      %3644 = vmatpush.msra.mxu0 0.0
      %3645 = vmatpush.msra.mxu0 0.0
      %3646 = vmatpush.msra.mxu0 0.0
      %3647 = vmatpush.msra.mxu0 0.0
      %3648 = vmatpush.msra.mxu0 0.0
      %3649 = vmatpush.msra.mxu0 0.0
      %3650 = vmatpush.msra.mxu0 0.0
      %3651 = vmatpush.msra.mxu0 0.0
      %3652 = vmatpush.msra.mxu0 0.0
      %3653 = vmatpush.msra.mxu0 0.0
      %3654 = vmatpush.msra.mxu0 %v3495
      %3655 = vmatpush.msra.mxu0 %v3487
      %3656 = vmatmul.f32.gmra.mxu0 %v3498
      %v3657 = vpop.f32.mrf.mxu0
      %v3658 = vadd.f32 0.0, %v3657
      %3659 = vdwg.mxu0
      %v3668 = vrot.slane %v3538, 4
      %v3669 = vrot.slane %v3578, 4
      %v3670 = vrot.slane %v3618, 4
      %v3671 = vrot.slane %v3658, 4
      %vm3672 = vcmask 1043456
      %v3673 = vsel %vm3672, %v3518, %v3668
      %v3674 = vsel %vm3672, %v3558, %v3669
      %v3675 = vsel %vm3672, %v3598, %v3670
      %v3676 = vsel %vm3672, %v3638, %v3671
      %3681 = vst [vmem:[%s332] sm:$0x77] %v3673
      %3682 = vst [vmem:[%s332 + $0x8] sm:$0x77] %v3674
      %3683 = vst [vmem:[%s332 + $0x10] sm:$0x77] %v3675
      %3684 = vst [vmem:[%s332 + $0x18] sm:$0x77] %v3676
      %p3685 = scmp.lt.s32.totalorder %s20, 1
      %s3686 = scalar_select %p3685, %s20, 1
      %s3687 = smul.addr %s3686, 8
      %s3688 = smul.addr %s3687, 4
      %s3689 = scalar_lea.vmem %s9, %s3688
      // Predicated region
      $region57: #{teco_upconv_forward.1} parent=55 // pred_check
        %p3690 = pneg %p232
      $region58: #{teco_upconv_forward.1} parent=55 // pred_check_branch
        %3692 = sbr.rel (%p3690) target = $region60
      $region59: #{teco_upconv_forward.1} parent=55 // pred_region
        _
      $region60: #{teco_upconv_forward.1} parent=55 // pred_fallthru
        _
    $region56: #{teco_upconv_forward.1} parent=5 // pred_fallthru
      _
    %p3693 = scmp.le.s32.totalorder 2, %s15
    // Predicated region
    $region61: #{teco_upconv_forward.1} parent=5 // pred_check
      %p3694 = pneg %p3693
    $region62: #{teco_upconv_forward.1} parent=5 // pred_check_branch
      %3696 = sbr.rel (%p3694) target = $region64
    $region63: #{teco_upconv_forward.1} parent=5 // pred_region
      %s3697 = ssub.s32 %s15, 2
      // Predicated region
      $region65: #{teco_upconv_forward.1} parent=63 // pred_check
        %p3698 = pneg %p238
      $region66: #{teco_upconv_forward.1} parent=63 // pred_check_branch
        %3700 = sbr.rel (%p3698) target = $region68
      $region67: #{teco_upconv_forward.1} parent=63 // pred_region
        %p3701 = scmp.lt.s32.totalorder %s21, 1
        %s3702 = scalar_select %p3701, %s21, 1
        %s3703 = smul.addr %s3702, 8
        %s3704 = smul.addr %s3703, 4
        %s3705 = scalar_lea.vmem %s9, %s3704
      $region68: #{teco_upconv_forward.1} parent=63 // pred_fallthru
        _
    $region64: #{teco_upconv_forward.1} parent=5 // pred_fallthru
      _
  $region6: #{teco_upconv_forward.1} parent=0 // loop_footer
    %s19 = sadd.s32 1, %s15
  $region7: #{teco_upconv_forward.1} parent=0 // loop_footer_branch
    %14 = sbr.rel target = $region3
  $region8: #{teco_upconv_forward.1} parent=0 // loop_exit
    _

</llo_original>
